<compile_context>
chip_gen: v7x
topology: tpu7x:2x2x1
jax: 0.10.0
libtpu: 0.0.40
codegen_flags: <defaults>
</compile_context>

<pallas_src>
import jax
import jax.numpy as jnp
from jax.experimental import pallas as pl
from jax.experimental.pallas import tpu as pltpu

# ----- model dims (small, consistent with the module's __init__) -----
VOCAB = 32          # output_dim
EMB = 16            # emb_dim
ENC_HID = 16        # enc_hid_dim  -> encoder feature = 2*ENC_HID
DEC_HID = 32        # dec_hid_dim
SRC_LEN = 8
BATCH = 2

ENC2 = 2 * ENC_HID
RNN_IN = ENC2 + EMB + DEC_HID      # GRU input size  (emb + enc_hid*2 + dec_hid)
OUT_IN = ENC2 + DEC_HID + EMB      # out-Linear input size
D3 = 3 * DEC_HID


def make_decoder_kernel(T):
    """Fused T-step decoder kernel (no grid; single invocation)."""

    def kernel(hid0_ref, enc_ref, encp_ref, embf_ref, v_ref,
               w_h_ref, w_w_ref, w_ih_e_ref, b_ih_ref, b_hh_n_ref,
               w_out_e_ref, w_out_h_ref, b_out_ref,
               pred_ref, hid_ref):
        f32 = jnp.float32
        d = DEC_HID

        # ---- hoist all VMEM loads out of the (unrolled) recurrence ----
        enc = enc_ref[...]                      # [B, S, 2H]
        encp = encp_ref[...]                    # [B, S, D]   (enc @ W_att_enc + b, precomputed)
        v = v_ref[...]                          # [1, D]
        w_h = w_h_ref[...]                      # [D, D+3D] = [32, 128]   packed [wa_h | w_ih_h]
        w_w = w_w_ref[...]                      # [2H, 3D+V] = [32, 128]  packed [w_ih_w | w_out_w]
        b_hh_n = b_hh_n_ref[...]                # [1, D]
        w_out_h = w_out_h_ref[...]              # [D, V]

        # ---- step-invariant, embedding-only matmuls: out of the recurrence ----
        # TODO(synk): nn.Dropout runs as eval-mode identity (deterministic kernel);
        #             training-mode dropout would need pltpu.prng_seed + stateful_bernoulli.
        embf = embf_ref[...]                                                     # [T*B, E]
        gi_emb = jnp.dot(embf, w_ih_e_ref[...], preferred_element_type=f32) + b_ih_ref[...]
        pred_emb = jnp.dot(embf, w_out_e_ref[...], preferred_element_type=f32) + b_out_ref[...]

        hidden = hid0_ref[...]                                                   # [B, D]

        for t in range(T):
            # -- Bahdanau attention (softmax over src_len, lane-dense [B, S]) --
            hw = jnp.dot(hidden, w_h, preferred_element_type=f32)               # [B, 128]
            hid_proj = hw[:, :d]                                                 # hidden @ wa_h
            gi_h = hw[:, d:]                                                     # hidden @ w_ih_h
            energy = jnp.tanh(encp + hid_proj[:, None, :])                       # [B, S, D]
            score = jnp.sum(energy * v[None, :, :], axis=-1)                     # [B, S]
            m = jnp.max(score, axis=-1, keepdims=True)
            e = jnp.exp(score - m)
            inv = pl.reciprocal(jnp.sum(e, axis=-1, keepdims=True), approx=True)
            alpha = e * inv                                                      # [B, S]
            weighted = jnp.sum(alpha[:, :, None] * enc, axis=1)                  # [B, 2H]

            # -- GRU cell (h0 = 0: module calls self.rnn(input) w/o state) --
            ww = jnp.dot(weighted, w_w, preferred_element_type=f32)             # [B, 128]
            gi = gi_emb[t * BATCH:(t + 1) * BATCH] + gi_h + ww[:, :D3]           # [B, 3D]
            r = jax.nn.sigmoid(gi[:, :d])
            z = jax.nn.sigmoid(gi[:, d:2 * d])
            n = jnp.tanh(gi[:, 2 * d:] + r * b_hh_n)
            h_new = (1.0 - z) * n                                                # + z * h0 (== 0)

            # -- output projection --
            pred = (pred_emb[t * BATCH:(t + 1) * BATCH]
                    + ww[:, D3:]                                                 # weighted @ w_out_w
                    + jnp.dot(h_new, w_out_h, preferred_element_type=f32))       # [B, V]

            pred_ref[t, :, :] = pred          # VMEM-resident output; one HBM flush at end
            hidden = h_new

        hid_ref[...] = hidden

    return kernel


def prepare_params(p):
    """One-time wrapper-side split / fold / pack of the PyTorch-layout params."""
    d = DEC_HID
    w_ih, w_out = p['w_ih'], p['w_out']
    b_ih, b_hh = p['b_ih'], p['b_hh']
    # GRU input order: [embedded | weighted | hidden]
    w_ih_e = w_ih[:EMB]
    w_ih_w = w_ih[EMB:EMB + ENC2]
    w_ih_h = w_ih[EMB + ENC2:]
    # out-Linear input order: [embedded | hidden | weighted]
    w_out_e = w_out[:EMB]
    w_out_h = w_out[EMB:EMB + DEC_HID]
    w_out_w = w_out[EMB + DEC_HID:]
    return {
        'emb': p['emb'],
        'wa_e': p['wa_e'], 'ba': p['ba'], 'v': p['v'],
        # packed same-LHS RHS blocks (each exactly 128 lanes wide)
        'w_h_packed': jnp.concatenate([p['wa_h'], w_ih_h], axis=1),   # [D, D+3D]
        'w_w_packed': jnp.concatenate([w_ih_w, w_out_w], axis=1),     # [2H, 3D+V]
        'w_ih_e': w_ih_e,
        # h0 == 0  =>  W_hh @ h0 == 0; r/z hidden biases fold exactly into b_ih.
        'b_ih': jnp.concatenate([b_ih[:, :2 * d] + b_hh[:, :2 * d], b_ih[:, 2 * d:]], axis=-1),
        'b_hh_n': b_hh[:, 2 * d:],
        'w_out_e': w_out_e,
        'w_out_h': w_out_h,
        'b_out': p['b_out'],
    }


def decoder_decode(params, input_ids_seq, hidden, encoder_outputs):
    """Fused T-step decode (teacher-forced tokens): ONE pallas_call, no grid.

    input_ids_seq:   [T, batch] int
    hidden:          [1, batch, dec_hid]
    encoder_outputs: [src_len, batch, 2*enc_hid]
    returns (predictions [T, batch, vocab], hidden [1, batch, dec_hid])
    """
    kp = prepare_params(params)
    T = int(input_ids_seq.shape[0])
    ids = input_ids_seq.astype(jnp.int32).reshape(T, BATCH)
    hid0 = hidden[-1]                                       # [B, D]
    enc_bm = jnp.transpose(encoder_outputs, (1, 0, 2))      # [B, S, 2H] (lane-dense features)

    # one-time, step-invariant precomputes hoisted out of the kernel/recurrence
    encp = jnp.einsum('bse,ed->bsd', enc_bm, kp['wa_e']) + kp['ba'][None]   # [B, S, D]
    emb_flat = kp['emb'][ids].reshape(T * BATCH, EMB)                       # pre-gathered embeddings

    vmem = pl.BlockSpec(memory_space=pltpu.MemorySpace.VMEM)

    preds, h_fin = pl.pallas_call(
        make_decoder_kernel(T),
        out_shape=(jax.ShapeDtypeStruct((T, BATCH, VOCAB), jnp.float32),
                   jax.ShapeDtypeStruct((BATCH, DEC_HID), jnp.float32)),
        in_specs=[vmem] * 13,
        out_specs=(vmem, vmem),
    )(hid0, enc_bm, encp, emb_flat, kp['v'],
      kp['w_h_packed'], kp['w_w_packed'], kp['w_ih_e'], kp['b_ih'], kp['b_hh_n'],
      kp['w_out_e'], kp['w_out_h'], kp['b_out'])

    return preds, h_fin[None]


def decoder_forward(params, input_ids, hidden, encoder_outputs):
    """Single-step API matching the PyTorch module's forward."""
    preds, h = decoder_decode(params, input_ids.reshape(1, -1), hidden, encoder_outputs)
    return preds, h       # [1, B, vocab], [1, B, dec_hid]


# ---------------- pure-JAX reference ----------------
def decoder_ref_step(params, input_ids, hidden, encoder_outputs):
    emb = params['emb'][input_ids]
    hid = hidden[-1]
    enc = jnp.transpose(encoder_outputs, (1, 0, 2))
    hid_proj = hid @ params['wa_h']
    enc_proj = jnp.einsum('bse,ed->bsd', enc, params['wa_e'])
    energy = jnp.tanh(enc_proj + hid_proj[:, None, :] + params['ba'][None])
    score = jnp.sum(energy * params['v'][None], axis=-1, keepdims=True)
    alpha = jax.nn.softmax(score, axis=1)
    weighted = jnp.sum(alpha * enc, axis=1)
    x = jnp.concatenate([emb, weighted, hid], axis=-1)
    gi = x @ params['w_ih'] + params['b_ih']
    gh = params['b_hh']                                   # W_hh @ h0 == 0
    d = DEC_HID
    r = jax.nn.sigmoid(gi[:, :d] + gh[:, :d])
    z = jax.nn.sigmoid(gi[:, d:2 * d] + gh[:, d:2 * d])
    n = jnp.tanh(gi[:, 2 * d:] + r * gh[:, 2 * d:])
    h_new = (1.0 - z) * n
    o_in = jnp.concatenate([emb, h_new, weighted], axis=-1)
    pred = o_in @ params['w_out'] + params['b_out']
    return pred[None], h_new[None]


def decoder_ref_decode(params, ids_seq, hidden, encoder_outputs):
    preds = []
    for t in range(ids_seq.shape[0]):
        p, hidden = decoder_ref_step(params, ids_seq[t], hidden, encoder_outputs)
        preds.append(p[0])
    return jnp.stack(preds, axis=0), hidden


def init_params(key):
    ks = jax.random.split(key, 10)
    s = 0.1
    f = jnp.float32
    return {
        'emb':   s * jax.random.normal(ks[0], (VOCAB, EMB), f),
        # attention: Linear(enc_hid*2 + dec_hid -> dec_hid), split into hidden/enc parts
        'wa_h':  s * jax.random.normal(ks[1], (DEC_HID, DEC_HID), f),
        'wa_e':  s * jax.random.normal(ks[2], (ENC2, DEC_HID), f),
        'ba':    s * jax.random.normal(ks[3], (1, DEC_HID), f),
        'v':     s * jax.random.normal(ks[4], (1, DEC_HID), f),
        # GRU(emb + enc_hid*2 + dec_hid -> dec_hid): gate order [r | z | n]
        'w_ih':  s * jax.random.normal(ks[5], (RNN_IN, D3), f),
        'b_ih':  s * jax.random.normal(ks[6], (1, D3), f),
        'b_hh':  s * jax.random.normal(ks[7], (1, D3), f),
        # out: Linear(emb + dec_hid + enc_hid*2 -> output_dim)
        'w_out': s * jax.random.normal(ks[8], (OUT_IN, VOCAB), f),
        'b_out': s * jax.random.normal(ks[9], (1, VOCAB), f),
    }


if __name__ == "__main__":
    key = jax.random.PRNGKey(0)
    kparam, ki, kh, ke = jax.random.split(key, 4)
    params = init_params(kparam)

    T = 8
    ids_seq = jax.random.randint(ki, (T, BATCH), 0, VOCAB, dtype=jnp.int32)
    hidden = jax.random.normal(kh, (1, BATCH, DEC_HID), jnp.float32)
    encoder_outputs = jax.random.normal(ke, (SRC_LEN, BATCH, ENC2), jnp.float32)

    # fused T-step decode: one pallas_call, no grid, single output flush
    preds, h_fin = jax.block_until_ready(
        decoder_decode(params, ids_seq, hidden, encoder_outputs))
    preds_r, h_r = decoder_ref_decode(params, ids_seq, hidden, encoder_outputs)
    assert preds.shape == (T, BATCH, VOCAB) and h_fin.shape == (1, BATCH, DEC_HID)
    assert jnp.allclose(preds, preds_r, atol=5e-3, rtol=5e-3)
    assert jnp.allclose(h_fin, h_r, atol=5e-3, rtol=5e-3)

    # single-step API identical to the PyTorch module's forward
    p1, h1 = jax.block_until_ready(
        decoder_forward(params, ids_seq[0], hidden, encoder_outputs))
    p1_r, h1_r = decoder_ref_step(params, ids_seq[0], hidden, encoder_outputs)
    assert p1.shape == (1, BATCH, VOCAB) and h1.shape == (1, BATCH, DEC_HID)
    assert jnp.allclose(p1, p1_r, atol=5e-3, rtol=5e-3)
    assert jnp.allclose(h1, h1_r, atol=5e-3, rtol=5e-3)

    print("KERNEL_OK")
</pallas_src>

<mosaic_0001>
module attributes {stable_mosaic.version = 11 : i64} {
  func.func @kernel(%arg0: memref<2x32xf32, #tpu.memory_space<vmem>>, %arg1: memref<2x8x32xf32, #tpu.memory_space<vmem>>, %arg2: memref<2x8x32xf32, #tpu.memory_space<vmem>>, %arg3: memref<16x16xf32, #tpu.memory_space<vmem>>, %arg4: memref<1x32xf32, #tpu.memory_space<vmem>>, %arg5: memref<32x128xf32, #tpu.memory_space<vmem>>, %arg6: memref<32x128xf32, #tpu.memory_space<vmem>>, %arg7: memref<16x96xf32, #tpu.memory_space<vmem>>, %arg8: memref<1x96xf32, #tpu.memory_space<vmem>>, %arg9: memref<1x32xf32, #tpu.memory_space<vmem>>, %arg10: memref<16x32xf32, #tpu.memory_space<vmem>>, %arg11: memref<32x32xf32, #tpu.memory_space<vmem>>, %arg12: memref<1x32xf32, #tpu.memory_space<vmem>>, %arg13: memref<8x2x32xf32, #tpu.memory_space<vmem>>, %arg14: memref<2x32xf32, #tpu.memory_space<vmem>>) attributes {dimension_semantics = [], scalar_prefetch = 0 : i64, scratch_operands = 0 : i64, tpu.core_type = #tpu.core_type<tc>} {
    %c0 = arith.constant 0 : index
    %c0_0 = arith.constant 0 : index
    %c0_1 = arith.constant 0 : index
    %0 = vector.load %arg1[%c0, %c0_0, %c0_1] : memref<2x8x32xf32, #tpu.memory_space<vmem>>, vector<2x8x32xf32>
    %c0_2 = arith.constant 0 : index
    %c0_3 = arith.constant 0 : index
    %c0_4 = arith.constant 0 : index
    %1 = vector.load %arg2[%c0_2, %c0_3, %c0_4] : memref<2x8x32xf32, #tpu.memory_space<vmem>>, vector<2x8x32xf32>
    %c0_5 = arith.constant 0 : index
    %c0_6 = arith.constant 0 : index
    %2 = vector.load %arg4[%c0_5, %c0_6] : memref<1x32xf32, #tpu.memory_space<vmem>>, vector<1x32xf32>
    %c0_7 = arith.constant 0 : index
    %c0_8 = arith.constant 0 : index
    %3 = vector.load %arg5[%c0_7, %c0_8] : memref<32x128xf32, #tpu.memory_space<vmem>>, vector<32x128xf32>
    %c0_9 = arith.constant 0 : index
    %c0_10 = arith.constant 0 : index
    %4 = vector.load %arg6[%c0_9, %c0_10] : memref<32x128xf32, #tpu.memory_space<vmem>>, vector<32x128xf32>
    %c0_11 = arith.constant 0 : index
    %c0_12 = arith.constant 0 : index
    %5 = vector.load %arg9[%c0_11, %c0_12] : memref<1x32xf32, #tpu.memory_space<vmem>>, vector<1x32xf32>
    %c0_13 = arith.constant 0 : index
    %c0_14 = arith.constant 0 : index
    %6 = vector.load %arg11[%c0_13, %c0_14] : memref<32x32xf32, #tpu.memory_space<vmem>>, vector<32x32xf32>
    %c0_15 = arith.constant 0 : index
    %c0_16 = arith.constant 0 : index
    %7 = vector.load %arg3[%c0_15, %c0_16] : memref<16x16xf32, #tpu.memory_space<vmem>>, vector<16x16xf32>
    %c0_17 = arith.constant 0 : index
    %c0_18 = arith.constant 0 : index
    %8 = vector.load %arg7[%c0_17, %c0_18] : memref<16x96xf32, #tpu.memory_space<vmem>>, vector<16x96xf32>
    %cst = arith.constant dense<0.000000e+00> : vector<16x96xf32>
    %9 = tpu.matmul %7, %8, %cst {dimension_numbers = #tpu.dot_dimension_numbers<[1], [0], [0], [1], [0, 0, 1, 1], [], []>} : vector<16x16xf32>, vector<16x96xf32>, vector<16x96xf32> -> vector<16x96xf32>
    %c0_19 = arith.constant 0 : index
    %c0_20 = arith.constant 0 : index
    %10 = vector.load %arg8[%c0_19, %c0_20] : memref<1x96xf32, #tpu.memory_space<vmem>>, vector<1x96xf32>
    %11 = vector.broadcast %10 : vector<1x96xf32> to vector<16x96xf32>
    %12 = arith.addf %9, %11 : vector<16x96xf32>
    %c0_21 = arith.constant 0 : index
    %c0_22 = arith.constant 0 : index
    %13 = vector.load %arg10[%c0_21, %c0_22] : memref<16x32xf32, #tpu.memory_space<vmem>>, vector<16x32xf32>
    %cst_23 = arith.constant dense<0.000000e+00> : vector<16x32xf32>
    %14 = tpu.matmul %7, %13, %cst_23 {dimension_numbers = #tpu.dot_dimension_numbers<[1], [0], [0], [1], [0, 0, 1, 1], [], []>} : vector<16x16xf32>, vector<16x32xf32>, vector<16x32xf32> -> vector<16x32xf32>
    %c0_24 = arith.constant 0 : index
    %c0_25 = arith.constant 0 : index
    %15 = vector.load %arg12[%c0_24, %c0_25] : memref<1x32xf32, #tpu.memory_space<vmem>>, vector<1x32xf32>
    %16 = vector.broadcast %15 : vector<1x32xf32> to vector<16x32xf32>
    %17 = arith.addf %14, %16 : vector<16x32xf32>
    %c0_26 = arith.constant 0 : index
    %c0_27 = arith.constant 0 : index
    %18 = vector.load %arg0[%c0_26, %c0_27] : memref<2x32xf32, #tpu.memory_space<vmem>>, vector<2x32xf32>
    %cst_28 = arith.constant dense<0.000000e+00> : vector<2x128xf32>
    %19 = tpu.matmul %18, %3, %cst_28 {dimension_numbers = #tpu.dot_dimension_numbers<[1], [0], [0], [1], [0, 0, 1, 1], [], []>} : vector<2x32xf32>, vector<32x128xf32>, vector<2x128xf32> -> vector<2x128xf32>
    %20 = vector.extract_strided_slice %19 {offsets = [0, 0], sizes = [2, 32], strides = [1, 1]} : vector<2x128xf32> to vector<2x32xf32>
    %21 = vector.extract_strided_slice %19 {offsets = [0, 32], sizes = [2, 96], strides = [1, 1]} : vector<2x128xf32> to vector<2x96xf32>
    %22 = vector.shape_cast %20 : vector<2x32xf32> to vector<2x1x32xf32>
    %23 = vector.broadcast %22 : vector<2x1x32xf32> to vector<2x8x32xf32>
    %24 = arith.addf %1, %23 : vector<2x8x32xf32>
    %25 = math.tanh %24 : vector<2x8x32xf32>
    %26 = vector.shape_cast %2 : vector<1x32xf32> to vector<1x1x32xf32>
    %27 = vector.broadcast %26 : vector<1x1x32xf32> to vector<2x8x32xf32>
    %28 = arith.mulf %25, %27 : vector<2x8x32xf32>
    %cst_29 = arith.constant dense<0.000000e+00> : vector<2x8xf32>
    %29 = vector.multi_reduction <add>, %28, %cst_29 [2] : vector<2x8x32xf32> to vector<2x8xf32>
    %cst_30 = arith.constant dense<0xFF800000> : vector<2xf32>
    %30 = vector.multi_reduction <maximumf>, %29, %cst_30 [1] : vector<2x8xf32> to vector<2xf32>
    %31 = vector.shape_cast %30 : vector<2xf32> to vector<2x1xf32>
    %32 = vector.broadcast %31 : vector<2x1xf32> to vector<2x8xf32>
    %33 = arith.subf %29, %32 : vector<2x8xf32>
    %34 = math.exp %33 : vector<2x8xf32>
    %cst_31 = arith.constant dense<0.000000e+00> : vector<2xf32>
    %35 = vector.multi_reduction <add>, %34, %cst_31 [1] : vector<2x8xf32> to vector<2xf32>
    %36 = vector.shape_cast %35 : vector<2xf32> to vector<2x1xf32>
    %37 = tpu.reciprocal %36 {approx = true} : vector<2x1xf32> -> vector<2x1xf32>
    %38 = vector.broadcast %37 : vector<2x1xf32> to vector<2x8xf32>
    %39 = arith.mulf %34, %38 : vector<2x8xf32>
    %40 = vector.shape_cast %39 : vector<2x8xf32> to vector<2x8x1xf32>
    %41 = vector.broadcast %40 : vector<2x8x1xf32> to vector<2x8x32xf32>
    %42 = arith.mulf %41, %0 : vector<2x8x32xf32>
    %cst_32 = arith.constant dense<0.000000e+00> : vector<2x32xf32>
    %43 = vector.multi_reduction <add>, %42, %cst_32 [1] : vector<2x8x32xf32> to vector<2x32xf32>
    %cst_33 = arith.constant dense<0.000000e+00> : vector<2x128xf32>
    %44 = tpu.matmul %43, %4, %cst_33 {dimension_numbers = #tpu.dot_dimension_numbers<[1], [0], [0], [1], [0, 0, 1, 1], [], []>} : vector<2x32xf32>, vector<32x128xf32>, vector<2x128xf32> -> vector<2x128xf32>
    %45 = vector.extract_strided_slice %12 {offsets = [0, 0], sizes = [2, 96], strides = [1, 1]} : vector<16x96xf32> to vector<2x96xf32>
    %46 = arith.addf %45, %21 : vector<2x96xf32>
    %47 = vector.extract_strided_slice %44 {offsets = [0, 0], sizes = [2, 96], strides = [1, 1]} : vector<2x128xf32> to vector<2x96xf32>
    %48 = arith.addf %46, %47 : vector<2x96xf32>
    %49 = vector.extract_strided_slice %48 {offsets = [0, 0], sizes = [2, 32], strides = [1, 1]} : vector<2x96xf32> to vector<2x32xf32>
    %50 = arith.negf %49 : vector<2x32xf32>
    %51 = math.exp %50 : vector<2x32xf32>
    %cst_34 = arith.constant 1.000000e+00 : f32
    %52 = vector.broadcast %cst_34 : f32 to vector<2x32xf32>
    %53 = arith.addf %52, %51 : vector<2x32xf32>
    %54 = arith.divf %52, %53 : vector<2x32xf32>
    %55 = vector.extract_strided_slice %48 {offsets = [0, 32], sizes = [2, 32], strides = [1, 1]} : vector<2x96xf32> to vector<2x32xf32>
    %56 = arith.negf %55 : vector<2x32xf32>
    %57 = math.exp %56 : vector<2x32xf32>
    %cst_35 = arith.constant 1.000000e+00 : f32
    %58 = vector.broadcast %cst_35 : f32 to vector<2x32xf32>
    %59 = arith.addf %58, %57 : vector<2x32xf32>
    %60 = arith.divf %58, %59 : vector<2x32xf32>
    %61 = vector.extract_strided_slice %48 {offsets = [0, 64], sizes = [2, 32], strides = [1, 1]} : vector<2x96xf32> to vector<2x32xf32>
    %62 = vector.broadcast %5 : vector<1x32xf32> to vector<2x32xf32>
    %63 = arith.mulf %54, %62 : vector<2x32xf32>
    %64 = arith.addf %61, %63 : vector<2x32xf32>
    %65 = math.tanh %64 : vector<2x32xf32>
    %cst_36 = arith.constant 1.000000e+00 : f32
    %66 = vector.broadcast %cst_36 : f32 to vector<2x32xf32>
    %67 = arith.subf %66, %60 : vector<2x32xf32>
    %68 = arith.mulf %67, %65 : vector<2x32xf32>
    %69 = vector.extract_strided_slice %17 {offsets = [0, 0], sizes = [2, 32], strides = [1, 1]} : vector<16x32xf32> to vector<2x32xf32>
    %70 = vector.extract_strided_slice %44 {offsets = [0, 96], sizes = [2, 32], strides = [1, 1]} : vector<2x128xf32> to vector<2x32xf32>
    %71 = arith.addf %69, %70 : vector<2x32xf32>
    %cst_37 = arith.constant dense<0.000000e+00> : vector<2x32xf32>
    %72 = tpu.matmul %68, %6, %cst_37 {dimension_numbers = #tpu.dot_dimension_numbers<[1], [0], [0], [1], [0, 0, 1, 1], [], []>} : vector<2x32xf32>, vector<32x32xf32>, vector<2x32xf32> -> vector<2x32xf32>
    %73 = arith.addf %71, %72 : vector<2x32xf32>
    %c0_38 = arith.constant 0 : index
    %c0_39 = arith.constant 0 : index
    %c0_40 = arith.constant 0 : index
    %74 = vector.load %arg13[%c0_38, %c0_39, %c0_40] : memref<8x2x32xf32, #tpu.memory_space<vmem>>, vector<1x2x32xf32>
    %75 = vector.shape_cast %74 : vector<1x2x32xf32> to vector<2x32xf32>
    %76 = vector.shape_cast %73 : vector<2x32xf32> to vector<1x2x32xf32>
    tpu.vector_store %arg13[%c0_38, %c0_39, %c0_40], %76 {strides = array<i32>} : memref<8x2x32xf32, #tpu.memory_space<vmem>>, vector<1x2x32xf32>,
    %cst_41 = arith.constant dense<0.000000e+00> : vector<2x128xf32>
    %77 = tpu.matmul %68, %3, %cst_41 {dimension_numbers = #tpu.dot_dimension_numbers<[1], [0], [0], [1], [0, 0, 1, 1], [], []>} : vector<2x32xf32>, vector<32x128xf32>, vector<2x128xf32> -> vector<2x128xf32>
    %78 = vector.extract_strided_slice %77 {offsets = [0, 0], sizes = [2, 32], strides = [1, 1]} : vector<2x128xf32> to vector<2x32xf32>
    %79 = vector.extract_strided_slice %77 {offsets = [0, 32], sizes = [2, 96], strides = [1, 1]} : vector<2x128xf32> to vector<2x96xf32>
    %80 = vector.shape_cast %78 : vector<2x32xf32> to vector<2x1x32xf32>
    %81 = vector.broadcast %80 : vector<2x1x32xf32> to vector<2x8x32xf32>
    %82 = arith.addf %1, %81 : vector<2x8x32xf32>
    %83 = math.tanh %82 : vector<2x8x32xf32>
    %84 = vector.shape_cast %2 : vector<1x32xf32> to vector<1x1x32xf32>
    %85 = vector.broadcast %84 : vector<1x1x32xf32> to vector<2x8x32xf32>
    %86 = arith.mulf %83, %85 : vector<2x8x32xf32>
    %cst_42 = arith.constant dense<0.000000e+00> : vector<2x8xf32>
    %87 = vector.multi_reduction <add>, %86, %cst_42 [2] : vector<2x8x32xf32> to vector<2x8xf32>
    %cst_43 = arith.constant dense<0xFF800000> : vector<2xf32>
    %88 = vector.multi_reduction <maximumf>, %87, %cst_43 [1] : vector<2x8xf32> to vector<2xf32>
    %89 = vector.shape_cast %88 : vector<2xf32> to vector<2x1xf32>
    %90 = vector.broadcast %89 : vector<2x1xf32> to vector<2x8xf32>
    %91 = arith.subf %87, %90 : vector<2x8xf32>
    %92 = math.exp %91 : vector<2x8xf32>
    %cst_44 = arith.constant dense<0.000000e+00> : vector<2xf32>
    %93 = vector.multi_reduction <add>, %92, %cst_44 [1] : vector<2x8xf32> to vector<2xf32>
    %94 = vector.shape_cast %93 : vector<2xf32> to vector<2x1xf32>
    %95 = tpu.reciprocal %94 {approx = true} : vector<2x1xf32> -> vector<2x1xf32>
    %96 = vector.broadcast %95 : vector<2x1xf32> to vector<2x8xf32>
    %97 = arith.mulf %92, %96 : vector<2x8xf32>
    %98 = vector.shape_cast %97 : vector<2x8xf32> to vector<2x8x1xf32>
    %99 = vector.broadcast %98 : vector<2x8x1xf32> to vector<2x8x32xf32>
    %100 = arith.mulf %99, %0 : vector<2x8x32xf32>
    %cst_45 = arith.constant dense<0.000000e+00> : vector<2x32xf32>
    %101 = vector.multi_reduction <add>, %100, %cst_45 [1] : vector<2x8x32xf32> to vector<2x32xf32>
    %cst_46 = arith.constant dense<0.000000e+00> : vector<2x128xf32>
    %102 = tpu.matmul %101, %4, %cst_46 {dimension_numbers = #tpu.dot_dimension_numbers<[1], [0], [0], [1], [0, 0, 1, 1], [], []>} : vector<2x32xf32>, vector<32x128xf32>, vector<2x128xf32> -> vector<2x128xf32>
    %103 = vector.extract_strided_slice %12 {offsets = [2, 0], sizes = [2, 96], strides = [1, 1]} : vector<16x96xf32> to vector<2x96xf32>
    %104 = arith.addf %103, %79 : vector<2x96xf32>
    %105 = vector.extract_strided_slice %102 {offsets = [0, 0], sizes = [2, 96], strides = [1, 1]} : vector<2x128xf32> to vector<2x96xf32>
    %106 = arith.addf %104, %105 : vector<2x96xf32>
    %107 = vector.extract_strided_slice %106 {offsets = [0, 0], sizes = [2, 32], strides = [1, 1]} : vector<2x96xf32> to vector<2x32xf32>
    %108 = arith.negf %107 : vector<2x32xf32>
    %109 = math.exp %108 : vector<2x32xf32>
    %cst_47 = arith.constant 1.000000e+00 : f32
    %110 = vector.broadcast %cst_47 : f32 to vector<2x32xf32>
    %111 = arith.addf %110, %109 : vector<2x32xf32>
    %112 = arith.divf %110, %111 : vector<2x32xf32>
    %113 = vector.extract_strided_slice %106 {offsets = [0, 32], sizes = [2, 32], strides = [1, 1]} : vector<2x96xf32> to vector<2x32xf32>
    %114 = arith.negf %113 : vector<2x32xf32>
    %115 = math.exp %114 : vector<2x32xf32>
    %cst_48 = arith.constant 1.000000e+00 : f32
    %116 = vector.broadcast %cst_48 : f32 to vector<2x32xf32>
    %117 = arith.addf %116, %115 : vector<2x32xf32>
    %118 = arith.divf %116, %117 : vector<2x32xf32>
    %119 = vector.extract_strided_slice %106 {offsets = [0, 64], sizes = [2, 32], strides = [1, 1]} : vector<2x96xf32> to vector<2x32xf32>
    %120 = vector.broadcast %5 : vector<1x32xf32> to vector<2x32xf32>
    %121 = arith.mulf %112, %120 : vector<2x32xf32>
    %122 = arith.addf %119, %121 : vector<2x32xf32>
    %123 = math.tanh %122 : vector<2x32xf32>
    %cst_49 = arith.constant 1.000000e+00 : f32
    %124 = vector.broadcast %cst_49 : f32 to vector<2x32xf32>
    %125 = arith.subf %124, %118 : vector<2x32xf32>
    %126 = arith.mulf %125, %123 : vector<2x32xf32>
    %127 = vector.extract_strided_slice %17 {offsets = [2, 0], sizes = [2, 32], strides = [1, 1]} : vector<16x32xf32> to vector<2x32xf32>
    %128 = vector.extract_strided_slice %102 {offsets = [0, 96], sizes = [2, 32], strides = [1, 1]} : vector<2x128xf32> to vector<2x32xf32>
    %129 = arith.addf %127, %128 : vector<2x32xf32>
    %cst_50 = arith.constant dense<0.000000e+00> : vector<2x32xf32>
    %130 = tpu.matmul %126, %6, %cst_50 {dimension_numbers = #tpu.dot_dimension_numbers<[1], [0], [0], [1], [0, 0, 1, 1], [], []>} : vector<2x32xf32>, vector<32x32xf32>, vector<2x32xf32> -> vector<2x32xf32>
    %131 = arith.addf %129, %130 : vector<2x32xf32>
    %c1 = arith.constant 1 : index
    %c0_51 = arith.constant 0 : index
    %c0_52 = arith.constant 0 : index
    %132 = vector.load %arg13[%c1, %c0_51, %c0_52] : memref<8x2x32xf32, #tpu.memory_space<vmem>>, vector<1x2x32xf32>
    %133 = vector.shape_cast %132 : vector<1x2x32xf32> to vector<2x32xf32>
    %134 = vector.shape_cast %131 : vector<2x32xf32> to vector<1x2x32xf32>
    tpu.vector_store %arg13[%c1, %c0_51, %c0_52], %134 {strides = array<i32>} : memref<8x2x32xf32, #tpu.memory_space<vmem>>, vector<1x2x32xf32>,
    %cst_53 = arith.constant dense<0.000000e+00> : vector<2x128xf32>
    %135 = tpu.matmul %126, %3, %cst_53 {dimension_numbers = #tpu.dot_dimension_numbers<[1], [0], [0], [1], [0, 0, 1, 1], [], []>} : vector<2x32xf32>, vector<32x128xf32>, vector<2x128xf32> -> vector<2x128xf32>
    %136 = vector.extract_strided_slice %135 {offsets = [0, 0], sizes = [2, 32], strides = [1, 1]} : vector<2x128xf32> to vector<2x32xf32>
    %137 = vector.extract_strided_slice %135 {offsets = [0, 32], sizes = [2, 96], strides = [1, 1]} : vector<2x128xf32> to vector<2x96xf32>
    %138 = vector.shape_cast %136 : vector<2x32xf32> to vector<2x1x32xf32>
    %139 = vector.broadcast %138 : vector<2x1x32xf32> to vector<2x8x32xf32>
    %140 = arith.addf %1, %139 : vector<2x8x32xf32>
    %141 = math.tanh %140 : vector<2x8x32xf32>
    %142 = vector.shape_cast %2 : vector<1x32xf32> to vector<1x1x32xf32>
    %143 = vector.broadcast %142 : vector<1x1x32xf32> to vector<2x8x32xf32>
    %144 = arith.mulf %141, %143 : vector<2x8x32xf32>
    %cst_54 = arith.constant dense<0.000000e+00> : vector<2x8xf32>
    %145 = vector.multi_reduction <add>, %144, %cst_54 [2] : vector<2x8x32xf32> to vector<2x8xf32>
    %cst_55 = arith.constant dense<0xFF800000> : vector<2xf32>
    %146 = vector.multi_reduction <maximumf>, %145, %cst_55 [1] : vector<2x8xf32> to vector<2xf32>
    %147 = vector.shape_cast %146 : vector<2xf32> to vector<2x1xf32>
    %148 = vector.broadcast %147 : vector<2x1xf32> to vector<2x8xf32>
    %149 = arith.subf %145, %148 : vector<2x8xf32>
    %150 = math.exp %149 : vector<2x8xf32>
    %cst_56 = arith.constant dense<0.000000e+00> : vector<2xf32>
    %151 = vector.multi_reduction <add>, %150, %cst_56 [1] : vector<2x8xf32> to vector<2xf32>
    %152 = vector.shape_cast %151 : vector<2xf32> to vector<2x1xf32>
    %153 = tpu.reciprocal %152 {approx = true} : vector<2x1xf32> -> vector<2x1xf32>
    %154 = vector.broadcast %153 : vector<2x1xf32> to vector<2x8xf32>
    %155 = arith.mulf %150, %154 : vector<2x8xf32>
    %156 = vector.shape_cast %155 : vector<2x8xf32> to vector<2x8x1xf32>
    %157 = vector.broadcast %156 : vector<2x8x1xf32> to vector<2x8x32xf32>
    %158 = arith.mulf %157, %0 : vector<2x8x32xf32>
    %cst_57 = arith.constant dense<0.000000e+00> : vector<2x32xf32>
    %159 = vector.multi_reduction <add>, %158, %cst_57 [1] : vector<2x8x32xf32> to vector<2x32xf32>
    %cst_58 = arith.constant dense<0.000000e+00> : vector<2x128xf32>
    %160 = tpu.matmul %159, %4, %cst_58 {dimension_numbers = #tpu.dot_dimension_numbers<[1], [0], [0], [1], [0, 0, 1, 1], [], []>} : vector<2x32xf32>, vector<32x128xf32>, vector<2x128xf32> -> vector<2x128xf32>
    %161 = vector.extract_strided_slice %12 {offsets = [4, 0], sizes = [2, 96], strides = [1, 1]} : vector<16x96xf32> to vector<2x96xf32>
    %162 = arith.addf %161, %137 : vector<2x96xf32>
    %163 = vector.extract_strided_slice %160 {offsets = [0, 0], sizes = [2, 96], strides = [1, 1]} : vector<2x128xf32> to vector<2x96xf32>
    %164 = arith.addf %162, %163 : vector<2x96xf32>
    %165 = vector.extract_strided_slice %164 {offsets = [0, 0], sizes = [2, 32], strides = [1, 1]} : vector<2x96xf32> to vector<2x32xf32>
    %166 = arith.negf %165 : vector<2x32xf32>
    %167 = math.exp %166 : vector<2x32xf32>
    %cst_59 = arith.constant 1.000000e+00 : f32
    %168 = vector.broadcast %cst_59 : f32 to vector<2x32xf32>
    %169 = arith.addf %168, %167 : vector<2x32xf32>
    %170 = arith.divf %168, %169 : vector<2x32xf32>
    %171 = vector.extract_strided_slice %164 {offsets = [0, 32], sizes = [2, 32], strides = [1, 1]} : vector<2x96xf32> to vector<2x32xf32>
    %172 = arith.negf %171 : vector<2x32xf32>
    %173 = math.exp %172 : vector<2x32xf32>
    %cst_60 = arith.constant 1.000000e+00 : f32
    %174 = vector.broadcast %cst_60 : f32 to vector<2x32xf32>
    %175 = arith.addf %174, %173 : vector<2x32xf32>
    %176 = arith.divf %174, %175 : vector<2x32xf32>
    %177 = vector.extract_strided_slice %164 {offsets = [0, 64], sizes = [2, 32], strides = [1, 1]} : vector<2x96xf32> to vector<2x32xf32>
    %178 = vector.broadcast %5 : vector<1x32xf32> to vector<2x32xf32>
    %179 = arith.mulf %170, %178 : vector<2x32xf32>
    %180 = arith.addf %177, %179 : vector<2x32xf32>
    %181 = math.tanh %180 : vector<2x32xf32>
    %cst_61 = arith.constant 1.000000e+00 : f32
    %182 = vector.broadcast %cst_61 : f32 to vector<2x32xf32>
    %183 = arith.subf %182, %176 : vector<2x32xf32>
    %184 = arith.mulf %183, %181 : vector<2x32xf32>
    %185 = vector.extract_strided_slice %17 {offsets = [4, 0], sizes = [2, 32], strides = [1, 1]} : vector<16x32xf32> to vector<2x32xf32>
    %186 = vector.extract_strided_slice %160 {offsets = [0, 96], sizes = [2, 32], strides = [1, 1]} : vector<2x128xf32> to vector<2x32xf32>
    %187 = arith.addf %185, %186 : vector<2x32xf32>
    %cst_62 = arith.constant dense<0.000000e+00> : vector<2x32xf32>
    %188 = tpu.matmul %184, %6, %cst_62 {dimension_numbers = #tpu.dot_dimension_numbers<[1], [0], [0], [1], [0, 0, 1, 1], [], []>} : vector<2x32xf32>, vector<32x32xf32>, vector<2x32xf32> -> vector<2x32xf32>
    %189 = arith.addf %187, %188 : vector<2x32xf32>
    %c2 = arith.constant 2 : index
    %c0_63 = arith.constant 0 : index
    %c0_64 = arith.constant 0 : index
    %190 = vector.load %arg13[%c2, %c0_63, %c0_64] : memref<8x2x32xf32, #tpu.memory_space<vmem>>, vector<1x2x32xf32>
    %191 = vector.shape_cast %190 : vector<1x2x32xf32> to vector<2x32xf32>
    %192 = vector.shape_cast %189 : vector<2x32xf32> to vector<1x2x32xf32>
    tpu.vector_store %arg13[%c2, %c0_63, %c0_64], %192 {strides = array<i32>} : memref<8x2x32xf32, #tpu.memory_space<vmem>>, vector<1x2x32xf32>,
    %cst_65 = arith.constant dense<0.000000e+00> : vector<2x128xf32>
    %193 = tpu.matmul %184, %3, %cst_65 {dimension_numbers = #tpu.dot_dimension_numbers<[1], [0], [0], [1], [0, 0, 1, 1], [], []>} : vector<2x32xf32>, vector<32x128xf32>, vector<2x128xf32> -> vector<2x128xf32>
    %194 = vector.extract_strided_slice %193 {offsets = [0, 0], sizes = [2, 32], strides = [1, 1]} : vector<2x128xf32> to vector<2x32xf32>
    %195 = vector.extract_strided_slice %193 {offsets = [0, 32], sizes = [2, 96], strides = [1, 1]} : vector<2x128xf32> to vector<2x96xf32>
    %196 = vector.shape_cast %194 : vector<2x32xf32> to vector<2x1x32xf32>
    %197 = vector.broadcast %196 : vector<2x1x32xf32> to vector<2x8x32xf32>
    %198 = arith.addf %1, %197 : vector<2x8x32xf32>
    %199 = math.tanh %198 : vector<2x8x32xf32>
    %200 = vector.shape_cast %2 : vector<1x32xf32> to vector<1x1x32xf32>
    %201 = vector.broadcast %200 : vector<1x1x32xf32> to vector<2x8x32xf32>
    %202 = arith.mulf %199, %201 : vector<2x8x32xf32>
    %cst_66 = arith.constant dense<0.000000e+00> : vector<2x8xf32>
    %203 = vector.multi_reduction <add>, %202, %cst_66 [2] : vector<2x8x32xf32> to vector<2x8xf32>
    %cst_67 = arith.constant dense<0xFF800000> : vector<2xf32>
    %204 = vector.multi_reduction <maximumf>, %203, %cst_67 [1] : vector<2x8xf32> to vector<2xf32>
    %205 = vector.shape_cast %204 : vector<2xf32> to vector<2x1xf32>
    %206 = vector.broadcast %205 : vector<2x1xf32> to vector<2x8xf32>
    %207 = arith.subf %203, %206 : vector<2x8xf32>
    %208 = math.exp %207 : vector<2x8xf32>
    %cst_68 = arith.constant dense<0.000000e+00> : vector<2xf32>
    %209 = vector.multi_reduction <add>, %208, %cst_68 [1] : vector<2x8xf32> to vector<2xf32>
    %210 = vector.shape_cast %209 : vector<2xf32> to vector<2x1xf32>
    %211 = tpu.reciprocal %210 {approx = true} : vector<2x1xf32> -> vector<2x1xf32>
    %212 = vector.broadcast %211 : vector<2x1xf32> to vector<2x8xf32>
    %213 = arith.mulf %208, %212 : vector<2x8xf32>
    %214 = vector.shape_cast %213 : vector<2x8xf32> to vector<2x8x1xf32>
    %215 = vector.broadcast %214 : vector<2x8x1xf32> to vector<2x8x32xf32>
    %216 = arith.mulf %215, %0 : vector<2x8x32xf32>
    %cst_69 = arith.constant dense<0.000000e+00> : vector<2x32xf32>
    %217 = vector.multi_reduction <add>, %216, %cst_69 [1] : vector<2x8x32xf32> to vector<2x32xf32>
    %cst_70 = arith.constant dense<0.000000e+00> : vector<2x128xf32>
    %218 = tpu.matmul %217, %4, %cst_70 {dimension_numbers = #tpu.dot_dimension_numbers<[1], [0], [0], [1], [0, 0, 1, 1], [], []>} : vector<2x32xf32>, vector<32x128xf32>, vector<2x128xf32> -> vector<2x128xf32>
    %219 = vector.extract_strided_slice %12 {offsets = [6, 0], sizes = [2, 96], strides = [1, 1]} : vector<16x96xf32> to vector<2x96xf32>
    %220 = arith.addf %219, %195 : vector<2x96xf32>
    %221 = vector.extract_strided_slice %218 {offsets = [0, 0], sizes = [2, 96], strides = [1, 1]} : vector<2x128xf32> to vector<2x96xf32>
    %222 = arith.addf %220, %221 : vector<2x96xf32>
    %223 = vector.extract_strided_slice %222 {offsets = [0, 0], sizes = [2, 32], strides = [1, 1]} : vector<2x96xf32> to vector<2x32xf32>
    %224 = arith.negf %223 : vector<2x32xf32>
    %225 = math.exp %224 : vector<2x32xf32>
    %cst_71 = arith.constant 1.000000e+00 : f32
    %226 = vector.broadcast %cst_71 : f32 to vector<2x32xf32>
    %227 = arith.addf %226, %225 : vector<2x32xf32>
    %228 = arith.divf %226, %227 : vector<2x32xf32>
    %229 = vector.extract_strided_slice %222 {offsets = [0, 32], sizes = [2, 32], strides = [1, 1]} : vector<2x96xf32> to vector<2x32xf32>
    %230 = arith.negf %229 : vector<2x32xf32>
    %231 = math.exp %230 : vector<2x32xf32>
    %cst_72 = arith.constant 1.000000e+00 : f32
    %232 = vector.broadcast %cst_72 : f32 to vector<2x32xf32>
    %233 = arith.addf %232, %231 : vector<2x32xf32>
    %234 = arith.divf %232, %233 : vector<2x32xf32>
    %235 = vector.extract_strided_slice %222 {offsets = [0, 64], sizes = [2, 32], strides = [1, 1]} : vector<2x96xf32> to vector<2x32xf32>
    %236 = vector.broadcast %5 : vector<1x32xf32> to vector<2x32xf32>
    %237 = arith.mulf %228, %236 : vector<2x32xf32>
    %238 = arith.addf %235, %237 : vector<2x32xf32>
    %239 = math.tanh %238 : vector<2x32xf32>
    %cst_73 = arith.constant 1.000000e+00 : f32
    %240 = vector.broadcast %cst_73 : f32 to vector<2x32xf32>
    %241 = arith.subf %240, %234 : vector<2x32xf32>
    %242 = arith.mulf %241, %239 : vector<2x32xf32>
    %243 = vector.extract_strided_slice %17 {offsets = [6, 0], sizes = [2, 32], strides = [1, 1]} : vector<16x32xf32> to vector<2x32xf32>
    %244 = vector.extract_strided_slice %218 {offsets = [0, 96], sizes = [2, 32], strides = [1, 1]} : vector<2x128xf32> to vector<2x32xf32>
    %245 = arith.addf %243, %244 : vector<2x32xf32>
    %cst_74 = arith.constant dense<0.000000e+00> : vector<2x32xf32>
    %246 = tpu.matmul %242, %6, %cst_74 {dimension_numbers = #tpu.dot_dimension_numbers<[1], [0], [0], [1], [0, 0, 1, 1], [], []>} : vector<2x32xf32>, vector<32x32xf32>, vector<2x32xf32> -> vector<2x32xf32>
    %247 = arith.addf %245, %246 : vector<2x32xf32>
    %c3 = arith.constant 3 : index
    %c0_75 = arith.constant 0 : index
    %c0_76 = arith.constant 0 : index
    %248 = vector.load %arg13[%c3, %c0_75, %c0_76] : memref<8x2x32xf32, #tpu.memory_space<vmem>>, vector<1x2x32xf32>
    %249 = vector.shape_cast %248 : vector<1x2x32xf32> to vector<2x32xf32>
    %250 = vector.shape_cast %247 : vector<2x32xf32> to vector<1x2x32xf32>
    tpu.vector_store %arg13[%c3, %c0_75, %c0_76], %250 {strides = array<i32>} : memref<8x2x32xf32, #tpu.memory_space<vmem>>, vector<1x2x32xf32>,
    %cst_77 = arith.constant dense<0.000000e+00> : vector<2x128xf32>
    %251 = tpu.matmul %242, %3, %cst_77 {dimension_numbers = #tpu.dot_dimension_numbers<[1], [0], [0], [1], [0, 0, 1, 1], [], []>} : vector<2x32xf32>, vector<32x128xf32>, vector<2x128xf32> -> vector<2x128xf32>
    %252 = vector.extract_strided_slice %251 {offsets = [0, 0], sizes = [2, 32], strides = [1, 1]} : vector<2x128xf32> to vector<2x32xf32>
    %253 = vector.extract_strided_slice %251 {offsets = [0, 32], sizes = [2, 96], strides = [1, 1]} : vector<2x128xf32> to vector<2x96xf32>
    %254 = vector.shape_cast %252 : vector<2x32xf32> to vector<2x1x32xf32>
    %255 = vector.broadcast %254 : vector<2x1x32xf32> to vector<2x8x32xf32>
    %256 = arith.addf %1, %255 : vector<2x8x32xf32>
    %257 = math.tanh %256 : vector<2x8x32xf32>
    %258 = vector.shape_cast %2 : vector<1x32xf32> to vector<1x1x32xf32>
    %259 = vector.broadcast %258 : vector<1x1x32xf32> to vector<2x8x32xf32>
    %260 = arith.mulf %257, %259 : vector<2x8x32xf32>
    %cst_78 = arith.constant dense<0.000000e+00> : vector<2x8xf32>
    %261 = vector.multi_reduction <add>, %260, %cst_78 [2] : vector<2x8x32xf32> to vector<2x8xf32>
    %cst_79 = arith.constant dense<0xFF800000> : vector<2xf32>
    %262 = vector.multi_reduction <maximumf>, %261, %cst_79 [1] : vector<2x8xf32> to vector<2xf32>
    %263 = vector.shape_cast %262 : vector<2xf32> to vector<2x1xf32>
    %264 = vector.broadcast %263 : vector<2x1xf32> to vector<2x8xf32>
    %265 = arith.subf %261, %264 : vector<2x8xf32>
    %266 = math.exp %265 : vector<2x8xf32>
    %cst_80 = arith.constant dense<0.000000e+00> : vector<2xf32>
    %267 = vector.multi_reduction <add>, %266, %cst_80 [1] : vector<2x8xf32> to vector<2xf32>
    %268 = vector.shape_cast %267 : vector<2xf32> to vector<2x1xf32>
    %269 = tpu.reciprocal %268 {approx = true} : vector<2x1xf32> -> vector<2x1xf32>
    %270 = vector.broadcast %269 : vector<2x1xf32> to vector<2x8xf32>
    %271 = arith.mulf %266, %270 : vector<2x8xf32>
    %272 = vector.shape_cast %271 : vector<2x8xf32> to vector<2x8x1xf32>
    %273 = vector.broadcast %272 : vector<2x8x1xf32> to vector<2x8x32xf32>
    %274 = arith.mulf %273, %0 : vector<2x8x32xf32>
    %cst_81 = arith.constant dense<0.000000e+00> : vector<2x32xf32>
    %275 = vector.multi_reduction <add>, %274, %cst_81 [1] : vector<2x8x32xf32> to vector<2x32xf32>
    %cst_82 = arith.constant dense<0.000000e+00> : vector<2x128xf32>
    %276 = tpu.matmul %275, %4, %cst_82 {dimension_numbers = #tpu.dot_dimension_numbers<[1], [0], [0], [1], [0, 0, 1, 1], [], []>} : vector<2x32xf32>, vector<32x128xf32>, vector<2x128xf32> -> vector<2x128xf32>
    %277 = vector.extract_strided_slice %12 {offsets = [8, 0], sizes = [2, 96], strides = [1, 1]} : vector<16x96xf32> to vector<2x96xf32>
    %278 = arith.addf %277, %253 : vector<2x96xf32>
    %279 = vector.extract_strided_slice %276 {offsets = [0, 0], sizes = [2, 96], strides = [1, 1]} : vector<2x128xf32> to vector<2x96xf32>
    %280 = arith.addf %278, %279 : vector<2x96xf32>
    %281 = vector.extract_strided_slice %280 {offsets = [0, 0], sizes = [2, 32], strides = [1, 1]} : vector<2x96xf32> to vector<2x32xf32>
    %282 = arith.negf %281 : vector<2x32xf32>
    %283 = math.exp %282 : vector<2x32xf32>
    %cst_83 = arith.constant 1.000000e+00 : f32
    %284 = vector.broadcast %cst_83 : f32 to vector<2x32xf32>
    %285 = arith.addf %284, %283 : vector<2x32xf32>
    %286 = arith.divf %284, %285 : vector<2x32xf32>
    %287 = vector.extract_strided_slice %280 {offsets = [0, 32], sizes = [2, 32], strides = [1, 1]} : vector<2x96xf32> to vector<2x32xf32>
    %288 = arith.negf %287 : vector<2x32xf32>
    %289 = math.exp %288 : vector<2x32xf32>
    %cst_84 = arith.constant 1.000000e+00 : f32
    %290 = vector.broadcast %cst_84 : f32 to vector<2x32xf32>
    %291 = arith.addf %290, %289 : vector<2x32xf32>
    %292 = arith.divf %290, %291 : vector<2x32xf32>
    %293 = vector.extract_strided_slice %280 {offsets = [0, 64], sizes = [2, 32], strides = [1, 1]} : vector<2x96xf32> to vector<2x32xf32>
    %294 = vector.broadcast %5 : vector<1x32xf32> to vector<2x32xf32>
    %295 = arith.mulf %286, %294 : vector<2x32xf32>
    %296 = arith.addf %293, %295 : vector<2x32xf32>
    %297 = math.tanh %296 : vector<2x32xf32>
    %cst_85 = arith.constant 1.000000e+00 : f32
    %298 = vector.broadcast %cst_85 : f32 to vector<2x32xf32>
    %299 = arith.subf %298, %292 : vector<2x32xf32>
    %300 = arith.mulf %299, %297 : vector<2x32xf32>
    %301 = vector.extract_strided_slice %17 {offsets = [8, 0], sizes = [2, 32], strides = [1, 1]} : vector<16x32xf32> to vector<2x32xf32>
    %302 = vector.extract_strided_slice %276 {offsets = [0, 96], sizes = [2, 32], strides = [1, 1]} : vector<2x128xf32> to vector<2x32xf32>
    %303 = arith.addf %301, %302 : vector<2x32xf32>
    %cst_86 = arith.constant dense<0.000000e+00> : vector<2x32xf32>
    %304 = tpu.matmul %300, %6, %cst_86 {dimension_numbers = #tpu.dot_dimension_numbers<[1], [0], [0], [1], [0, 0, 1, 1], [], []>} : vector<2x32xf32>, vector<32x32xf32>, vector<2x32xf32> -> vector<2x32xf32>
    %305 = arith.addf %303, %304 : vector<2x32xf32>
    %c4 = arith.constant 4 : index
    %c0_87 = arith.constant 0 : index
    %c0_88 = arith.constant 0 : index
    %306 = vector.load %arg13[%c4, %c0_87, %c0_88] : memref<8x2x32xf32, #tpu.memory_space<vmem>>, vector<1x2x32xf32>
    %307 = vector.shape_cast %306 : vector<1x2x32xf32> to vector<2x32xf32>
    %308 = vector.shape_cast %305 : vector<2x32xf32> to vector<1x2x32xf32>
    tpu.vector_store %arg13[%c4, %c0_87, %c0_88], %308 {strides = array<i32>} : memref<8x2x32xf32, #tpu.memory_space<vmem>>, vector<1x2x32xf32>,
    %cst_89 = arith.constant dense<0.000000e+00> : vector<2x128xf32>
    %309 = tpu.matmul %300, %3, %cst_89 {dimension_numbers = #tpu.dot_dimension_numbers<[1], [0], [0], [1], [0, 0, 1, 1], [], []>} : vector<2x32xf32>, vector<32x128xf32>, vector<2x128xf32> -> vector<2x128xf32>
    %310 = vector.extract_strided_slice %309 {offsets = [0, 0], sizes = [2, 32], strides = [1, 1]} : vector<2x128xf32> to vector<2x32xf32>
    %311 = vector.extract_strided_slice %309 {offsets = [0, 32], sizes = [2, 96], strides = [1, 1]} : vector<2x128xf32> to vector<2x96xf32>
    %312 = vector.shape_cast %310 : vector<2x32xf32> to vector<2x1x32xf32>
    %313 = vector.broadcast %312 : vector<2x1x32xf32> to vector<2x8x32xf32>
    %314 = arith.addf %1, %313 : vector<2x8x32xf32>
    %315 = math.tanh %314 : vector<2x8x32xf32>
    %316 = vector.shape_cast %2 : vector<1x32xf32> to vector<1x1x32xf32>
    %317 = vector.broadcast %316 : vector<1x1x32xf32> to vector<2x8x32xf32>
    %318 = arith.mulf %315, %317 : vector<2x8x32xf32>
    %cst_90 = arith.constant dense<0.000000e+00> : vector<2x8xf32>
    %319 = vector.multi_reduction <add>, %318, %cst_90 [2] : vector<2x8x32xf32> to vector<2x8xf32>
    %cst_91 = arith.constant dense<0xFF800000> : vector<2xf32>
    %320 = vector.multi_reduction <maximumf>, %319, %cst_91 [1] : vector<2x8xf32> to vector<2xf32>
    %321 = vector.shape_cast %320 : vector<2xf32> to vector<2x1xf32>
    %322 = vector.broadcast %321 : vector<2x1xf32> to vector<2x8xf32>
    %323 = arith.subf %319, %322 : vector<2x8xf32>
    %324 = math.exp %323 : vector<2x8xf32>
    %cst_92 = arith.constant dense<0.000000e+00> : vector<2xf32>
    %325 = vector.multi_reduction <add>, %324, %cst_92 [1] : vector<2x8xf32> to vector<2xf32>
    %326 = vector.shape_cast %325 : vector<2xf32> to vector<2x1xf32>
    %327 = tpu.reciprocal %326 {approx = true} : vector<2x1xf32> -> vector<2x1xf32>
    %328 = vector.broadcast %327 : vector<2x1xf32> to vector<2x8xf32>
    %329 = arith.mulf %324, %328 : vector<2x8xf32>
    %330 = vector.shape_cast %329 : vector<2x8xf32> to vector<2x8x1xf32>
    %331 = vector.broadcast %330 : vector<2x8x1xf32> to vector<2x8x32xf32>
    %332 = arith.mulf %331, %0 : vector<2x8x32xf32>
    %cst_93 = arith.constant dense<0.000000e+00> : vector<2x32xf32>
    %333 = vector.multi_reduction <add>, %332, %cst_93 [1] : vector<2x8x32xf32> to vector<2x32xf32>
    %cst_94 = arith.constant dense<0.000000e+00> : vector<2x128xf32>
    %334 = tpu.matmul %333, %4, %cst_94 {dimension_numbers = #tpu.dot_dimension_numbers<[1], [0], [0], [1], [0, 0, 1, 1], [], []>} : vector<2x32xf32>, vector<32x128xf32>, vector<2x128xf32> -> vector<2x128xf32>
    %335 = vector.extract_strided_slice %12 {offsets = [10, 0], sizes = [2, 96], strides = [1, 1]} : vector<16x96xf32> to vector<2x96xf32>
    %336 = arith.addf %335, %311 : vector<2x96xf32>
    %337 = vector.extract_strided_slice %334 {offsets = [0, 0], sizes = [2, 96], strides = [1, 1]} : vector<2x128xf32> to vector<2x96xf32>
    %338 = arith.addf %336, %337 : vector<2x96xf32>
    %339 = vector.extract_strided_slice %338 {offsets = [0, 0], sizes = [2, 32], strides = [1, 1]} : vector<2x96xf32> to vector<2x32xf32>
    %340 = arith.negf %339 : vector<2x32xf32>
    %341 = math.exp %340 : vector<2x32xf32>
    %cst_95 = arith.constant 1.000000e+00 : f32
    %342 = vector.broadcast %cst_95 : f32 to vector<2x32xf32>
    %343 = arith.addf %342, %341 : vector<2x32xf32>
    %344 = arith.divf %342, %343 : vector<2x32xf32>
    %345 = vector.extract_strided_slice %338 {offsets = [0, 32], sizes = [2, 32], strides = [1, 1]} : vector<2x96xf32> to vector<2x32xf32>
    %346 = arith.negf %345 : vector<2x32xf32>
    %347 = math.exp %346 : vector<2x32xf32>
    %cst_96 = arith.constant 1.000000e+00 : f32
    %348 = vector.broadcast %cst_96 : f32 to vector<2x32xf32>
    %349 = arith.addf %348, %347 : vector<2x32xf32>
    %350 = arith.divf %348, %349 : vector<2x32xf32>
    %351 = vector.extract_strided_slice %338 {offsets = [0, 64], sizes = [2, 32], strides = [1, 1]} : vector<2x96xf32> to vector<2x32xf32>
    %352 = vector.broadcast %5 : vector<1x32xf32> to vector<2x32xf32>
    %353 = arith.mulf %344, %352 : vector<2x32xf32>
    %354 = arith.addf %351, %353 : vector<2x32xf32>
    %355 = math.tanh %354 : vector<2x32xf32>
    %cst_97 = arith.constant 1.000000e+00 : f32
    %356 = vector.broadcast %cst_97 : f32 to vector<2x32xf32>
    %357 = arith.subf %356, %350 : vector<2x32xf32>
    %358 = arith.mulf %357, %355 : vector<2x32xf32>
    %359 = vector.extract_strided_slice %17 {offsets = [10, 0], sizes = [2, 32], strides = [1, 1]} : vector<16x32xf32> to vector<2x32xf32>
    %360 = vector.extract_strided_slice %334 {offsets = [0, 96], sizes = [2, 32], strides = [1, 1]} : vector<2x128xf32> to vector<2x32xf32>
    %361 = arith.addf %359, %360 : vector<2x32xf32>
    %cst_98 = arith.constant dense<0.000000e+00> : vector<2x32xf32>
    %362 = tpu.matmul %358, %6, %cst_98 {dimension_numbers = #tpu.dot_dimension_numbers<[1], [0], [0], [1], [0, 0, 1, 1], [], []>} : vector<2x32xf32>, vector<32x32xf32>, vector<2x32xf32> -> vector<2x32xf32>
    %363 = arith.addf %361, %362 : vector<2x32xf32>
    %c5 = arith.constant 5 : index
    %c0_99 = arith.constant 0 : index
    %c0_100 = arith.constant 0 : index
    %364 = vector.load %arg13[%c5, %c0_99, %c0_100] : memref<8x2x32xf32, #tpu.memory_space<vmem>>, vector<1x2x32xf32>
    %365 = vector.shape_cast %364 : vector<1x2x32xf32> to vector<2x32xf32>
    %366 = vector.shape_cast %363 : vector<2x32xf32> to vector<1x2x32xf32>
    tpu.vector_store %arg13[%c5, %c0_99, %c0_100], %366 {strides = array<i32>} : memref<8x2x32xf32, #tpu.memory_space<vmem>>, vector<1x2x32xf32>,
    %cst_101 = arith.constant dense<0.000000e+00> : vector<2x128xf32>
    %367 = tpu.matmul %358, %3, %cst_101 {dimension_numbers = #tpu.dot_dimension_numbers<[1], [0], [0], [1], [0, 0, 1, 1], [], []>} : vector<2x32xf32>, vector<32x128xf32>, vector<2x128xf32> -> vector<2x128xf32>
    %368 = vector.extract_strided_slice %367 {offsets = [0, 0], sizes = [2, 32], strides = [1, 1]} : vector<2x128xf32> to vector<2x32xf32>
    %369 = vector.extract_strided_slice %367 {offsets = [0, 32], sizes = [2, 96], strides = [1, 1]} : vector<2x128xf32> to vector<2x96xf32>
    %370 = vector.shape_cast %368 : vector<2x32xf32> to vector<2x1x32xf32>
    %371 = vector.broadcast %370 : vector<2x1x32xf32> to vector<2x8x32xf32>
    %372 = arith.addf %1, %371 : vector<2x8x32xf32>
    %373 = math.tanh %372 : vector<2x8x32xf32>
    %374 = vector.shape_cast %2 : vector<1x32xf32> to vector<1x1x32xf32>
    %375 = vector.broadcast %374 : vector<1x1x32xf32> to vector<2x8x32xf32>
    %376 = arith.mulf %373, %375 : vector<2x8x32xf32>
    %cst_102 = arith.constant dense<0.000000e+00> : vector<2x8xf32>
    %377 = vector.multi_reduction <add>, %376, %cst_102 [2] : vector<2x8x32xf32> to vector<2x8xf32>
    %cst_103 = arith.constant dense<0xFF800000> : vector<2xf32>
    %378 = vector.multi_reduction <maximumf>, %377, %cst_103 [1] : vector<2x8xf32> to vector<2xf32>
    %379 = vector.shape_cast %378 : vector<2xf32> to vector<2x1xf32>
    %380 = vector.broadcast %379 : vector<2x1xf32> to vector<2x8xf32>
    %381 = arith.subf %377, %380 : vector<2x8xf32>
    %382 = math.exp %381 : vector<2x8xf32>
    %cst_104 = arith.constant dense<0.000000e+00> : vector<2xf32>
    %383 = vector.multi_reduction <add>, %382, %cst_104 [1] : vector<2x8xf32> to vector<2xf32>
    %384 = vector.shape_cast %383 : vector<2xf32> to vector<2x1xf32>
    %385 = tpu.reciprocal %384 {approx = true} : vector<2x1xf32> -> vector<2x1xf32>
    %386 = vector.broadcast %385 : vector<2x1xf32> to vector<2x8xf32>
    %387 = arith.mulf %382, %386 : vector<2x8xf32>
    %388 = vector.shape_cast %387 : vector<2x8xf32> to vector<2x8x1xf32>
    %389 = vector.broadcast %388 : vector<2x8x1xf32> to vector<2x8x32xf32>
    %390 = arith.mulf %389, %0 : vector<2x8x32xf32>
    %cst_105 = arith.constant dense<0.000000e+00> : vector<2x32xf32>
    %391 = vector.multi_reduction <add>, %390, %cst_105 [1] : vector<2x8x32xf32> to vector<2x32xf32>
    %cst_106 = arith.constant dense<0.000000e+00> : vector<2x128xf32>
    %392 = tpu.matmul %391, %4, %cst_106 {dimension_numbers = #tpu.dot_dimension_numbers<[1], [0], [0], [1], [0, 0, 1, 1], [], []>} : vector<2x32xf32>, vector<32x128xf32>, vector<2x128xf32> -> vector<2x128xf32>
    %393 = vector.extract_strided_slice %12 {offsets = [12, 0], sizes = [2, 96], strides = [1, 1]} : vector<16x96xf32> to vector<2x96xf32>
    %394 = arith.addf %393, %369 : vector<2x96xf32>
    %395 = vector.extract_strided_slice %392 {offsets = [0, 0], sizes = [2, 96], strides = [1, 1]} : vector<2x128xf32> to vector<2x96xf32>
    %396 = arith.addf %394, %395 : vector<2x96xf32>
    %397 = vector.extract_strided_slice %396 {offsets = [0, 0], sizes = [2, 32], strides = [1, 1]} : vector<2x96xf32> to vector<2x32xf32>
    %398 = arith.negf %397 : vector<2x32xf32>
    %399 = math.exp %398 : vector<2x32xf32>
    %cst_107 = arith.constant 1.000000e+00 : f32
    %400 = vector.broadcast %cst_107 : f32 to vector<2x32xf32>
    %401 = arith.addf %400, %399 : vector<2x32xf32>
    %402 = arith.divf %400, %401 : vector<2x32xf32>
    %403 = vector.extract_strided_slice %396 {offsets = [0, 32], sizes = [2, 32], strides = [1, 1]} : vector<2x96xf32> to vector<2x32xf32>
    %404 = arith.negf %403 : vector<2x32xf32>
    %405 = math.exp %404 : vector<2x32xf32>
    %cst_108 = arith.constant 1.000000e+00 : f32
    %406 = vector.broadcast %cst_108 : f32 to vector<2x32xf32>
    %407 = arith.addf %406, %405 : vector<2x32xf32>
    %408 = arith.divf %406, %407 : vector<2x32xf32>
    %409 = vector.extract_strided_slice %396 {offsets = [0, 64], sizes = [2, 32], strides = [1, 1]} : vector<2x96xf32> to vector<2x32xf32>
    %410 = vector.broadcast %5 : vector<1x32xf32> to vector<2x32xf32>
    %411 = arith.mulf %402, %410 : vector<2x32xf32>
    %412 = arith.addf %409, %411 : vector<2x32xf32>
    %413 = math.tanh %412 : vector<2x32xf32>
    %cst_109 = arith.constant 1.000000e+00 : f32
    %414 = vector.broadcast %cst_109 : f32 to vector<2x32xf32>
    %415 = arith.subf %414, %408 : vector<2x32xf32>
    %416 = arith.mulf %415, %413 : vector<2x32xf32>
    %417 = vector.extract_strided_slice %17 {offsets = [12, 0], sizes = [2, 32], strides = [1, 1]} : vector<16x32xf32> to vector<2x32xf32>
    %418 = vector.extract_strided_slice %392 {offsets = [0, 96], sizes = [2, 32], strides = [1, 1]} : vector<2x128xf32> to vector<2x32xf32>
    %419 = arith.addf %417, %418 : vector<2x32xf32>
    %cst_110 = arith.constant dense<0.000000e+00> : vector<2x32xf32>
    %420 = tpu.matmul %416, %6, %cst_110 {dimension_numbers = #tpu.dot_dimension_numbers<[1], [0], [0], [1], [0, 0, 1, 1], [], []>} : vector<2x32xf32>, vector<32x32xf32>, vector<2x32xf32> -> vector<2x32xf32>
    %421 = arith.addf %419, %420 : vector<2x32xf32>
    %c6 = arith.constant 6 : index
    %c0_111 = arith.constant 0 : index
    %c0_112 = arith.constant 0 : index
    %422 = vector.load %arg13[%c6, %c0_111, %c0_112] : memref<8x2x32xf32, #tpu.memory_space<vmem>>, vector<1x2x32xf32>
    %423 = vector.shape_cast %422 : vector<1x2x32xf32> to vector<2x32xf32>
    %424 = vector.shape_cast %421 : vector<2x32xf32> to vector<1x2x32xf32>
    tpu.vector_store %arg13[%c6, %c0_111, %c0_112], %424 {strides = array<i32>} : memref<8x2x32xf32, #tpu.memory_space<vmem>>, vector<1x2x32xf32>,
    %cst_113 = arith.constant dense<0.000000e+00> : vector<2x128xf32>
    %425 = tpu.matmul %416, %3, %cst_113 {dimension_numbers = #tpu.dot_dimension_numbers<[1], [0], [0], [1], [0, 0, 1, 1], [], []>} : vector<2x32xf32>, vector<32x128xf32>, vector<2x128xf32> -> vector<2x128xf32>
    %426 = vector.extract_strided_slice %425 {offsets = [0, 0], sizes = [2, 32], strides = [1, 1]} : vector<2x128xf32> to vector<2x32xf32>
    %427 = vector.extract_strided_slice %425 {offsets = [0, 32], sizes = [2, 96], strides = [1, 1]} : vector<2x128xf32> to vector<2x96xf32>
    %428 = vector.shape_cast %426 : vector<2x32xf32> to vector<2x1x32xf32>
    %429 = vector.broadcast %428 : vector<2x1x32xf32> to vector<2x8x32xf32>
    %430 = arith.addf %1, %429 : vector<2x8x32xf32>
    %431 = math.tanh %430 : vector<2x8x32xf32>
    %432 = vector.shape_cast %2 : vector<1x32xf32> to vector<1x1x32xf32>
    %433 = vector.broadcast %432 : vector<1x1x32xf32> to vector<2x8x32xf32>
    %434 = arith.mulf %431, %433 : vector<2x8x32xf32>
    %cst_114 = arith.constant dense<0.000000e+00> : vector<2x8xf32>
    %435 = vector.multi_reduction <add>, %434, %cst_114 [2] : vector<2x8x32xf32> to vector<2x8xf32>
    %cst_115 = arith.constant dense<0xFF800000> : vector<2xf32>
    %436 = vector.multi_reduction <maximumf>, %435, %cst_115 [1] : vector<2x8xf32> to vector<2xf32>
    %437 = vector.shape_cast %436 : vector<2xf32> to vector<2x1xf32>
    %438 = vector.broadcast %437 : vector<2x1xf32> to vector<2x8xf32>
    %439 = arith.subf %435, %438 : vector<2x8xf32>
    %440 = math.exp %439 : vector<2x8xf32>
    %cst_116 = arith.constant dense<0.000000e+00> : vector<2xf32>
    %441 = vector.multi_reduction <add>, %440, %cst_116 [1] : vector<2x8xf32> to vector<2xf32>
    %442 = vector.shape_cast %441 : vector<2xf32> to vector<2x1xf32>
    %443 = tpu.reciprocal %442 {approx = true} : vector<2x1xf32> -> vector<2x1xf32>
    %444 = vector.broadcast %443 : vector<2x1xf32> to vector<2x8xf32>
    %445 = arith.mulf %440, %444 : vector<2x8xf32>
    %446 = vector.shape_cast %445 : vector<2x8xf32> to vector<2x8x1xf32>
    %447 = vector.broadcast %446 : vector<2x8x1xf32> to vector<2x8x32xf32>
    %448 = arith.mulf %447, %0 : vector<2x8x32xf32>
    %cst_117 = arith.constant dense<0.000000e+00> : vector<2x32xf32>
    %449 = vector.multi_reduction <add>, %448, %cst_117 [1] : vector<2x8x32xf32> to vector<2x32xf32>
    %cst_118 = arith.constant dense<0.000000e+00> : vector<2x128xf32>
    %450 = tpu.matmul %449, %4, %cst_118 {dimension_numbers = #tpu.dot_dimension_numbers<[1], [0], [0], [1], [0, 0, 1, 1], [], []>} : vector<2x32xf32>, vector<32x128xf32>, vector<2x128xf32> -> vector<2x128xf32>
    %451 = vector.extract_strided_slice %12 {offsets = [14, 0], sizes = [2, 96], strides = [1, 1]} : vector<16x96xf32> to vector<2x96xf32>
    %452 = arith.addf %451, %427 : vector<2x96xf32>
    %453 = vector.extract_strided_slice %450 {offsets = [0, 0], sizes = [2, 96], strides = [1, 1]} : vector<2x128xf32> to vector<2x96xf32>
    %454 = arith.addf %452, %453 : vector<2x96xf32>
    %455 = vector.extract_strided_slice %454 {offsets = [0, 0], sizes = [2, 32], strides = [1, 1]} : vector<2x96xf32> to vector<2x32xf32>
    %456 = arith.negf %455 : vector<2x32xf32>
    %457 = math.exp %456 : vector<2x32xf32>
    %cst_119 = arith.constant 1.000000e+00 : f32
    %458 = vector.broadcast %cst_119 : f32 to vector<2x32xf32>
    %459 = arith.addf %458, %457 : vector<2x32xf32>
    %460 = arith.divf %458, %459 : vector<2x32xf32>
    %461 = vector.extract_strided_slice %454 {offsets = [0, 32], sizes = [2, 32], strides = [1, 1]} : vector<2x96xf32> to vector<2x32xf32>
    %462 = arith.negf %461 : vector<2x32xf32>
    %463 = math.exp %462 : vector<2x32xf32>
    %cst_120 = arith.constant 1.000000e+00 : f32
    %464 = vector.broadcast %cst_120 : f32 to vector<2x32xf32>
    %465 = arith.addf %464, %463 : vector<2x32xf32>
    %466 = arith.divf %464, %465 : vector<2x32xf32>
    %467 = vector.extract_strided_slice %454 {offsets = [0, 64], sizes = [2, 32], strides = [1, 1]} : vector<2x96xf32> to vector<2x32xf32>
    %468 = vector.broadcast %5 : vector<1x32xf32> to vector<2x32xf32>
    %469 = arith.mulf %460, %468 : vector<2x32xf32>
    %470 = arith.addf %467, %469 : vector<2x32xf32>
    %471 = math.tanh %470 : vector<2x32xf32>
    %cst_121 = arith.constant 1.000000e+00 : f32
    %472 = vector.broadcast %cst_121 : f32 to vector<2x32xf32>
    %473 = arith.subf %472, %466 : vector<2x32xf32>
    %474 = arith.mulf %473, %471 : vector<2x32xf32>
    %475 = vector.extract_strided_slice %17 {offsets = [14, 0], sizes = [2, 32], strides = [1, 1]} : vector<16x32xf32> to vector<2x32xf32>
    %476 = vector.extract_strided_slice %450 {offsets = [0, 96], sizes = [2, 32], strides = [1, 1]} : vector<2x128xf32> to vector<2x32xf32>
    %477 = arith.addf %475, %476 : vector<2x32xf32>
    %cst_122 = arith.constant dense<0.000000e+00> : vector<2x32xf32>
    %478 = tpu.matmul %474, %6, %cst_122 {dimension_numbers = #tpu.dot_dimension_numbers<[1], [0], [0], [1], [0, 0, 1, 1], [], []>} : vector<2x32xf32>, vector<32x32xf32>, vector<2x32xf32> -> vector<2x32xf32>
    %479 = arith.addf %477, %478 : vector<2x32xf32>
    %c7 = arith.constant 7 : index
    %c0_123 = arith.constant 0 : index
    %c0_124 = arith.constant 0 : index
    %480 = vector.load %arg13[%c7, %c0_123, %c0_124] : memref<8x2x32xf32, #tpu.memory_space<vmem>>, vector<1x2x32xf32>
    %481 = vector.shape_cast %480 : vector<1x2x32xf32> to vector<2x32xf32>
    %482 = vector.shape_cast %479 : vector<2x32xf32> to vector<1x2x32xf32>
    tpu.vector_store %arg13[%c7, %c0_123, %c0_124], %482 {strides = array<i32>} : memref<8x2x32xf32, #tpu.memory_space<vmem>>, vector<1x2x32xf32>,
    %c0_125 = arith.constant 0 : index
    %c0_126 = arith.constant 0 : index
    %483 = vector.load %arg14[%c0_125, %c0_126] : memref<2x32xf32, #tpu.memory_space<vmem>>, vector<2x32xf32>
    tpu.vector_store %arg14[%c0_125, %c0_126], %474 {strides = array<i32>} : memref<2x32xf32, #tpu.memory_space<vmem>>, vector<2x32xf32>,
    return
  }
}

</mosaic_0001>

<llo_original>
// kernel: tpu_custom_call.1
$region0: #{tpu_custom_call.1}
  #allocation0 [shape = 'u32[]', space=smem, size = 0x4, offset = 0x4, fixed_abs, tag = 'smem constant byte address 0x4 - core index']
  #allocation1 [shape = 'u32[144,128]{1,0:T(1,128)}', space=vmem, size = 0x12000, scoped, tag = 'internal scratch']
  %s0 = inlined_call_operand.hbm [shape: f32[2,32], index: 0, kind: input, shape index: {}]
  %s1 = inlined_call_operand.hbm [shape: f32[2,8,32], index: 1, kind: input, shape index: {}]
  %s2 = inlined_call_operand.hbm [shape: f32[2,8,32], index: 2, kind: input, shape index: {}]
  %s3 = inlined_call_operand.hbm [shape: f32[16,16], index: 3, kind: input, shape index: {}]
  %s4 = inlined_call_operand.vmem [shape: f32[1,32], index: 4, kind: input, shape index: {}]
  %s5 = inlined_call_operand.hbm [shape: f32[32,128], index: 5, kind: input, shape index: {}]
  %s6 = inlined_call_operand.hbm [shape: f32[32,128], index: 6, kind: input, shape index: {}]
  %s7 = inlined_call_operand.hbm [shape: f32[16,96], index: 7, kind: input, shape index: {}]
  %s8 = inlined_call_operand.vmem [shape: f32[1,96], index: 8, kind: input, shape index: {}]
  %s9 = inlined_call_operand.vmem [shape: f32[1,32], index: 9, kind: input, shape index: {}]
  %s10 = inlined_call_operand.hbm [shape: f32[16,32], index: 10, kind: input, shape index: {}]
  %s11 = inlined_call_operand.vmem [shape: f32[32,32], index: 11, kind: input, shape index: {}]
  %s12 = inlined_call_operand.vmem [shape: f32[1,32], index: 12, kind: input, shape index: {}]
  %s13 = inlined_call_operand.hbm [shape: f32[8,2,32], index: 13, kind: output, shape index: {0}]
  %s14 = inlined_call_operand.hbm [shape: f32[2,32], index: 14, kind: output, shape index: {1}]
  %15 = xla_tuple %s13, %s14
  %s16 = sld [smem:[#allocation0]]
  $region102: #{tpu_custom_call.1} parent=0
    _
  %s18 = ssub.s32 1, %s16
  %s19 = scalar_select 0, %s18, %s16
  $region1: #{tpu_custom_call.1} parent=0
    #allocation2 [shape = 'u8[1024]{0}', space=vmem, size = 0x400, scoped, tag = 'input window, operand 0, single buffered']
    #allocation3 [shape = 's32[1]{0}', space=sflag, size = 0x4, scoped, tag = 'scoped memory for tpu_custom_call.1']
    #allocation4 [shape = 's32[1]{0}', space=sflag, size = 0x4, scoped, tag = 'scoped memory for tpu_custom_call.1']
    #allocation5 [shape = 'u8[8192]{0}', space=vmem, size = 0x2000, scoped, tag = 'input window, operand 1, single buffered']
    #allocation6 [shape = 's32[1]{0}', space=sflag, size = 0x4, scoped, tag = 'scoped memory for tpu_custom_call.1']
    #allocation7 [shape = 'u8[8192]{0}', space=vmem, size = 0x2000, scoped, tag = 'input window, operand 2, single buffered']
    #allocation8 [shape = 'u8[8192]{0}', space=vmem, size = 0x2000, scoped, tag = 'input window, operand 3, single buffered']
    #allocation9 [shape = 's32[1]{0}', space=sflag, size = 0x4, scoped, tag = 'scoped memory for tpu_custom_call.1']
    #allocation10 [shape = 'u8[16384]{0}', space=vmem, size = 0x4000, scoped, tag = 'input window, operand 5, single buffered']
    #allocation11 [shape = 'u8[16384]{0}', space=vmem, size = 0x4000, scoped, tag = 'input window, operand 6, single buffered']
    #allocation12 [shape = 's32[1]{0}', space=sflag, size = 0x4, scoped, tag = 'scoped memory for tpu_custom_call.1']
    #allocation13 [shape = 'u8[8192]{0}', space=vmem, size = 0x2000, scoped, tag = 'input window, operand 7, single buffered']
    #allocation14 [shape = 'u8[8192]{0}', space=vmem, size = 0x2000, scoped, tag = 'input window, operand 10, single buffered']
    #allocation15 [shape = 's32[1]{0}', space=sflag, size = 0x4, scoped, tag = 'scoped memory for tpu_custom_call.1']
    #allocation16 [shape = 'u8[8192]{0}', space=vmem, size = 0x2000, scoped, tag = 'output window, operand 0, single buffered']
    #allocation17 [shape = 'u8[1024]{0}', space=vmem, size = 0x400, scoped, tag = 'output window, operand 1, single buffered']
    #allocation18 [shape = 's32[1]{0}', space=sflag, size = 0x4, scoped, tag = 'scoped memory for tpu_custom_call.1']
    %20 = vsyncpa [#allocation3], 0
    %21 = vsyncpa [#allocation6], 0
    %22 = vsyncpa [#allocation9], 0
    %23 = vsyncpa [#allocation12], 0
    %24 = vsyncpa [#allocation15], 0
    %25 = vsyncpa [#allocation4], 0
    %26 = vsyncpa [#allocation18], 0
    // Predicated region
    $region2: #{tpu_custom_call.1} parent=1 // pred_check
      _
    $region3: #{tpu_custom_call.1} parent=1 // pred_check_branch
      %28 = sbr.rel (0) target = $region5
    $region4: #{tpu_custom_call.1} parent=1 // pred_region
      %s30 = ssub.s32 32, 32
      %31 = vsyncadd [#allocation3], %s30
      %s33 = sshll.u32 [#allocation2], 4
      %s34 = int_to_ptr.vmem [resolvable:$true] %s33
      %36 = dma.hbm_to_vmem [thread:$0]  %s0, 32, %s34, [#allocation3]
    $region5: #{tpu_custom_call.1} parent=1 // pred_fallthru
      _
    // Predicated region
    $region6: #{tpu_custom_call.1} parent=1 // pred_check
      _
    $region7: #{tpu_custom_call.1} parent=1 // pred_check_branch
      %38 = sbr.rel (0) target = $region9
    $region8: #{tpu_custom_call.1} parent=1 // pred_region
      %s40 = ssub.s32 256, 256
      %41 = vsyncadd [#allocation6], %s40
      %s42 = sshll.u32 [#allocation5], 4
      %s43 = int_to_ptr.vmem [resolvable:$true] %s42
      %48 = dma.hbm_to_vmem [thread:$0]  %s1, 256, %s43, [#allocation6], 128, 128, 8
    $region9: #{tpu_custom_call.1} parent=1 // pred_fallthru
      _
    // Predicated region
    $region10: #{tpu_custom_call.1} parent=1 // pred_check
      _
    $region11: #{tpu_custom_call.1} parent=1 // pred_check_branch
      %50 = sbr.rel (0) target = $region13
    $region12: #{tpu_custom_call.1} parent=1 // pred_region
      %s52 = ssub.s32 256, 256
      %53 = vsyncadd [#allocation6], %s52
      %s54 = sshll.u32 [#allocation7], 4
      %s55 = int_to_ptr.vmem [resolvable:$true] %s54
      %60 = dma.hbm_to_vmem [thread:$0]  %s2, 256, %s55, [#allocation6], 128, 128, 8
    $region13: #{tpu_custom_call.1} parent=1 // pred_fallthru
      _
    // Predicated region
    $region14: #{tpu_custom_call.1} parent=1 // pred_check
      _
    $region15: #{tpu_custom_call.1} parent=1 // pred_check_branch
      %62 = sbr.rel (0) target = $region17
    $region16: #{tpu_custom_call.1} parent=1 // pred_region
      %s64 = ssub.s32 256, 256
      %65 = vsyncadd [#allocation9], %s64
      %s66 = sshll.u32 [#allocation8], 4
      %s67 = int_to_ptr.vmem [resolvable:$true] %s66
      %72 = dma.hbm_to_vmem [thread:$0]  %s3, 256, %s67, [#allocation9], 128, 128, 8
    $region17: #{tpu_custom_call.1} parent=1 // pred_fallthru
      _
    // Predicated region
    $region18: #{tpu_custom_call.1} parent=1 // pred_check
      _
    $region19: #{tpu_custom_call.1} parent=1 // pred_check_branch
      %74 = sbr.rel (0) target = $region21
    $region20: #{tpu_custom_call.1} parent=1 // pred_region
      _
    $region21: #{tpu_custom_call.1} parent=1 // pred_fallthru
      _
    // Predicated region
    $region22: #{tpu_custom_call.1} parent=1 // pred_check
      _
    $region23: #{tpu_custom_call.1} parent=1 // pred_check_branch
      %76 = sbr.rel (0) target = $region25
    $region24: #{tpu_custom_call.1} parent=1 // pred_region
      %s78 = ssub.s32 512, 512
      %79 = vsyncadd [#allocation9], %s78
      %s80 = sshll.u32 [#allocation10], 4
      %s81 = int_to_ptr.vmem [resolvable:$true] %s80
      %86 = dma.hbm_to_vmem [thread:$0]  %s5, 512, %s81, [#allocation9], 128, 128, 8
    $region25: #{tpu_custom_call.1} parent=1 // pred_fallthru
      _
    // Predicated region
    $region26: #{tpu_custom_call.1} parent=1 // pred_check
      _
    $region27: #{tpu_custom_call.1} parent=1 // pred_check_branch
      %88 = sbr.rel (0) target = $region29
    $region28: #{tpu_custom_call.1} parent=1 // pred_region
      %s90 = ssub.s32 512, 512
      %91 = vsyncadd [#allocation12], %s90
      %s92 = sshll.u32 [#allocation11], 4
      %s93 = int_to_ptr.vmem [resolvable:$true] %s92
      %98 = dma.hbm_to_vmem [thread:$0]  %s6, 512, %s93, [#allocation12], 128, 128, 8
    $region29: #{tpu_custom_call.1} parent=1 // pred_fallthru
      _
    // Predicated region
    $region30: #{tpu_custom_call.1} parent=1 // pred_check
      _
    $region31: #{tpu_custom_call.1} parent=1 // pred_check_branch
      %100 = sbr.rel (0) target = $region33
    $region32: #{tpu_custom_call.1} parent=1 // pred_region
      %s102 = ssub.s32 256, 256
      %103 = vsyncadd [#allocation12], %s102
      %s104 = sshll.u32 [#allocation13], 4
      %s105 = int_to_ptr.vmem [resolvable:$true] %s104
      %110 = dma.hbm_to_vmem [thread:$0]  %s7, 256, %s105, [#allocation12], 128, 128, 8
    $region33: #{tpu_custom_call.1} parent=1 // pred_fallthru
      _
    // Predicated region
    $region34: #{tpu_custom_call.1} parent=1 // pred_check
      _
    $region35: #{tpu_custom_call.1} parent=1 // pred_check_branch
      %112 = sbr.rel (0) target = $region37
    $region36: #{tpu_custom_call.1} parent=1 // pred_region
      _
    $region37: #{tpu_custom_call.1} parent=1 // pred_fallthru
      _
    // Predicated region
    $region38: #{tpu_custom_call.1} parent=1 // pred_check
      _
    $region39: #{tpu_custom_call.1} parent=1 // pred_check_branch
      %114 = sbr.rel (0) target = $region41
    $region40: #{tpu_custom_call.1} parent=1 // pred_region
      _
    $region41: #{tpu_custom_call.1} parent=1 // pred_fallthru
      _
    // Predicated region
    $region42: #{tpu_custom_call.1} parent=1 // pred_check
      _
    $region43: #{tpu_custom_call.1} parent=1 // pred_check_branch
      %116 = sbr.rel (0) target = $region45
    $region44: #{tpu_custom_call.1} parent=1 // pred_region
      %s118 = ssub.s32 256, 256
      %119 = vsyncadd [#allocation15], %s118
      %s120 = sshll.u32 [#allocation14], 4
      %s121 = int_to_ptr.vmem [resolvable:$true] %s120
      %126 = dma.hbm_to_vmem [thread:$0]  %s10, 256, %s121, [#allocation15], 128, 128, 8
    $region45: #{tpu_custom_call.1} parent=1 // pred_fallthru
      _
    // Predicated region
    $region46: #{tpu_custom_call.1} parent=1 // pred_check
      _
    $region47: #{tpu_custom_call.1} parent=1 // pred_check_branch
      %128 = sbr.rel (0) target = $region49
    $region48: #{tpu_custom_call.1} parent=1 // pred_region
      _
    $region49: #{tpu_custom_call.1} parent=1 // pred_fallthru
      _
    // Predicated region
    $region50: #{tpu_custom_call.1} parent=1 // pred_check
      _
    $region51: #{tpu_custom_call.1} parent=1 // pred_check_branch
      %130 = sbr.rel (0) target = $region53
    $region52: #{tpu_custom_call.1} parent=1 // pred_region
      _
    $region53: #{tpu_custom_call.1} parent=1 // pred_fallthru
      _
    // Predicated region
    $region54: #{tpu_custom_call.1} parent=1 // pred_check
      _
    $region55: #{tpu_custom_call.1} parent=1 // pred_check_branch
      %132 = sbr.rel (0) target = $region57
    $region56: #{tpu_custom_call.1} parent=1 // pred_region
      %133 = dma.done [#allocation3], 32
    $region57: #{tpu_custom_call.1} parent=1 // pred_fallthru
      _
    // Predicated region
    $region58: #{tpu_custom_call.1} parent=1 // pred_check
      _
    $region59: #{tpu_custom_call.1} parent=1 // pred_check_branch
      %135 = sbr.rel (0) target = $region61
    $region60: #{tpu_custom_call.1} parent=1 // pred_region
      %136 = dma.done [#allocation6], 256
    $region61: #{tpu_custom_call.1} parent=1 // pred_fallthru
      _
    // Predicated region
    $region62: #{tpu_custom_call.1} parent=1 // pred_check
      _
    $region63: #{tpu_custom_call.1} parent=1 // pred_check_branch
      %138 = sbr.rel (0) target = $region65
    $region64: #{tpu_custom_call.1} parent=1 // pred_region
      %139 = dma.done [#allocation6], 256
    $region65: #{tpu_custom_call.1} parent=1 // pred_fallthru
      _
    // Predicated region
    $region66: #{tpu_custom_call.1} parent=1 // pred_check
      _
    $region67: #{tpu_custom_call.1} parent=1 // pred_check_branch
      %141 = sbr.rel (0) target = $region69
    $region68: #{tpu_custom_call.1} parent=1 // pred_region
      %142 = dma.done [#allocation9], 256
    $region69: #{tpu_custom_call.1} parent=1 // pred_fallthru
      _
    // Predicated region
    $region70: #{tpu_custom_call.1} parent=1 // pred_check
      _
    $region71: #{tpu_custom_call.1} parent=1 // pred_check_branch
      %144 = sbr.rel (0) target = $region73
    $region72: #{tpu_custom_call.1} parent=1 // pred_region
      %145 = dma.done [#allocation9], 512
    $region73: #{tpu_custom_call.1} parent=1 // pred_fallthru
      _
    // Predicated region
    $region74: #{tpu_custom_call.1} parent=1 // pred_check
      _
    $region75: #{tpu_custom_call.1} parent=1 // pred_check_branch
      %147 = sbr.rel (0) target = $region77
    $region76: #{tpu_custom_call.1} parent=1 // pred_region
      %148 = dma.done [#allocation12], 512
    $region77: #{tpu_custom_call.1} parent=1 // pred_fallthru
      _
    // Predicated region
    $region78: #{tpu_custom_call.1} parent=1 // pred_check
      _
    $region79: #{tpu_custom_call.1} parent=1 // pred_check_branch
      %150 = sbr.rel (0) target = $region81
    $region80: #{tpu_custom_call.1} parent=1 // pred_region
      %151 = dma.done [#allocation12], 256
    $region81: #{tpu_custom_call.1} parent=1 // pred_fallthru
      _
    // Predicated region
    $region82: #{tpu_custom_call.1} parent=1 // pred_check
      _
    $region83: #{tpu_custom_call.1} parent=1 // pred_check_branch
      %153 = sbr.rel (0) target = $region85
    $region84: #{tpu_custom_call.1} parent=1 // pred_region
      %154 = dma.done [#allocation15], 256
    $region85: #{tpu_custom_call.1} parent=1 // pred_fallthru
      _
    %v155 = vld [vmem:[#allocation5] sm:$0xff]
    %v156 = vld [vmem:[#allocation5 + $0x8] sm:$0xff]
    %v157 = vld [vmem:[#allocation7] sm:$0xff]
    %v158 = vld [vmem:[#allocation7 + $0x8] sm:$0xff]
    %v159 = vld [vmem:[%s4] sm:$0x1]
    %v160 = vld [vmem:[#allocation10] sm:$0xff]
    %v161 = vld [vmem:[#allocation10 + $0x8] sm:$0xff]
    %v162 = vld [vmem:[#allocation10 + $0x10] sm:$0xff]
    %v163 = vld [vmem:[#allocation10 + $0x18] sm:$0xff]
    %v164 = vld [vmem:[#allocation11] sm:$0xff]
    %v165 = vld [vmem:[#allocation11 + $0x8] sm:$0xff]
    %v166 = vld [vmem:[#allocation11 + $0x10] sm:$0xff]
    %v167 = vld [vmem:[#allocation11 + $0x18] sm:$0xff]
    %v168 = vld [vmem:[%s9] sm:$0x1]
    %v169 = vld [vmem:[%s11] sm:$0xff]
    %v170 = vld [vmem:[%s11 + $0x8] sm:$0xff]
    %v171 = vld [vmem:[%s11 + $0x10] sm:$0xff]
    %v172 = vld [vmem:[%s11 + $0x18] sm:$0xff]
    %v173 = vld [vmem:[#allocation8] sm:$0xff]
    %v174 = vld [vmem:[#allocation8 + $0x8] sm:$0xff]
    %v175 = vld [vmem:[#allocation13] sm:$0xff]
    %v176 = vld [vmem:[#allocation13 + $0x8] sm:$0xff]
    %v177 = vld [vmem:[%s8] sm:$0x1]
    %v179 = vlaneseq
    %v180 = vshrl.u32 %v179, 7
    %v181 = vsub.s32 0, %v180
    %v182 = vrot.slane %v177, %v181
    %vm184 = vcmask 130048
    %v186 = vsel %vm184, %v173, 0
    %v189 = vsel %vm184, %v174, 0
    %191 = vmatprep.subr.mxu0 0.0
    %192 = vmatpush1.msra.mxu0 %v175
    %193 = vmatprep.subr.mxu0 0.0
    %194 = vmatpush1.msra.mxu0 %v176
    %195 = vmatprep.subr.mxu0 0.0
    %196 = vmatpush1.msra.mxu0 0.0
    %197 = vmatprep.subr.mxu0 0.0
    %198 = vmatpush1.msra.mxu0 0.0
    %199 = vmatprep.subr.mxu0 0.0
    %200 = vmatpush1.msra.mxu0 0.0
    %201 = vmatprep.subr.mxu0 0.0
    %202 = vmatpush1.msra.mxu0 0.0
    %203 = vmatprep.subr.mxu0 0.0
    %204 = vmatpush1.msra.mxu0 0.0
    %205 = vmatprep.subr.mxu0 0.0
    %206 = vmatpush1.msra.mxu0 0.0
    %207 = vmatprep.subr.mxu0 0.0
    %208 = vmatpush1.msra.mxu0 0.0
    %209 = vmatprep.subr.mxu0 0.0
    %210 = vmatpush1.msra.mxu0 0.0
    %211 = vmatprep.subr.mxu0 0.0
    %212 = vmatpush1.msra.mxu0 0.0
    %213 = vmatprep.subr.mxu0 0.0
    %214 = vmatpush1.msra.mxu0 0.0
    %215 = vmatprep.subr.mxu0 0.0
    %216 = vmatpush1.msra.mxu0 0.0
    %217 = vmatprep.subr.mxu0 0.0
    %218 = vmatpush1.msra.mxu0 0.0
    %219 = vmatprep.subr.mxu0 0.0
    %220 = vmatpush1.msra.mxu0 0.0
    %221 = vmatprep.subr.mxu0 0.0
    %222 = vmatpush1.msra.mxu0 0.0
    %223 = vmatprep.subr.mxu0 0.0
    %224 = vmatpush1.msra.mxu0 0.0
    %225 = vmatprep.subr.mxu0 0.0
    %226 = vmatpush1.msra.mxu0 0.0
    %227 = vmatprep.subr.mxu0 0.0
    %228 = vmatpush1.msra.mxu0 0.0
    %229 = vmatprep.subr.mxu0 0.0
    %230 = vmatpush1.msra.mxu0 0.0
    %231 = vmatprep.subr.mxu0 0.0
    %232 = vmatpush1.msra.mxu0 0.0
    %233 = vmatprep.subr.mxu0 0.0
    %234 = vmatpush1.msra.mxu0 0.0
    %235 = vmatprep.subr.mxu0 0.0
    %236 = vmatpush1.msra.mxu0 0.0
    %237 = vmatprep.subr.mxu0 0.0
    %238 = vmatpush1.msra.mxu0 0.0
    %239 = vmatprep.subr.mxu0 0.0
    %240 = vmatpush1.msra.mxu0 0.0
    %241 = vmatprep.subr.mxu0 0.0
    %242 = vmatpush1.msra.mxu0 0.0
    %243 = vmatprep.subr.mxu0 0.0
    %244 = vmatpush1.msra.mxu0 0.0
    %245 = vmatprep.subr.mxu0 0.0
    %246 = vmatpush1.msra.mxu0 0.0
    %247 = vmatprep.subr.mxu0 0.0
    %248 = vmatpush1.msra.mxu0 0.0
    %249 = vmatprep.subr.mxu0 0.0
    %250 = vmatpush1.msra.mxu0 0.0
    %251 = vmatprep.subr.mxu0 0.0
    %252 = vmatpush1.msra.mxu0 0.0
    %253 = vmatprep.subr.mxu0 0.0
    %254 = vmatpush1.msra.mxu0 0.0
    %255 = vmatprep.mubr.f32.mxu0 0.0
    %256 = vmatmul.mubr.f32.gmra.mrb[0].mxu0 %v186
    %v257 = vpop.f32.mrb[0].mxu0
    %v258 = vadd.f32 %v182, %v257
    %v259 = vpop.f32.mrb[0].mxu0
    %260 = vmatprep.mubr.f32.mxu0 0.0
    %261 = vmatmul.mubr.f32.gmra.mrb[0].mxu0 %v189
    %v262 = vpop.f32.mrb[0].mxu0
    %v263 = vadd.f32 %v182, %v262
    %v264 = vpop.f32.mrb[0].mxu0
    %265 = vdwg.mxu0
    %v266 = vld [vmem:[#allocation14] sm:$0xff]
    %v267 = vld [vmem:[#allocation14 + $0x8] sm:$0xff]
    %v268 = vld [vmem:[%s12] sm:$0x1]
    %v270 = vlaneseq
    %v271 = vshrl.u32 %v270, 7
    %v272 = vsub.s32 0, %v271
    %v273 = vrot.slane %v268, %v272
    %275 = vmatprep.subr.mxu0 0.0
    %276 = vmatpush1.msra.mxu0 %v266
    %277 = vmatprep.subr.mxu0 0.0
    %278 = vmatpush1.msra.mxu0 %v267
    %279 = vmatprep.subr.mxu0 0.0
    %280 = vmatpush1.msra.mxu0 0.0
    %281 = vmatprep.subr.mxu0 0.0
    %282 = vmatpush1.msra.mxu0 0.0
    %283 = vmatprep.subr.mxu0 0.0
    %284 = vmatpush1.msra.mxu0 0.0
    %285 = vmatprep.subr.mxu0 0.0
    %286 = vmatpush1.msra.mxu0 0.0
    %287 = vmatprep.subr.mxu0 0.0
    %288 = vmatpush1.msra.mxu0 0.0
    %289 = vmatprep.subr.mxu0 0.0
    %290 = vmatpush1.msra.mxu0 0.0
    %291 = vmatprep.subr.mxu0 0.0
    %292 = vmatpush1.msra.mxu0 0.0
    %293 = vmatprep.subr.mxu0 0.0
    %294 = vmatpush1.msra.mxu0 0.0
    %295 = vmatprep.subr.mxu0 0.0
    %296 = vmatpush1.msra.mxu0 0.0
    %297 = vmatprep.subr.mxu0 0.0
    %298 = vmatpush1.msra.mxu0 0.0
    %299 = vmatprep.subr.mxu0 0.0
    %300 = vmatpush1.msra.mxu0 0.0
    %301 = vmatprep.subr.mxu0 0.0
    %302 = vmatpush1.msra.mxu0 0.0
    %303 = vmatprep.subr.mxu0 0.0
    %304 = vmatpush1.msra.mxu0 0.0
    %305 = vmatprep.subr.mxu0 0.0
    %306 = vmatpush1.msra.mxu0 0.0
    %307 = vmatprep.subr.mxu0 0.0
    %308 = vmatpush1.msra.mxu0 0.0
    %309 = vmatprep.subr.mxu0 0.0
    %310 = vmatpush1.msra.mxu0 0.0
    %311 = vmatprep.subr.mxu0 0.0
    %312 = vmatpush1.msra.mxu0 0.0
    %313 = vmatprep.subr.mxu0 0.0
    %314 = vmatpush1.msra.mxu0 0.0
    %315 = vmatprep.subr.mxu0 0.0
    %316 = vmatpush1.msra.mxu0 0.0
    %317 = vmatprep.subr.mxu0 0.0
    %318 = vmatpush1.msra.mxu0 0.0
    %319 = vmatprep.subr.mxu0 0.0
    %320 = vmatpush1.msra.mxu0 0.0
    %321 = vmatprep.subr.mxu0 0.0
    %322 = vmatpush1.msra.mxu0 0.0
    %323 = vmatprep.subr.mxu0 0.0
    %324 = vmatpush1.msra.mxu0 0.0
    %325 = vmatprep.subr.mxu0 0.0
    %326 = vmatpush1.msra.mxu0 0.0
    %327 = vmatprep.subr.mxu0 0.0
    %328 = vmatpush1.msra.mxu0 0.0
    %329 = vmatprep.subr.mxu0 0.0
    %330 = vmatpush1.msra.mxu0 0.0
    %331 = vmatprep.subr.mxu0 0.0
    %332 = vmatpush1.msra.mxu0 0.0
    %333 = vmatprep.subr.mxu0 0.0
    %334 = vmatpush1.msra.mxu0 0.0
    %335 = vmatprep.subr.mxu0 0.0
    %336 = vmatpush1.msra.mxu0 0.0
    %337 = vmatprep.subr.mxu0 0.0
    %338 = vmatpush1.msra.mxu0 0.0
    %339 = vmatprep.mubr.f32.mxu0 0.0
    %340 = vmatmul.mubr.f32.gmra.mrb[0].mxu0 %v186
    %v341 = vpop.f32.mrb[0].mxu0
    %v342 = vadd.f32 %v273, %v341
    %v343 = vpop.f32.mrb[0].mxu0
    %344 = vmatprep.mubr.f32.mxu0 0.0
    %345 = vmatmul.mubr.f32.gmra.mrb[0].mxu0 %v189
    %v346 = vpop.f32.mrb[0].mxu0
    %v347 = vadd.f32 %v273, %v346
    %v348 = vpop.f32.mrb[0].mxu0
    %349 = vdwg.mxu0
    %v350 = vld [vmem:[#allocation2] sm:$0x3]
    %vm351 = vcmask 261120
    %v353 = vsel %vm351, %v350, 0
    %355 = vmatprep.subr.mxu0 0.0
    %356 = vmatpush1.msra.mxu0 %v160
    %357 = vmatprep.subr.mxu0 0.0
    %358 = vmatpush1.msra.mxu0 %v161
    %359 = vmatprep.subr.mxu0 0.0
    %360 = vmatpush1.msra.mxu0 %v162
    %361 = vmatprep.subr.mxu0 0.0
    %362 = vmatpush1.msra.mxu0 %v163
    %363 = vmatprep.subr.mxu0 0.0
    %364 = vmatpush1.msra.mxu0 0.0
    %365 = vmatprep.subr.mxu0 0.0
    %366 = vmatpush1.msra.mxu0 0.0
    %367 = vmatprep.subr.mxu0 0.0
    %368 = vmatpush1.msra.mxu0 0.0
    %369 = vmatprep.subr.mxu0 0.0
    %370 = vmatpush1.msra.mxu0 0.0
    %371 = vmatprep.subr.mxu0 0.0
    %372 = vmatpush1.msra.mxu0 0.0
    %373 = vmatprep.subr.mxu0 0.0
    %374 = vmatpush1.msra.mxu0 0.0
    %375 = vmatprep.subr.mxu0 0.0
    %376 = vmatpush1.msra.mxu0 0.0
    %377 = vmatprep.subr.mxu0 0.0
    %378 = vmatpush1.msra.mxu0 0.0
    %379 = vmatprep.subr.mxu0 0.0
    %380 = vmatpush1.msra.mxu0 0.0
    %381 = vmatprep.subr.mxu0 0.0
    %382 = vmatpush1.msra.mxu0 0.0
    %383 = vmatprep.subr.mxu0 0.0
    %384 = vmatpush1.msra.mxu0 0.0
    %385 = vmatprep.subr.mxu0 0.0
    %386 = vmatpush1.msra.mxu0 0.0
    %387 = vmatprep.subr.mxu0 0.0
    %388 = vmatpush1.msra.mxu0 0.0
    %389 = vmatprep.subr.mxu0 0.0
    %390 = vmatpush1.msra.mxu0 0.0
    %391 = vmatprep.subr.mxu0 0.0
    %392 = vmatpush1.msra.mxu0 0.0
    %393 = vmatprep.subr.mxu0 0.0
    %394 = vmatpush1.msra.mxu0 0.0
    %395 = vmatprep.subr.mxu0 0.0
    %396 = vmatpush1.msra.mxu0 0.0
    %397 = vmatprep.subr.mxu0 0.0
    %398 = vmatpush1.msra.mxu0 0.0
    %399 = vmatprep.subr.mxu0 0.0
    %400 = vmatpush1.msra.mxu0 0.0
    %401 = vmatprep.subr.mxu0 0.0
    %402 = vmatpush1.msra.mxu0 0.0
    %403 = vmatprep.subr.mxu0 0.0
    %404 = vmatpush1.msra.mxu0 0.0
    %405 = vmatprep.subr.mxu0 0.0
    %406 = vmatpush1.msra.mxu0 0.0
    %407 = vmatprep.subr.mxu0 0.0
    %408 = vmatpush1.msra.mxu0 0.0
    %409 = vmatprep.subr.mxu0 0.0
    %410 = vmatpush1.msra.mxu0 0.0
    %411 = vmatprep.subr.mxu0 0.0
    %412 = vmatpush1.msra.mxu0 0.0
    %413 = vmatprep.subr.mxu0 0.0
    %414 = vmatpush1.msra.mxu0 0.0
    %415 = vmatprep.subr.mxu0 0.0
    %416 = vmatpush1.msra.mxu0 0.0
    %417 = vmatprep.subr.mxu0 0.0
    %418 = vmatpush1.msra.mxu0 0.0
    %419 = vmatprep.mubr.f32.mxu0 0.0
    %420 = vmatmul.mubr.f32.gmra.mrb[0].mxu0 %v353
    %v421 = vpop.f32.mrb[0].mxu0
    %v422 = vadd.f32 0.0, %v421
    %v423 = vpop.f32.mrb[0].mxu0
    %424 = vdwg.mxu0
    %v427 = vunpack.c.l.s4 1966171168
    %v428 = vunpack.c.0.s8 %v427
    %v429 = vlaneseq
    %v430 = vshrl.u32 %v429, 7
    %v431 = vsub.s32 %v428, %v430
    %v432 = vrot.slane %v422, %v431
    %v433 = vcombine.high %v432, %v432
    %v435 = vunpack.c.l.s4 1966171168
    %v436 = vunpack.c.0.s8 %v435
    %v437 = vlaneseq
    %v438 = vshrl.u32 %v437, 7
    %v439 = vsub.s32 %v436, %v438
    %v440 = vrot.slane %v432, %v439
    %v442 = vunpack.c.l.s4 1966171168
    %v443 = vunpack.c.0.s8 %v442
    %v444 = vlaneseq
    %v445 = vshrl.u32 %v444, 7
    %v446 = vsub.s32 %v443, %v445
    %v447 = vrot.slane %v433, %v446
    %v448 = vlaneseq
    %v449 = vshrl.u32 %v448, 7
    %v450 = vsub.s32 0, %v449
    %v451 = vrot.slane %v440, %v450
    %v452 = vlaneseq
    %v453 = vshrl.u32 %v452, 7
    %v454 = vsub.s32 0, %v453
    %v455 = vrot.slane %v447, %v454
    %v458 = vadd.f32 %v157, %v451
    %v459 = vadd.f32 %v158, %v455
    %v460 = vtanh.pop %v458
    %v461 = vtanh.pop %v459
    %v463 = vlaneseq
    %v464 = vshrl.u32 %v463, 7
    %v465 = vsub.s32 0, %v464
    %v466 = vrot.slane %v159, %v465
    %v468 = vmul.f32 %v460, %v466
    %v469 = vmul.f32 %v461, %v466
    %v470 = vsel %vm351, %v468, 0.0
    %471 = vadd.xlane.f32.xlu0 %v470
    %v472 = vpop.xlane.xlu0 %471
    %v473 = vsel %vm351, %v469, 0.0
    %474 = vadd.xlane.f32.xlu0 %v473
    %v475 = vpop.xlane.xlu0 %474
    %v478 = vlaneseq
    %v479 = vand.u32 %v478, 127
    %v480 = vlaneseq
    %v481 = vshrl.u32 %v480, 7
    %v482 = vsub.s32 %v479, %v481
    %v483 = vrot.slane %v472, %v482
    %v484 = vlaneseq
    %v485 = vshrl.u32 %v484, 7
    %v486 = vsub.s32 %v479, %v485
    %v487 = vrot.slane %v475, %v486
    %vm488 = vcmask 1041409
    %v489 = vsel %vm488, %v487, %v483
    %vm491 = vcmask 58368
    %v492 = vsel %vm491, %v489, -inf
    %493 = vmax.xlane.f32.xlu0 %v492
    %v494 = vpop.xlane.xlu0 %493
    %v496 = vlaneseq
    %v497 = vshrl.u32 %v496, 7
    %v498 = vsub.s32 0, %v497
    %v499 = vrot.slane %v494, %v498
    %v500 = vlaneseq
    %v501 = vshrl.u32 %v500, 7
    %v502 = vsub.s32 1, %v501
    %v503 = vrot.slane %v494, %v502
    %v506 = vsub.f32 %v472, %v499
    %v507 = vsub.f32 %v475, %v503
    %v508 = vmul.f32 %v506, 1.442695
    %v509 = vpow.pop %v508
    %v510 = vmul.f32 %v507, 1.442695
    %v511 = vpow.pop %v510
    %514 = vset.pattern.permute.xlu0 0
    %515 = vperm.xlu0 %514, %v509
    %v516 = vpop.permute.xlu0 %515
    %517 = vset.pattern.permute.xlu0 0
    %518 = vperm.xlu0 %517, %v511
    %v519 = vpop.permute.xlu0 %518
    %v520 = vlaneseq
    %v521 = vshrl.u32 %v520, 7
    %v522 = vsub.s32 %v479, %v521
    %v523 = vrot.slane %v516, %v522
    %v524 = vlaneseq
    %v525 = vshrl.u32 %v524, 7
    %v526 = vsub.s32 %v479, %v525
    %v527 = vrot.slane %v519, %v526
    %v528 = vsel %vm488, %v527, %v523
    %v530 = vsel %vm491, %v528, 0.0
    %531 = vadd.xlane.f32.xlu0 %v530
    %v532 = vpop.xlane.xlu0 %531
    %v533 = vrcp.pop %v532
    %v535 = vlaneseq
    %v536 = vshrl.u32 %v535, 7
    %v537 = vsub.s32 0, %v536
    %v538 = vrot.slane %v533, %v537
    %v539 = vlaneseq
    %v540 = vshrl.u32 %v539, 7
    %v541 = vsub.s32 1, %v540
    %v542 = vrot.slane %v533, %v541
    %v545 = vmul.f32 %v509, %v538
    %v546 = vmul.f32 %v511, %v542
    %548 = vset.pattern.permute.xlu0 0
    %549 = vperm.xlu0 %548, %v545
    %v550 = vpop.permute.xlu0 %549
    %553 = vset.pattern.permute.xlu0 0
    %554 = vperm.xlu0 %553, %v546
    %v555 = vpop.permute.xlu0 %554
    %v557 = vmul.f32 %v550, %v155
    %v558 = vmul.f32 %v555, %v156
    %v559 = vsel %vm351, %v557, 0.0
    %v560 = vrot.slane %v559, 4
    %v561 = vadd.f32 %v559, %v560
    %v562 = vrot.slane %v561, 2
    %v563 = vadd.f32 %v561, %v562
    %v564 = vrot.slane %v563, 1
    %v565 = vadd.f32 %v563, %v564
    %v566 = vsel %vm351, %v558, 0.0
    %v567 = vrot.slane %v566, 4
    %v568 = vadd.f32 %v566, %v567
    %v569 = vrot.slane %v568, 2
    %v570 = vadd.f32 %v568, %v569
    %v571 = vrot.slane %v570, 1
    %v572 = vadd.f32 %v570, %v571
    %v575 = vsel %vm488, %v572, %v565
    %v576 = vsel %vm351, %v575, 0
    %578 = vmatprep.subr.mxu0 0.0
    %579 = vmatpush1.msra.mxu0 %v164
    %580 = vmatprep.subr.mxu0 0.0
    %581 = vmatpush1.msra.mxu0 %v165
    %582 = vmatprep.subr.mxu0 0.0
    %583 = vmatpush1.msra.mxu0 %v166
    %584 = vmatprep.subr.mxu0 0.0
    %585 = vmatpush1.msra.mxu0 %v167
    %586 = vmatprep.subr.mxu0 0.0
    %587 = vmatpush1.msra.mxu0 0.0
    %588 = vmatprep.subr.mxu0 0.0
    %589 = vmatpush1.msra.mxu0 0.0
    %590 = vmatprep.subr.mxu0 0.0
    %591 = vmatpush1.msra.mxu0 0.0
    %592 = vmatprep.subr.mxu0 0.0
    %593 = vmatpush1.msra.mxu0 0.0
    %594 = vmatprep.subr.mxu0 0.0
    %595 = vmatpush1.msra.mxu0 0.0
    %596 = vmatprep.subr.mxu0 0.0
    %597 = vmatpush1.msra.mxu0 0.0
    %598 = vmatprep.subr.mxu0 0.0
    %599 = vmatpush1.msra.mxu0 0.0
    %600 = vmatprep.subr.mxu0 0.0
    %601 = vmatpush1.msra.mxu0 0.0
    %602 = vmatprep.subr.mxu0 0.0
    %603 = vmatpush1.msra.mxu0 0.0
    %604 = vmatprep.subr.mxu0 0.0
    %605 = vmatpush1.msra.mxu0 0.0
    %606 = vmatprep.subr.mxu0 0.0
    %607 = vmatpush1.msra.mxu0 0.0
    %608 = vmatprep.subr.mxu0 0.0
    %609 = vmatpush1.msra.mxu0 0.0
    %610 = vmatprep.subr.mxu0 0.0
    %611 = vmatpush1.msra.mxu0 0.0
    %612 = vmatprep.subr.mxu0 0.0
    %613 = vmatpush1.msra.mxu0 0.0
    %614 = vmatprep.subr.mxu0 0.0
    %615 = vmatpush1.msra.mxu0 0.0
    %616 = vmatprep.subr.mxu0 0.0
    %617 = vmatpush1.msra.mxu0 0.0
    %618 = vmatprep.subr.mxu0 0.0
    %619 = vmatpush1.msra.mxu0 0.0
    %620 = vmatprep.subr.mxu0 0.0
    %621 = vmatpush1.msra.mxu0 0.0
    %622 = vmatprep.subr.mxu0 0.0
    %623 = vmatpush1.msra.mxu0 0.0
    %624 = vmatprep.subr.mxu0 0.0
    %625 = vmatpush1.msra.mxu0 0.0
    %626 = vmatprep.subr.mxu0 0.0
    %627 = vmatpush1.msra.mxu0 0.0
    %628 = vmatprep.subr.mxu0 0.0
    %629 = vmatpush1.msra.mxu0 0.0
    %630 = vmatprep.subr.mxu0 0.0
    %631 = vmatpush1.msra.mxu0 0.0
    %632 = vmatprep.subr.mxu0 0.0
    %633 = vmatpush1.msra.mxu0 0.0
    %634 = vmatprep.subr.mxu0 0.0
    %635 = vmatpush1.msra.mxu0 0.0
    %636 = vmatprep.subr.mxu0 0.0
    %637 = vmatpush1.msra.mxu0 0.0
    %638 = vmatprep.subr.mxu0 0.0
    %639 = vmatpush1.msra.mxu0 0.0
    %640 = vmatprep.subr.mxu0 0.0
    %641 = vmatpush1.msra.mxu0 0.0
    %642 = vmatprep.mubr.f32.mxu0 0.0
    %643 = vmatmul.mubr.f32.gmra.mrb[0].mxu0 %v576
    %v644 = vpop.f32.mrb[0].mxu0
    %v645 = vadd.f32 0.0, %v644
    %v646 = vpop.f32.mrb[0].mxu0
    %647 = vdwg.mxu0
    %648 = vrot.lane.b32.xlu0 %v422, 96
    %v649 = vpop.permute.xlu0 %648
    %v651 = vadd.f32 %v258, %v649
    %v652 = vadd.f32 %v651, %v645
    %v653 = vxor.u32 %v652, 2147483648
    %v654 = vmul.f32 %v653, 1.442695
    %v655 = vpow.pop %v654
    %v656 = vadd.f32 %v655, 1.0
    %v657 = vrcp.pop %v656
    %v658 = vmul.f32 1.0, %v657
    %v660 = vlaneseq
    %v661 = vshrl.u32 %v660, 7
    %v662 = vsub.s32 0, %v661
    %v663 = vrot.slane %v168, %v662
    %v665 = vmul.f32 %v658, %v663
    %667 = vrot.lane.b32.xlu0 %v665, 64
    %v668 = vpop.permute.xlu0 %667
    %v670 = vadd.f32 %v652, %v668
    %v671 = vtanh.pop %v670
    %v672 = vsub.f32 1.0, %v658
    %674 = vrot.lane.b32.xlu0 %v671, 96
    %v675 = vpop.permute.xlu0 %674
    %v677 = vmul.f32 %v672, %v675
    %679 = vrot.lane.b32.xlu0 %v645, 32
    %v680 = vpop.permute.xlu0 %679
    %v682 = vadd.f32 %v342, %v680
    %684 = vrot.lane.b32.xlu0 %v677, 96
    %v685 = vpop.permute.xlu0 %684
    %v686 = vsel %vm351, %v685, 0
    %688 = vmatprep.subr.mxu0 0.0
    %689 = vmatpush1.msra.mxu0 %v169
    %690 = vmatprep.subr.mxu0 0.0
    %691 = vmatpush1.msra.mxu0 %v170
    %692 = vmatprep.subr.mxu0 0.0
    %693 = vmatpush1.msra.mxu0 %v171
    %694 = vmatprep.subr.mxu0 0.0
    %695 = vmatpush1.msra.mxu0 %v172
    %696 = vmatprep.subr.mxu0 0.0
    %697 = vmatpush1.msra.mxu0 0.0
    %698 = vmatprep.subr.mxu0 0.0
    %699 = vmatpush1.msra.mxu0 0.0
    %700 = vmatprep.subr.mxu0 0.0
    %701 = vmatpush1.msra.mxu0 0.0
    %702 = vmatprep.subr.mxu0 0.0
    %703 = vmatpush1.msra.mxu0 0.0
    %704 = vmatprep.subr.mxu0 0.0
    %705 = vmatpush1.msra.mxu0 0.0
    %706 = vmatprep.subr.mxu0 0.0
    %707 = vmatpush1.msra.mxu0 0.0
    %708 = vmatprep.subr.mxu0 0.0
    %709 = vmatpush1.msra.mxu0 0.0
    %710 = vmatprep.subr.mxu0 0.0
    %711 = vmatpush1.msra.mxu0 0.0
    %712 = vmatprep.subr.mxu0 0.0
    %713 = vmatpush1.msra.mxu0 0.0
    %714 = vmatprep.subr.mxu0 0.0
    %715 = vmatpush1.msra.mxu0 0.0
    %716 = vmatprep.subr.mxu0 0.0
    %717 = vmatpush1.msra.mxu0 0.0
    %718 = vmatprep.subr.mxu0 0.0
    %719 = vmatpush1.msra.mxu0 0.0
    %720 = vmatprep.subr.mxu0 0.0
    %721 = vmatpush1.msra.mxu0 0.0
    %722 = vmatprep.subr.mxu0 0.0
    %723 = vmatpush1.msra.mxu0 0.0
    %724 = vmatprep.subr.mxu0 0.0
    %725 = vmatpush1.msra.mxu0 0.0
    %726 = vmatprep.subr.mxu0 0.0
    %727 = vmatpush1.msra.mxu0 0.0
    %728 = vmatprep.subr.mxu0 0.0
    %729 = vmatpush1.msra.mxu0 0.0
    %730 = vmatprep.subr.mxu0 0.0
    %731 = vmatpush1.msra.mxu0 0.0
    %732 = vmatprep.subr.mxu0 0.0
    %733 = vmatpush1.msra.mxu0 0.0
    %734 = vmatprep.subr.mxu0 0.0
    %735 = vmatpush1.msra.mxu0 0.0
    %736 = vmatprep.subr.mxu0 0.0
    %737 = vmatpush1.msra.mxu0 0.0
    %738 = vmatprep.subr.mxu0 0.0
    %739 = vmatpush1.msra.mxu0 0.0
    %740 = vmatprep.subr.mxu0 0.0
    %741 = vmatpush1.msra.mxu0 0.0
    %742 = vmatprep.subr.mxu0 0.0
    %743 = vmatpush1.msra.mxu0 0.0
    %744 = vmatprep.subr.mxu0 0.0
    %745 = vmatpush1.msra.mxu0 0.0
    %746 = vmatprep.subr.mxu0 0.0
    %747 = vmatpush1.msra.mxu0 0.0
    %748 = vmatprep.subr.mxu0 0.0
    %749 = vmatpush1.msra.mxu0 0.0
    %750 = vmatprep.subr.mxu0 0.0
    %751 = vmatpush1.msra.mxu0 0.0
    %752 = vmatprep.mubr.f32.mxu0 0.0
    %753 = vmatmul.mubr.f32.gmra.mrb[0].mxu0 %v686
    %v754 = vpop.f32.mrb[0].mxu0
    %v755 = vadd.f32 0.0, %v754
    %v756 = vpop.f32.mrb[0].mxu0
    %757 = vdwg.mxu0
    %v758 = vadd.f32 %v682, %v755
    %vm759 = vcmask 254976
    %760 = vst.msk [vmem:[#allocation16] sm:$0x3] %vm759, %v758
    %761 = vmatprep.subr.mxu0 0.0
    %762 = vmatpush1.msra.mxu0 %v160
    %763 = vmatprep.subr.mxu0 0.0
    %764 = vmatpush1.msra.mxu0 %v161
    %765 = vmatprep.subr.mxu0 0.0
    %766 = vmatpush1.msra.mxu0 %v162
    %767 = vmatprep.subr.mxu0 0.0
    %768 = vmatpush1.msra.mxu0 %v163
    %769 = vmatprep.subr.mxu0 0.0
    %770 = vmatpush1.msra.mxu0 0.0
    %771 = vmatprep.subr.mxu0 0.0
    %772 = vmatpush1.msra.mxu0 0.0
    %773 = vmatprep.subr.mxu0 0.0
    %774 = vmatpush1.msra.mxu0 0.0
    %775 = vmatprep.subr.mxu0 0.0
    %776 = vmatpush1.msra.mxu0 0.0
    %777 = vmatprep.subr.mxu0 0.0
    %778 = vmatpush1.msra.mxu0 0.0
    %779 = vmatprep.subr.mxu0 0.0
    %780 = vmatpush1.msra.mxu0 0.0
    %781 = vmatprep.subr.mxu0 0.0
    %782 = vmatpush1.msra.mxu0 0.0
    %783 = vmatprep.subr.mxu0 0.0
    %784 = vmatpush1.msra.mxu0 0.0
    %785 = vmatprep.subr.mxu0 0.0
    %786 = vmatpush1.msra.mxu0 0.0
    %787 = vmatprep.subr.mxu0 0.0
    %788 = vmatpush1.msra.mxu0 0.0
    %789 = vmatprep.subr.mxu0 0.0
    %790 = vmatpush1.msra.mxu0 0.0
    %791 = vmatprep.subr.mxu0 0.0
    %792 = vmatpush1.msra.mxu0 0.0
    %793 = vmatprep.subr.mxu0 0.0
    %794 = vmatpush1.msra.mxu0 0.0
    %795 = vmatprep.subr.mxu0 0.0
    %796 = vmatpush1.msra.mxu0 0.0
    %797 = vmatprep.subr.mxu0 0.0
    %798 = vmatpush1.msra.mxu0 0.0
    %799 = vmatprep.subr.mxu0 0.0
    %800 = vmatpush1.msra.mxu0 0.0
    %801 = vmatprep.subr.mxu0 0.0
    %802 = vmatpush1.msra.mxu0 0.0
    %803 = vmatprep.subr.mxu0 0.0
    %804 = vmatpush1.msra.mxu0 0.0
    %805 = vmatprep.subr.mxu0 0.0
    %806 = vmatpush1.msra.mxu0 0.0
    %807 = vmatprep.subr.mxu0 0.0
    %808 = vmatpush1.msra.mxu0 0.0
    %809 = vmatprep.subr.mxu0 0.0
    %810 = vmatpush1.msra.mxu0 0.0
    %811 = vmatprep.subr.mxu0 0.0
    %812 = vmatpush1.msra.mxu0 0.0
    %813 = vmatprep.subr.mxu0 0.0
    %814 = vmatpush1.msra.mxu0 0.0
    %815 = vmatprep.subr.mxu0 0.0
    %816 = vmatpush1.msra.mxu0 0.0
    %817 = vmatprep.subr.mxu0 0.0
    %818 = vmatpush1.msra.mxu0 0.0
    %819 = vmatprep.subr.mxu0 0.0
    %820 = vmatpush1.msra.mxu0 0.0
    %821 = vmatprep.subr.mxu0 0.0
    %822 = vmatpush1.msra.mxu0 0.0
    %823 = vmatprep.subr.mxu0 0.0
    %824 = vmatpush1.msra.mxu0 0.0
    %825 = vmatprep.mubr.f32.mxu0 0.0
    %826 = vmatmul.mubr.f32.gmra.mrb[0].mxu0 %v686
    %v827 = vpop.f32.mrb[0].mxu0
    %v828 = vadd.f32 0.0, %v827
    %v829 = vpop.f32.mrb[0].mxu0
    %830 = vdwg.mxu0
    %v833 = vunpack.c.l.s4 1966171168
    %v834 = vunpack.c.0.s8 %v833
    %v835 = vlaneseq
    %v836 = vshrl.u32 %v835, 7
    %v837 = vsub.s32 %v834, %v836
    %v838 = vrot.slane %v828, %v837
    %v839 = vcombine.high %v838, %v838
    %v841 = vunpack.c.l.s4 1966171168
    %v842 = vunpack.c.0.s8 %v841
    %v843 = vlaneseq
    %v844 = vshrl.u32 %v843, 7
    %v845 = vsub.s32 %v842, %v844
    %v846 = vrot.slane %v838, %v845
    %v848 = vunpack.c.l.s4 1966171168
    %v849 = vunpack.c.0.s8 %v848
    %v850 = vlaneseq
    %v851 = vshrl.u32 %v850, 7
    %v852 = vsub.s32 %v849, %v851
    %v853 = vrot.slane %v839, %v852
    %v854 = vlaneseq
    %v855 = vshrl.u32 %v854, 7
    %v856 = vsub.s32 0, %v855
    %v857 = vrot.slane %v846, %v856
    %v858 = vlaneseq
    %v859 = vshrl.u32 %v858, 7
    %v860 = vsub.s32 0, %v859
    %v861 = vrot.slane %v853, %v860
    %v864 = vadd.f32 %v157, %v857
    %v865 = vadd.f32 %v158, %v861
    %v866 = vtanh.pop %v864
    %v867 = vtanh.pop %v865
    %v868 = vmul.f32 %v866, %v466
    %v869 = vmul.f32 %v867, %v466
    %v870 = vsel %vm351, %v868, 0.0
    %871 = vadd.xlane.f32.xlu0 %v870
    %v872 = vpop.xlane.xlu0 %871
    %v873 = vsel %vm351, %v869, 0.0
    %874 = vadd.xlane.f32.xlu0 %v873
    %v875 = vpop.xlane.xlu0 %874
    %v878 = vlaneseq
    %v879 = vshrl.u32 %v878, 7
    %v880 = vsub.s32 %v479, %v879
    %v881 = vrot.slane %v872, %v880
    %v882 = vlaneseq
    %v883 = vshrl.u32 %v882, 7
    %v884 = vsub.s32 %v479, %v883
    %v885 = vrot.slane %v875, %v884
    %v886 = vsel %vm488, %v885, %v881
    %v888 = vsel %vm491, %v886, -inf
    %889 = vmax.xlane.f32.xlu0 %v888
    %v890 = vpop.xlane.xlu0 %889
    %v892 = vlaneseq
    %v893 = vshrl.u32 %v892, 7
    %v894 = vsub.s32 0, %v893
    %v895 = vrot.slane %v890, %v894
    %v896 = vlaneseq
    %v897 = vshrl.u32 %v896, 7
    %v898 = vsub.s32 1, %v897
    %v899 = vrot.slane %v890, %v898
    %v902 = vsub.f32 %v872, %v895
    %v903 = vsub.f32 %v875, %v899
    %v904 = vmul.f32 %v902, 1.442695
    %v905 = vpow.pop %v904
    %v906 = vmul.f32 %v903, 1.442695
    %v907 = vpow.pop %v906
    %910 = vset.pattern.permute.xlu0 0
    %911 = vperm.xlu0 %910, %v905
    %v912 = vpop.permute.xlu0 %911
    %913 = vset.pattern.permute.xlu0 0
    %914 = vperm.xlu0 %913, %v907
    %v915 = vpop.permute.xlu0 %914
    %v916 = vlaneseq
    %v917 = vshrl.u32 %v916, 7
    %v918 = vsub.s32 %v479, %v917
    %v919 = vrot.slane %v912, %v918
    %v920 = vlaneseq
    %v921 = vshrl.u32 %v920, 7
    %v922 = vsub.s32 %v479, %v921
    %v923 = vrot.slane %v915, %v922
    %v924 = vsel %vm488, %v923, %v919
    %v926 = vsel %vm491, %v924, 0.0
    %927 = vadd.xlane.f32.xlu0 %v926
    %v928 = vpop.xlane.xlu0 %927
    %v929 = vrcp.pop %v928
    %v931 = vlaneseq
    %v932 = vshrl.u32 %v931, 7
    %v933 = vsub.s32 0, %v932
    %v934 = vrot.slane %v929, %v933
    %v935 = vlaneseq
    %v936 = vshrl.u32 %v935, 7
    %v937 = vsub.s32 1, %v936
    %v938 = vrot.slane %v929, %v937
    %v941 = vmul.f32 %v905, %v934
    %v942 = vmul.f32 %v907, %v938
    %944 = vset.pattern.permute.xlu0 0
    %945 = vperm.xlu0 %944, %v941
    %v946 = vpop.permute.xlu0 %945
    %949 = vset.pattern.permute.xlu0 0
    %950 = vperm.xlu0 %949, %v942
    %v951 = vpop.permute.xlu0 %950
    %v953 = vmul.f32 %v946, %v155
    %v954 = vmul.f32 %v951, %v156
    %v955 = vsel %vm351, %v953, 0.0
    %v956 = vrot.slane %v955, 4
    %v957 = vadd.f32 %v955, %v956
    %v958 = vrot.slane %v957, 2
    %v959 = vadd.f32 %v957, %v958
    %v960 = vrot.slane %v959, 1
    %v961 = vadd.f32 %v959, %v960
    %v962 = vsel %vm351, %v954, 0.0
    %v963 = vrot.slane %v962, 4
    %v964 = vadd.f32 %v962, %v963
    %v965 = vrot.slane %v964, 2
    %v966 = vadd.f32 %v964, %v965
    %v967 = vrot.slane %v966, 1
    %v968 = vadd.f32 %v966, %v967
    %v971 = vsel %vm488, %v968, %v961
    %v972 = vsel %vm351, %v971, 0
    %974 = vmatprep.subr.mxu0 0.0
    %975 = vmatpush1.msra.mxu0 %v164
    %976 = vmatprep.subr.mxu0 0.0
    %977 = vmatpush1.msra.mxu0 %v165
    %978 = vmatprep.subr.mxu0 0.0
    %979 = vmatpush1.msra.mxu0 %v166
    %980 = vmatprep.subr.mxu0 0.0
    %981 = vmatpush1.msra.mxu0 %v167
    %982 = vmatprep.subr.mxu0 0.0
    %983 = vmatpush1.msra.mxu0 0.0
    %984 = vmatprep.subr.mxu0 0.0
    %985 = vmatpush1.msra.mxu0 0.0
    %986 = vmatprep.subr.mxu0 0.0
    %987 = vmatpush1.msra.mxu0 0.0
    %988 = vmatprep.subr.mxu0 0.0
    %989 = vmatpush1.msra.mxu0 0.0
    %990 = vmatprep.subr.mxu0 0.0
    %991 = vmatpush1.msra.mxu0 0.0
    %992 = vmatprep.subr.mxu0 0.0
    %993 = vmatpush1.msra.mxu0 0.0
    %994 = vmatprep.subr.mxu0 0.0
    %995 = vmatpush1.msra.mxu0 0.0
    %996 = vmatprep.subr.mxu0 0.0
    %997 = vmatpush1.msra.mxu0 0.0
    %998 = vmatprep.subr.mxu0 0.0
    %999 = vmatpush1.msra.mxu0 0.0
    %1000 = vmatprep.subr.mxu0 0.0
    %1001 = vmatpush1.msra.mxu0 0.0
    %1002 = vmatprep.subr.mxu0 0.0
    %1003 = vmatpush1.msra.mxu0 0.0
    %1004 = vmatprep.subr.mxu0 0.0
    %1005 = vmatpush1.msra.mxu0 0.0
    %1006 = vmatprep.subr.mxu0 0.0
    %1007 = vmatpush1.msra.mxu0 0.0
    %1008 = vmatprep.subr.mxu0 0.0
    %1009 = vmatpush1.msra.mxu0 0.0
    %1010 = vmatprep.subr.mxu0 0.0
    %1011 = vmatpush1.msra.mxu0 0.0
    %1012 = vmatprep.subr.mxu0 0.0
    %1013 = vmatpush1.msra.mxu0 0.0
    %1014 = vmatprep.subr.mxu0 0.0
    %1015 = vmatpush1.msra.mxu0 0.0
    %1016 = vmatprep.subr.mxu0 0.0
    %1017 = vmatpush1.msra.mxu0 0.0
    %1018 = vmatprep.subr.mxu0 0.0
    %1019 = vmatpush1.msra.mxu0 0.0
    %1020 = vmatprep.subr.mxu0 0.0
    %1021 = vmatpush1.msra.mxu0 0.0
    %1022 = vmatprep.subr.mxu0 0.0
    %1023 = vmatpush1.msra.mxu0 0.0
    %1024 = vmatprep.subr.mxu0 0.0
    %1025 = vmatpush1.msra.mxu0 0.0
    %1026 = vmatprep.subr.mxu0 0.0
    %1027 = vmatpush1.msra.mxu0 0.0
    %1028 = vmatprep.subr.mxu0 0.0
    %1029 = vmatpush1.msra.mxu0 0.0
    %1030 = vmatprep.subr.mxu0 0.0
    %1031 = vmatpush1.msra.mxu0 0.0
    %1032 = vmatprep.subr.mxu0 0.0
    %1033 = vmatpush1.msra.mxu0 0.0
    %1034 = vmatprep.subr.mxu0 0.0
    %1035 = vmatpush1.msra.mxu0 0.0
    %1036 = vmatprep.subr.mxu0 0.0
    %1037 = vmatpush1.msra.mxu0 0.0
    %1038 = vmatprep.mubr.f32.mxu0 0.0
    %1039 = vmatmul.mubr.f32.gmra.mrb[0].mxu0 %v972
    %v1040 = vpop.f32.mrb[0].mxu0
    %v1041 = vadd.f32 0.0, %v1040
    %v1042 = vpop.f32.mrb[0].mxu0
    %1043 = vdwg.mxu0
    %v1044 = vrot.slane %v828, 6
    %1045 = vrot.lane.b32.xlu0 %v1044, 96
    %v1046 = vpop.permute.xlu0 %1045
    %v1048 = vadd.f32 %v258, %v1046
    %v1050 = vrot.slane %v1041, 6
    %v1052 = vadd.f32 %v1048, %v1050
    %v1053 = vxor.u32 %v1052, 2147483648
    %v1054 = vmul.f32 %v1053, 1.442695
    %v1055 = vpow.pop %v1054
    %v1056 = vadd.f32 %v1055, 1.0
    %v1057 = vrcp.pop %v1056
    %v1058 = vmul.f32 1.0, %v1057
    %v1059 = vmul.f32 %v1058, %v663
    %1061 = vrot.lane.b32.xlu0 %v1059, 64
    %v1062 = vpop.permute.xlu0 %1061
    %v1064 = vadd.f32 %v1052, %v1062
    %v1065 = vtanh.pop %v1064
    %v1066 = vsub.f32 1.0, %v1058
    %1068 = vrot.lane.b32.xlu0 %v1065, 96
    %v1069 = vpop.permute.xlu0 %1068
    %v1071 = vmul.f32 %v1066, %v1069
    %1072 = vrot.lane.b32.xlu0 %v1050, 32
    %v1073 = vpop.permute.xlu0 %1072
    %v1075 = vadd.f32 %v342, %v1073
    %v1077 = vrot.slane %v1071, 2
    %1078 = vrot.lane.b32.xlu0 %v1077, 96
    %v1079 = vpop.permute.xlu0 %1078
    %v1080 = vsel %vm351, %v1079, 0
    %1082 = vmatprep.subr.mxu0 0.0
    %1083 = vmatpush1.msra.mxu0 %v169
    %1084 = vmatprep.subr.mxu0 0.0
    %1085 = vmatpush1.msra.mxu0 %v170
    %1086 = vmatprep.subr.mxu0 0.0
    %1087 = vmatpush1.msra.mxu0 %v171
    %1088 = vmatprep.subr.mxu0 0.0
    %1089 = vmatpush1.msra.mxu0 %v172
    %1090 = vmatprep.subr.mxu0 0.0
    %1091 = vmatpush1.msra.mxu0 0.0
    %1092 = vmatprep.subr.mxu0 0.0
    %1093 = vmatpush1.msra.mxu0 0.0
    %1094 = vmatprep.subr.mxu0 0.0
    %1095 = vmatpush1.msra.mxu0 0.0
    %1096 = vmatprep.subr.mxu0 0.0
    %1097 = vmatpush1.msra.mxu0 0.0
    %1098 = vmatprep.subr.mxu0 0.0
    %1099 = vmatpush1.msra.mxu0 0.0
    %1100 = vmatprep.subr.mxu0 0.0
    %1101 = vmatpush1.msra.mxu0 0.0
    %1102 = vmatprep.subr.mxu0 0.0
    %1103 = vmatpush1.msra.mxu0 0.0
    %1104 = vmatprep.subr.mxu0 0.0
    %1105 = vmatpush1.msra.mxu0 0.0
    %1106 = vmatprep.subr.mxu0 0.0
    %1107 = vmatpush1.msra.mxu0 0.0
    %1108 = vmatprep.subr.mxu0 0.0
    %1109 = vmatpush1.msra.mxu0 0.0
    %1110 = vmatprep.subr.mxu0 0.0
    %1111 = vmatpush1.msra.mxu0 0.0
    %1112 = vmatprep.subr.mxu0 0.0
    %1113 = vmatpush1.msra.mxu0 0.0
    %1114 = vmatprep.subr.mxu0 0.0
    %1115 = vmatpush1.msra.mxu0 0.0
    %1116 = vmatprep.subr.mxu0 0.0
    %1117 = vmatpush1.msra.mxu0 0.0
    %1118 = vmatprep.subr.mxu0 0.0
    %1119 = vmatpush1.msra.mxu0 0.0
    %1120 = vmatprep.subr.mxu0 0.0
    %1121 = vmatpush1.msra.mxu0 0.0
    %1122 = vmatprep.subr.mxu0 0.0
    %1123 = vmatpush1.msra.mxu0 0.0
    %1124 = vmatprep.subr.mxu0 0.0
    %1125 = vmatpush1.msra.mxu0 0.0
    %1126 = vmatprep.subr.mxu0 0.0
    %1127 = vmatpush1.msra.mxu0 0.0
    %1128 = vmatprep.subr.mxu0 0.0
    %1129 = vmatpush1.msra.mxu0 0.0
    %1130 = vmatprep.subr.mxu0 0.0
    %1131 = vmatpush1.msra.mxu0 0.0
    %1132 = vmatprep.subr.mxu0 0.0
    %1133 = vmatpush1.msra.mxu0 0.0
    %1134 = vmatprep.subr.mxu0 0.0
    %1135 = vmatpush1.msra.mxu0 0.0
    %1136 = vmatprep.subr.mxu0 0.0
    %1137 = vmatpush1.msra.mxu0 0.0
    %1138 = vmatprep.subr.mxu0 0.0
    %1139 = vmatpush1.msra.mxu0 0.0
    %1140 = vmatprep.subr.mxu0 0.0
    %1141 = vmatpush1.msra.mxu0 0.0
    %1142 = vmatprep.subr.mxu0 0.0
    %1143 = vmatpush1.msra.mxu0 0.0
    %1144 = vmatprep.subr.mxu0 0.0
    %1145 = vmatpush1.msra.mxu0 0.0
    %1146 = vmatprep.mubr.f32.mxu0 0.0
    %1147 = vmatmul.mubr.f32.gmra.mrb[0].mxu0 %v1080
    %v1148 = vpop.f32.mrb[0].mxu0
    %v1149 = vadd.f32 0.0, %v1148
    %v1150 = vpop.f32.mrb[0].mxu0
    %1151 = vdwg.mxu0
    %v1153 = vrot.slane %v1149, 6
    %v1155 = vadd.f32 %v1075, %v1153
    %s1156 = scalar_lea.vmem [#allocation16], 2
    %vm1157 = vcmask 257026
    %1158 = vst.msk [vmem:[%s1156 - $0x2] sm:$0xc] %vm1157, %v1155
    %1159 = vmatprep.subr.mxu0 0.0
    %1160 = vmatpush1.msra.mxu0 %v160
    %1161 = vmatprep.subr.mxu0 0.0
    %1162 = vmatpush1.msra.mxu0 %v161
    %1163 = vmatprep.subr.mxu0 0.0
    %1164 = vmatpush1.msra.mxu0 %v162
    %1165 = vmatprep.subr.mxu0 0.0
    %1166 = vmatpush1.msra.mxu0 %v163
    %1167 = vmatprep.subr.mxu0 0.0
    %1168 = vmatpush1.msra.mxu0 0.0
    %1169 = vmatprep.subr.mxu0 0.0
    %1170 = vmatpush1.msra.mxu0 0.0
    %1171 = vmatprep.subr.mxu0 0.0
    %1172 = vmatpush1.msra.mxu0 0.0
    %1173 = vmatprep.subr.mxu0 0.0
    %1174 = vmatpush1.msra.mxu0 0.0
    %1175 = vmatprep.subr.mxu0 0.0
    %1176 = vmatpush1.msra.mxu0 0.0
    %1177 = vmatprep.subr.mxu0 0.0
    %1178 = vmatpush1.msra.mxu0 0.0
    %1179 = vmatprep.subr.mxu0 0.0
    %1180 = vmatpush1.msra.mxu0 0.0
    %1181 = vmatprep.subr.mxu0 0.0
    %1182 = vmatpush1.msra.mxu0 0.0
    %1183 = vmatprep.subr.mxu0 0.0
    %1184 = vmatpush1.msra.mxu0 0.0
    %1185 = vmatprep.subr.mxu0 0.0
    %1186 = vmatpush1.msra.mxu0 0.0
    %1187 = vmatprep.subr.mxu0 0.0
    %1188 = vmatpush1.msra.mxu0 0.0
    %1189 = vmatprep.subr.mxu0 0.0
    %1190 = vmatpush1.msra.mxu0 0.0
    %1191 = vmatprep.subr.mxu0 0.0
    %1192 = vmatpush1.msra.mxu0 0.0
    %1193 = vmatprep.subr.mxu0 0.0
    %1194 = vmatpush1.msra.mxu0 0.0
    %1195 = vmatprep.subr.mxu0 0.0
    %1196 = vmatpush1.msra.mxu0 0.0
    %1197 = vmatprep.subr.mxu0 0.0
    %1198 = vmatpush1.msra.mxu0 0.0
    %1199 = vmatprep.subr.mxu0 0.0
    %1200 = vmatpush1.msra.mxu0 0.0
    %1201 = vmatprep.subr.mxu0 0.0
    %1202 = vmatpush1.msra.mxu0 0.0
    %1203 = vmatprep.subr.mxu0 0.0
    %1204 = vmatpush1.msra.mxu0 0.0
    %1205 = vmatprep.subr.mxu0 0.0
    %1206 = vmatpush1.msra.mxu0 0.0
    %1207 = vmatprep.subr.mxu0 0.0
    %1208 = vmatpush1.msra.mxu0 0.0
    %1209 = vmatprep.subr.mxu0 0.0
    %1210 = vmatpush1.msra.mxu0 0.0
    %1211 = vmatprep.subr.mxu0 0.0
    %1212 = vmatpush1.msra.mxu0 0.0
    %1213 = vmatprep.subr.mxu0 0.0
    %1214 = vmatpush1.msra.mxu0 0.0
    %1215 = vmatprep.subr.mxu0 0.0
    %1216 = vmatpush1.msra.mxu0 0.0
    %1217 = vmatprep.subr.mxu0 0.0
    %1218 = vmatpush1.msra.mxu0 0.0
    %1219 = vmatprep.subr.mxu0 0.0
    %1220 = vmatpush1.msra.mxu0 0.0
    %1221 = vmatprep.subr.mxu0 0.0
    %1222 = vmatpush1.msra.mxu0 0.0
    %1223 = vmatprep.mubr.f32.mxu0 0.0
    %1224 = vmatmul.mubr.f32.gmra.mrb[0].mxu0 %v1080
    %v1225 = vpop.f32.mrb[0].mxu0
    %v1226 = vadd.f32 0.0, %v1225
    %v1227 = vpop.f32.mrb[0].mxu0
    %1228 = vdwg.mxu0
    %v1231 = vunpack.c.l.s4 1966171168
    %v1232 = vunpack.c.0.s8 %v1231
    %v1233 = vlaneseq
    %v1234 = vshrl.u32 %v1233, 7
    %v1235 = vsub.s32 %v1232, %v1234
    %v1236 = vrot.slane %v1226, %v1235
    %v1237 = vcombine.high %v1236, %v1236
    %v1239 = vunpack.c.l.s4 1966171168
    %v1240 = vunpack.c.0.s8 %v1239
    %v1241 = vlaneseq
    %v1242 = vshrl.u32 %v1241, 7
    %v1243 = vsub.s32 %v1240, %v1242
    %v1244 = vrot.slane %v1236, %v1243
    %v1246 = vunpack.c.l.s4 1966171168
    %v1247 = vunpack.c.0.s8 %v1246
    %v1248 = vlaneseq
    %v1249 = vshrl.u32 %v1248, 7
    %v1250 = vsub.s32 %v1247, %v1249
    %v1251 = vrot.slane %v1237, %v1250
    %v1252 = vlaneseq
    %v1253 = vshrl.u32 %v1252, 7
    %v1254 = vsub.s32 0, %v1253
    %v1255 = vrot.slane %v1244, %v1254
    %v1256 = vlaneseq
    %v1257 = vshrl.u32 %v1256, 7
    %v1258 = vsub.s32 0, %v1257
    %v1259 = vrot.slane %v1251, %v1258
    %v1262 = vadd.f32 %v157, %v1255
    %v1263 = vadd.f32 %v158, %v1259
    %v1264 = vtanh.pop %v1262
    %v1265 = vtanh.pop %v1263
    %v1266 = vmul.f32 %v1264, %v466
    %v1267 = vmul.f32 %v1265, %v466
    %v1268 = vsel %vm351, %v1266, 0.0
    %1269 = vadd.xlane.f32.xlu0 %v1268
    %v1270 = vpop.xlane.xlu0 %1269
    %v1271 = vsel %vm351, %v1267, 0.0
    %1272 = vadd.xlane.f32.xlu0 %v1271
    %v1273 = vpop.xlane.xlu0 %1272
    %v1276 = vlaneseq
    %v1277 = vshrl.u32 %v1276, 7
    %v1278 = vsub.s32 %v479, %v1277
    %v1279 = vrot.slane %v1270, %v1278
    %v1280 = vlaneseq
    %v1281 = vshrl.u32 %v1280, 7
    %v1282 = vsub.s32 %v479, %v1281
    %v1283 = vrot.slane %v1273, %v1282
    %v1284 = vsel %vm488, %v1283, %v1279
    %v1286 = vsel %vm491, %v1284, -inf
    %1287 = vmax.xlane.f32.xlu0 %v1286
    %v1288 = vpop.xlane.xlu0 %1287
    %v1290 = vlaneseq
    %v1291 = vshrl.u32 %v1290, 7
    %v1292 = vsub.s32 0, %v1291
    %v1293 = vrot.slane %v1288, %v1292
    %v1294 = vlaneseq
    %v1295 = vshrl.u32 %v1294, 7
    %v1296 = vsub.s32 1, %v1295
    %v1297 = vrot.slane %v1288, %v1296
    %v1300 = vsub.f32 %v1270, %v1293
    %v1301 = vsub.f32 %v1273, %v1297
    %v1302 = vmul.f32 %v1300, 1.442695
    %v1303 = vpow.pop %v1302
    %v1304 = vmul.f32 %v1301, 1.442695
    %v1305 = vpow.pop %v1304
    %1308 = vset.pattern.permute.xlu0 0
    %1309 = vperm.xlu0 %1308, %v1303
    %v1310 = vpop.permute.xlu0 %1309
    %1311 = vset.pattern.permute.xlu0 0
    %1312 = vperm.xlu0 %1311, %v1305
    %v1313 = vpop.permute.xlu0 %1312
    %v1314 = vlaneseq
    %v1315 = vshrl.u32 %v1314, 7
    %v1316 = vsub.s32 %v479, %v1315
    %v1317 = vrot.slane %v1310, %v1316
    %v1318 = vlaneseq
    %v1319 = vshrl.u32 %v1318, 7
    %v1320 = vsub.s32 %v479, %v1319
    %v1321 = vrot.slane %v1313, %v1320
    %v1322 = vsel %vm488, %v1321, %v1317
    %v1324 = vsel %vm491, %v1322, 0.0
    %1325 = vadd.xlane.f32.xlu0 %v1324
    %v1326 = vpop.xlane.xlu0 %1325
    %v1327 = vrcp.pop %v1326
    %v1329 = vlaneseq
    %v1330 = vshrl.u32 %v1329, 7
    %v1331 = vsub.s32 0, %v1330
    %v1332 = vrot.slane %v1327, %v1331
    %v1333 = vlaneseq
    %v1334 = vshrl.u32 %v1333, 7
    %v1335 = vsub.s32 1, %v1334
    %v1336 = vrot.slane %v1327, %v1335
    %v1339 = vmul.f32 %v1303, %v1332
    %v1340 = vmul.f32 %v1305, %v1336
    %1342 = vset.pattern.permute.xlu0 0
    %1343 = vperm.xlu0 %1342, %v1339
    %v1344 = vpop.permute.xlu0 %1343
    %1347 = vset.pattern.permute.xlu0 0
    %1348 = vperm.xlu0 %1347, %v1340
    %v1349 = vpop.permute.xlu0 %1348
    %v1351 = vmul.f32 %v1344, %v155
    %v1352 = vmul.f32 %v1349, %v156
    %v1353 = vsel %vm351, %v1351, 0.0
    %v1354 = vrot.slane %v1353, 4
    %v1355 = vadd.f32 %v1353, %v1354
    %v1356 = vrot.slane %v1355, 2
    %v1357 = vadd.f32 %v1355, %v1356
    %v1358 = vrot.slane %v1357, 1
    %v1359 = vadd.f32 %v1357, %v1358
    %v1360 = vsel %vm351, %v1352, 0.0
    %v1361 = vrot.slane %v1360, 4
    %v1362 = vadd.f32 %v1360, %v1361
    %v1363 = vrot.slane %v1362, 2
    %v1364 = vadd.f32 %v1362, %v1363
    %v1365 = vrot.slane %v1364, 1
    %v1366 = vadd.f32 %v1364, %v1365
    %v1369 = vsel %vm488, %v1366, %v1359
    %v1370 = vsel %vm351, %v1369, 0
    %1372 = vmatprep.subr.mxu0 0.0
    %1373 = vmatpush1.msra.mxu0 %v164
    %1374 = vmatprep.subr.mxu0 0.0
    %1375 = vmatpush1.msra.mxu0 %v165
    %1376 = vmatprep.subr.mxu0 0.0
    %1377 = vmatpush1.msra.mxu0 %v166
    %1378 = vmatprep.subr.mxu0 0.0
    %1379 = vmatpush1.msra.mxu0 %v167
    %1380 = vmatprep.subr.mxu0 0.0
    %1381 = vmatpush1.msra.mxu0 0.0
    %1382 = vmatprep.subr.mxu0 0.0
    %1383 = vmatpush1.msra.mxu0 0.0
    %1384 = vmatprep.subr.mxu0 0.0
    %1385 = vmatpush1.msra.mxu0 0.0
    %1386 = vmatprep.subr.mxu0 0.0
    %1387 = vmatpush1.msra.mxu0 0.0
    %1388 = vmatprep.subr.mxu0 0.0
    %1389 = vmatpush1.msra.mxu0 0.0
    %1390 = vmatprep.subr.mxu0 0.0
    %1391 = vmatpush1.msra.mxu0 0.0
    %1392 = vmatprep.subr.mxu0 0.0
    %1393 = vmatpush1.msra.mxu0 0.0
    %1394 = vmatprep.subr.mxu0 0.0
    %1395 = vmatpush1.msra.mxu0 0.0
    %1396 = vmatprep.subr.mxu0 0.0
    %1397 = vmatpush1.msra.mxu0 0.0
    %1398 = vmatprep.subr.mxu0 0.0
    %1399 = vmatpush1.msra.mxu0 0.0
    %1400 = vmatprep.subr.mxu0 0.0
    %1401 = vmatpush1.msra.mxu0 0.0
    %1402 = vmatprep.subr.mxu0 0.0
    %1403 = vmatpush1.msra.mxu0 0.0
    %1404 = vmatprep.subr.mxu0 0.0
    %1405 = vmatpush1.msra.mxu0 0.0
    %1406 = vmatprep.subr.mxu0 0.0
    %1407 = vmatpush1.msra.mxu0 0.0
    %1408 = vmatprep.subr.mxu0 0.0
    %1409 = vmatpush1.msra.mxu0 0.0
    %1410 = vmatprep.subr.mxu0 0.0
    %1411 = vmatpush1.msra.mxu0 0.0
    %1412 = vmatprep.subr.mxu0 0.0
    %1413 = vmatpush1.msra.mxu0 0.0
    %1414 = vmatprep.subr.mxu0 0.0
    %1415 = vmatpush1.msra.mxu0 0.0
    %1416 = vmatprep.subr.mxu0 0.0
    %1417 = vmatpush1.msra.mxu0 0.0
    %1418 = vmatprep.subr.mxu0 0.0
    %1419 = vmatpush1.msra.mxu0 0.0
    %1420 = vmatprep.subr.mxu0 0.0
    %1421 = vmatpush1.msra.mxu0 0.0
    %1422 = vmatprep.subr.mxu0 0.0
    %1423 = vmatpush1.msra.mxu0 0.0
    %1424 = vmatprep.subr.mxu0 0.0
    %1425 = vmatpush1.msra.mxu0 0.0
    %1426 = vmatprep.subr.mxu0 0.0
    %1427 = vmatpush1.msra.mxu0 0.0
    %1428 = vmatprep.subr.mxu0 0.0
    %1429 = vmatpush1.msra.mxu0 0.0
    %1430 = vmatprep.subr.mxu0 0.0
    %1431 = vmatpush1.msra.mxu0 0.0
    %1432 = vmatprep.subr.mxu0 0.0
    %1433 = vmatpush1.msra.mxu0 0.0
    %1434 = vmatprep.subr.mxu0 0.0
    %1435 = vmatpush1.msra.mxu0 0.0
    %1436 = vmatprep.mubr.f32.mxu0 0.0
    %1437 = vmatmul.mubr.f32.gmra.mrb[0].mxu0 %v1370
    %v1438 = vpop.f32.mrb[0].mxu0
    %v1439 = vadd.f32 0.0, %v1438
    %v1440 = vpop.f32.mrb[0].mxu0
    %1441 = vdwg.mxu0
    %v1442 = vrot.slane %v1226, 4
    %1443 = vrot.lane.b32.xlu0 %v1442, 96
    %v1444 = vpop.permute.xlu0 %1443
    %v1446 = vadd.f32 %v258, %v1444
    %v1448 = vrot.slane %v1439, 4
    %v1450 = vadd.f32 %v1446, %v1448
    %v1451 = vxor.u32 %v1450, 2147483648
    %v1452 = vmul.f32 %v1451, 1.442695
    %v1453 = vpow.pop %v1452
    %v1454 = vadd.f32 %v1453, 1.0
    %v1455 = vrcp.pop %v1454
    %v1456 = vmul.f32 1.0, %v1455
    %v1457 = vmul.f32 %v1456, %v663
    %1459 = vrot.lane.b32.xlu0 %v1457, 64
    %v1460 = vpop.permute.xlu0 %1459
    %v1462 = vadd.f32 %v1450, %v1460
    %v1463 = vtanh.pop %v1462
    %v1464 = vsub.f32 1.0, %v1456
    %1466 = vrot.lane.b32.xlu0 %v1463, 96
    %v1467 = vpop.permute.xlu0 %1466
    %v1469 = vmul.f32 %v1464, %v1467
    %1470 = vrot.lane.b32.xlu0 %v1448, 32
    %v1471 = vpop.permute.xlu0 %1470
    %v1473 = vadd.f32 %v342, %v1471
    %v1475 = vrot.slane %v1469, 4
    %1476 = vrot.lane.b32.xlu0 %v1475, 96
    %v1477 = vpop.permute.xlu0 %1476
    %v1478 = vsel %vm351, %v1477, 0
    %1480 = vmatprep.subr.mxu0 0.0
    %1481 = vmatpush1.msra.mxu0 %v169
    %1482 = vmatprep.subr.mxu0 0.0
    %1483 = vmatpush1.msra.mxu0 %v170
    %1484 = vmatprep.subr.mxu0 0.0
    %1485 = vmatpush1.msra.mxu0 %v171
    %1486 = vmatprep.subr.mxu0 0.0
    %1487 = vmatpush1.msra.mxu0 %v172
    %1488 = vmatprep.subr.mxu0 0.0
    %1489 = vmatpush1.msra.mxu0 0.0
    %1490 = vmatprep.subr.mxu0 0.0
    %1491 = vmatpush1.msra.mxu0 0.0
    %1492 = vmatprep.subr.mxu0 0.0
    %1493 = vmatpush1.msra.mxu0 0.0
    %1494 = vmatprep.subr.mxu0 0.0
    %1495 = vmatpush1.msra.mxu0 0.0
    %1496 = vmatprep.subr.mxu0 0.0
    %1497 = vmatpush1.msra.mxu0 0.0
    %1498 = vmatprep.subr.mxu0 0.0
    %1499 = vmatpush1.msra.mxu0 0.0
    %1500 = vmatprep.subr.mxu0 0.0
    %1501 = vmatpush1.msra.mxu0 0.0
    %1502 = vmatprep.subr.mxu0 0.0
    %1503 = vmatpush1.msra.mxu0 0.0
    %1504 = vmatprep.subr.mxu0 0.0
    %1505 = vmatpush1.msra.mxu0 0.0
    %1506 = vmatprep.subr.mxu0 0.0
    %1507 = vmatpush1.msra.mxu0 0.0
    %1508 = vmatprep.subr.mxu0 0.0
    %1509 = vmatpush1.msra.mxu0 0.0
    %1510 = vmatprep.subr.mxu0 0.0
    %1511 = vmatpush1.msra.mxu0 0.0
    %1512 = vmatprep.subr.mxu0 0.0
    %1513 = vmatpush1.msra.mxu0 0.0
    %1514 = vmatprep.subr.mxu0 0.0
    %1515 = vmatpush1.msra.mxu0 0.0
    %1516 = vmatprep.subr.mxu0 0.0
    %1517 = vmatpush1.msra.mxu0 0.0
    %1518 = vmatprep.subr.mxu0 0.0
    %1519 = vmatpush1.msra.mxu0 0.0
    %1520 = vmatprep.subr.mxu0 0.0
    %1521 = vmatpush1.msra.mxu0 0.0
    %1522 = vmatprep.subr.mxu0 0.0
    %1523 = vmatpush1.msra.mxu0 0.0
    %1524 = vmatprep.subr.mxu0 0.0
    %1525 = vmatpush1.msra.mxu0 0.0
    %1526 = vmatprep.subr.mxu0 0.0
    %1527 = vmatpush1.msra.mxu0 0.0
    %1528 = vmatprep.subr.mxu0 0.0
    %1529 = vmatpush1.msra.mxu0 0.0
    %1530 = vmatprep.subr.mxu0 0.0
    %1531 = vmatpush1.msra.mxu0 0.0
    %1532 = vmatprep.subr.mxu0 0.0
    %1533 = vmatpush1.msra.mxu0 0.0
    %1534 = vmatprep.subr.mxu0 0.0
    %1535 = vmatpush1.msra.mxu0 0.0
    %1536 = vmatprep.subr.mxu0 0.0
    %1537 = vmatpush1.msra.mxu0 0.0
    %1538 = vmatprep.subr.mxu0 0.0
    %1539 = vmatpush1.msra.mxu0 0.0
    %1540 = vmatprep.subr.mxu0 0.0
    %1541 = vmatpush1.msra.mxu0 0.0
    %1542 = vmatprep.subr.mxu0 0.0
    %1543 = vmatpush1.msra.mxu0 0.0
    %1544 = vmatprep.mubr.f32.mxu0 0.0
    %1545 = vmatmul.mubr.f32.gmra.mrb[0].mxu0 %v1478
    %v1546 = vpop.f32.mrb[0].mxu0
    %v1547 = vadd.f32 0.0, %v1546
    %v1548 = vpop.f32.mrb[0].mxu0
    %1549 = vdwg.mxu0
    %v1551 = vrot.slane %v1547, 4
    %v1553 = vadd.f32 %v1473, %v1551
    %s1554 = scalar_lea.vmem [#allocation16], 4
    %vm1555 = vcmask 259076
    %1556 = vst.msk [vmem:[%s1554 - $0x4] sm:$0x30] %vm1555, %v1553
    %1557 = vmatprep.subr.mxu0 0.0
    %1558 = vmatpush1.msra.mxu0 %v160
    %1559 = vmatprep.subr.mxu0 0.0
    %1560 = vmatpush1.msra.mxu0 %v161
    %1561 = vmatprep.subr.mxu0 0.0
    %1562 = vmatpush1.msra.mxu0 %v162
    %1563 = vmatprep.subr.mxu0 0.0
    %1564 = vmatpush1.msra.mxu0 %v163
    %1565 = vmatprep.subr.mxu0 0.0
    %1566 = vmatpush1.msra.mxu0 0.0
    %1567 = vmatprep.subr.mxu0 0.0
    %1568 = vmatpush1.msra.mxu0 0.0
    %1569 = vmatprep.subr.mxu0 0.0
    %1570 = vmatpush1.msra.mxu0 0.0
    %1571 = vmatprep.subr.mxu0 0.0
    %1572 = vmatpush1.msra.mxu0 0.0
    %1573 = vmatprep.subr.mxu0 0.0
    %1574 = vmatpush1.msra.mxu0 0.0
    %1575 = vmatprep.subr.mxu0 0.0
    %1576 = vmatpush1.msra.mxu0 0.0
    %1577 = vmatprep.subr.mxu0 0.0
    %1578 = vmatpush1.msra.mxu0 0.0
    %1579 = vmatprep.subr.mxu0 0.0
    %1580 = vmatpush1.msra.mxu0 0.0
    %1581 = vmatprep.subr.mxu0 0.0
    %1582 = vmatpush1.msra.mxu0 0.0
    %1583 = vmatprep.subr.mxu0 0.0
    %1584 = vmatpush1.msra.mxu0 0.0
    %1585 = vmatprep.subr.mxu0 0.0
    %1586 = vmatpush1.msra.mxu0 0.0
    %1587 = vmatprep.subr.mxu0 0.0
    %1588 = vmatpush1.msra.mxu0 0.0
    %1589 = vmatprep.subr.mxu0 0.0
    %1590 = vmatpush1.msra.mxu0 0.0
    %1591 = vmatprep.subr.mxu0 0.0
    %1592 = vmatpush1.msra.mxu0 0.0
    %1593 = vmatprep.subr.mxu0 0.0
    %1594 = vmatpush1.msra.mxu0 0.0
    %1595 = vmatprep.subr.mxu0 0.0
    %1596 = vmatpush1.msra.mxu0 0.0
    %1597 = vmatprep.subr.mxu0 0.0
    %1598 = vmatpush1.msra.mxu0 0.0
    %1599 = vmatprep.subr.mxu0 0.0
    %1600 = vmatpush1.msra.mxu0 0.0
    %1601 = vmatprep.subr.mxu0 0.0
    %1602 = vmatpush1.msra.mxu0 0.0
    %1603 = vmatprep.subr.mxu0 0.0
    %1604 = vmatpush1.msra.mxu0 0.0
    %1605 = vmatprep.subr.mxu0 0.0
    %1606 = vmatpush1.msra.mxu0 0.0
    %1607 = vmatprep.subr.mxu0 0.0
    %1608 = vmatpush1.msra.mxu0 0.0
    %1609 = vmatprep.subr.mxu0 0.0
    %1610 = vmatpush1.msra.mxu0 0.0
    %1611 = vmatprep.subr.mxu0 0.0
    %1612 = vmatpush1.msra.mxu0 0.0
    %1613 = vmatprep.subr.mxu0 0.0
    %1614 = vmatpush1.msra.mxu0 0.0
    %1615 = vmatprep.subr.mxu0 0.0
    %1616 = vmatpush1.msra.mxu0 0.0
    %1617 = vmatprep.subr.mxu0 0.0
    %1618 = vmatpush1.msra.mxu0 0.0
    %1619 = vmatprep.subr.mxu0 0.0
    %1620 = vmatpush1.msra.mxu0 0.0
    %1621 = vmatprep.mubr.f32.mxu0 0.0
    %1622 = vmatmul.mubr.f32.gmra.mrb[0].mxu0 %v1478
    %v1623 = vpop.f32.mrb[0].mxu0
    %v1624 = vadd.f32 0.0, %v1623
    %v1625 = vpop.f32.mrb[0].mxu0
    %1626 = vdwg.mxu0
    %v1629 = vunpack.c.l.s4 1966171168
    %v1630 = vunpack.c.0.s8 %v1629
    %v1631 = vlaneseq
    %v1632 = vshrl.u32 %v1631, 7
    %v1633 = vsub.s32 %v1630, %v1632
    %v1634 = vrot.slane %v1624, %v1633
    %v1635 = vcombine.high %v1634, %v1634
    %v1637 = vunpack.c.l.s4 1966171168
    %v1638 = vunpack.c.0.s8 %v1637
    %v1639 = vlaneseq
    %v1640 = vshrl.u32 %v1639, 7
    %v1641 = vsub.s32 %v1638, %v1640
    %v1642 = vrot.slane %v1634, %v1641
    %v1644 = vunpack.c.l.s4 1966171168
    %v1645 = vunpack.c.0.s8 %v1644
    %v1646 = vlaneseq
    %v1647 = vshrl.u32 %v1646, 7
    %v1648 = vsub.s32 %v1645, %v1647
    %v1649 = vrot.slane %v1635, %v1648
    %v1650 = vlaneseq
    %v1651 = vshrl.u32 %v1650, 7
    %v1652 = vsub.s32 0, %v1651
    %v1653 = vrot.slane %v1642, %v1652
    %v1654 = vlaneseq
    %v1655 = vshrl.u32 %v1654, 7
    %v1656 = vsub.s32 0, %v1655
    %v1657 = vrot.slane %v1649, %v1656
    %v1660 = vadd.f32 %v157, %v1653
    %v1661 = vadd.f32 %v158, %v1657
    %v1662 = vtanh.pop %v1660
    %v1663 = vtanh.pop %v1661
    %v1664 = vmul.f32 %v1662, %v466
    %v1665 = vmul.f32 %v1663, %v466
    %v1666 = vsel %vm351, %v1664, 0.0
    %1667 = vadd.xlane.f32.xlu0 %v1666
    %v1668 = vpop.xlane.xlu0 %1667
    %v1669 = vsel %vm351, %v1665, 0.0
    %1670 = vadd.xlane.f32.xlu0 %v1669
    %v1671 = vpop.xlane.xlu0 %1670
    %v1674 = vlaneseq
    %v1675 = vshrl.u32 %v1674, 7
    %v1676 = vsub.s32 %v479, %v1675
    %v1677 = vrot.slane %v1668, %v1676
    %v1678 = vlaneseq
    %v1679 = vshrl.u32 %v1678, 7
    %v1680 = vsub.s32 %v479, %v1679
    %v1681 = vrot.slane %v1671, %v1680
    %v1682 = vsel %vm488, %v1681, %v1677
    %v1684 = vsel %vm491, %v1682, -inf
    %1685 = vmax.xlane.f32.xlu0 %v1684
    %v1686 = vpop.xlane.xlu0 %1685
    %v1688 = vlaneseq
    %v1689 = vshrl.u32 %v1688, 7
    %v1690 = vsub.s32 0, %v1689
    %v1691 = vrot.slane %v1686, %v1690
    %v1692 = vlaneseq
    %v1693 = vshrl.u32 %v1692, 7
    %v1694 = vsub.s32 1, %v1693
    %v1695 = vrot.slane %v1686, %v1694
    %v1698 = vsub.f32 %v1668, %v1691
    %v1699 = vsub.f32 %v1671, %v1695
    %v1700 = vmul.f32 %v1698, 1.442695
    %v1701 = vpow.pop %v1700
    %v1702 = vmul.f32 %v1699, 1.442695
    %v1703 = vpow.pop %v1702
    %1706 = vset.pattern.permute.xlu0 0
    %1707 = vperm.xlu0 %1706, %v1701
    %v1708 = vpop.permute.xlu0 %1707
    %1709 = vset.pattern.permute.xlu0 0
    %1710 = vperm.xlu0 %1709, %v1703
    %v1711 = vpop.permute.xlu0 %1710
    %v1712 = vlaneseq
    %v1713 = vshrl.u32 %v1712, 7
    %v1714 = vsub.s32 %v479, %v1713
    %v1715 = vrot.slane %v1708, %v1714
    %v1716 = vlaneseq
    %v1717 = vshrl.u32 %v1716, 7
    %v1718 = vsub.s32 %v479, %v1717
    %v1719 = vrot.slane %v1711, %v1718
    %v1720 = vsel %vm488, %v1719, %v1715
    %v1722 = vsel %vm491, %v1720, 0.0
    %1723 = vadd.xlane.f32.xlu0 %v1722
    %v1724 = vpop.xlane.xlu0 %1723
    %v1725 = vrcp.pop %v1724
    %v1727 = vlaneseq
    %v1728 = vshrl.u32 %v1727, 7
    %v1729 = vsub.s32 0, %v1728
    %v1730 = vrot.slane %v1725, %v1729
    %v1731 = vlaneseq
    %v1732 = vshrl.u32 %v1731, 7
    %v1733 = vsub.s32 1, %v1732
    %v1734 = vrot.slane %v1725, %v1733
    %v1737 = vmul.f32 %v1701, %v1730
    %v1738 = vmul.f32 %v1703, %v1734
    %1740 = vset.pattern.permute.xlu0 0
    %1741 = vperm.xlu0 %1740, %v1737
    %v1742 = vpop.permute.xlu0 %1741
    %1745 = vset.pattern.permute.xlu0 0
    %1746 = vperm.xlu0 %1745, %v1738
    %v1747 = vpop.permute.xlu0 %1746
    %v1749 = vmul.f32 %v1742, %v155
    %v1750 = vmul.f32 %v1747, %v156
    %v1751 = vsel %vm351, %v1749, 0.0
    %v1752 = vrot.slane %v1751, 4
    %v1753 = vadd.f32 %v1751, %v1752
    %v1754 = vrot.slane %v1753, 2
    %v1755 = vadd.f32 %v1753, %v1754
    %v1756 = vrot.slane %v1755, 1
    %v1757 = vadd.f32 %v1755, %v1756
    %v1758 = vsel %vm351, %v1750, 0.0
    %v1759 = vrot.slane %v1758, 4
    %v1760 = vadd.f32 %v1758, %v1759
    %v1761 = vrot.slane %v1760, 2
    %v1762 = vadd.f32 %v1760, %v1761
    %v1763 = vrot.slane %v1762, 1
    %v1764 = vadd.f32 %v1762, %v1763
    %v1767 = vsel %vm488, %v1764, %v1757
    %v1768 = vsel %vm351, %v1767, 0
    %1770 = vmatprep.subr.mxu0 0.0
    %1771 = vmatpush1.msra.mxu0 %v164
    %1772 = vmatprep.subr.mxu0 0.0
    %1773 = vmatpush1.msra.mxu0 %v165
    %1774 = vmatprep.subr.mxu0 0.0
    %1775 = vmatpush1.msra.mxu0 %v166
    %1776 = vmatprep.subr.mxu0 0.0
    %1777 = vmatpush1.msra.mxu0 %v167
    %1778 = vmatprep.subr.mxu0 0.0
    %1779 = vmatpush1.msra.mxu0 0.0
    %1780 = vmatprep.subr.mxu0 0.0
    %1781 = vmatpush1.msra.mxu0 0.0
    %1782 = vmatprep.subr.mxu0 0.0
    %1783 = vmatpush1.msra.mxu0 0.0
    %1784 = vmatprep.subr.mxu0 0.0
    %1785 = vmatpush1.msra.mxu0 0.0
    %1786 = vmatprep.subr.mxu0 0.0
    %1787 = vmatpush1.msra.mxu0 0.0
    %1788 = vmatprep.subr.mxu0 0.0
    %1789 = vmatpush1.msra.mxu0 0.0
    %1790 = vmatprep.subr.mxu0 0.0
    %1791 = vmatpush1.msra.mxu0 0.0
    %1792 = vmatprep.subr.mxu0 0.0
    %1793 = vmatpush1.msra.mxu0 0.0
    %1794 = vmatprep.subr.mxu0 0.0
    %1795 = vmatpush1.msra.mxu0 0.0
    %1796 = vmatprep.subr.mxu0 0.0
    %1797 = vmatpush1.msra.mxu0 0.0
    %1798 = vmatprep.subr.mxu0 0.0
    %1799 = vmatpush1.msra.mxu0 0.0
    %1800 = vmatprep.subr.mxu0 0.0
    %1801 = vmatpush1.msra.mxu0 0.0
    %1802 = vmatprep.subr.mxu0 0.0
    %1803 = vmatpush1.msra.mxu0 0.0
    %1804 = vmatprep.subr.mxu0 0.0
    %1805 = vmatpush1.msra.mxu0 0.0
    %1806 = vmatprep.subr.mxu0 0.0
    %1807 = vmatpush1.msra.mxu0 0.0
    %1808 = vmatprep.subr.mxu0 0.0
    %1809 = vmatpush1.msra.mxu0 0.0
    %1810 = vmatprep.subr.mxu0 0.0
    %1811 = vmatpush1.msra.mxu0 0.0
    %1812 = vmatprep.subr.mxu0 0.0
    %1813 = vmatpush1.msra.mxu0 0.0
    %1814 = vmatprep.subr.mxu0 0.0
    %1815 = vmatpush1.msra.mxu0 0.0
    %1816 = vmatprep.subr.mxu0 0.0
    %1817 = vmatpush1.msra.mxu0 0.0
    %1818 = vmatprep.subr.mxu0 0.0
    %1819 = vmatpush1.msra.mxu0 0.0
    %1820 = vmatprep.subr.mxu0 0.0
    %1821 = vmatpush1.msra.mxu0 0.0
    %1822 = vmatprep.subr.mxu0 0.0
    %1823 = vmatpush1.msra.mxu0 0.0
    %1824 = vmatprep.subr.mxu0 0.0
    %1825 = vmatpush1.msra.mxu0 0.0
    %1826 = vmatprep.subr.mxu0 0.0
    %1827 = vmatpush1.msra.mxu0 0.0
    %1828 = vmatprep.subr.mxu0 0.0
    %1829 = vmatpush1.msra.mxu0 0.0
    %1830 = vmatprep.subr.mxu0 0.0
    %1831 = vmatpush1.msra.mxu0 0.0
    %1832 = vmatprep.subr.mxu0 0.0
    %1833 = vmatpush1.msra.mxu0 0.0
    %1834 = vmatprep.mubr.f32.mxu0 0.0
    %1835 = vmatmul.mubr.f32.gmra.mrb[0].mxu0 %v1768
    %v1836 = vpop.f32.mrb[0].mxu0
    %v1837 = vadd.f32 0.0, %v1836
    %v1838 = vpop.f32.mrb[0].mxu0
    %1839 = vdwg.mxu0
    %v1840 = vrot.slane %v1624, 2
    %1841 = vrot.lane.b32.xlu0 %v1840, 96
    %v1842 = vpop.permute.xlu0 %1841
    %v1844 = vadd.f32 %v258, %v1842
    %v1846 = vrot.slane %v1837, 2
    %v1848 = vadd.f32 %v1844, %v1846
    %v1849 = vxor.u32 %v1848, 2147483648
    %v1850 = vmul.f32 %v1849, 1.442695
    %v1851 = vpow.pop %v1850
    %v1852 = vadd.f32 %v1851, 1.0
    %v1853 = vrcp.pop %v1852
    %v1854 = vmul.f32 1.0, %v1853
    %v1855 = vmul.f32 %v1854, %v663
    %1857 = vrot.lane.b32.xlu0 %v1855, 64
    %v1858 = vpop.permute.xlu0 %1857
    %v1860 = vadd.f32 %v1848, %v1858
    %v1861 = vtanh.pop %v1860
    %v1862 = vsub.f32 1.0, %v1854
    %1864 = vrot.lane.b32.xlu0 %v1861, 96
    %v1865 = vpop.permute.xlu0 %1864
    %v1867 = vmul.f32 %v1862, %v1865
    %1868 = vrot.lane.b32.xlu0 %v1846, 32
    %v1869 = vpop.permute.xlu0 %1868
    %v1871 = vadd.f32 %v342, %v1869
    %v1873 = vrot.slane %v1867, 6
    %1874 = vrot.lane.b32.xlu0 %v1873, 96
    %v1875 = vpop.permute.xlu0 %1874
    %v1876 = vsel %vm351, %v1875, 0
    %1878 = vmatprep.subr.mxu0 0.0
    %1879 = vmatpush1.msra.mxu0 %v169
    %1880 = vmatprep.subr.mxu0 0.0
    %1881 = vmatpush1.msra.mxu0 %v170
    %1882 = vmatprep.subr.mxu0 0.0
    %1883 = vmatpush1.msra.mxu0 %v171
    %1884 = vmatprep.subr.mxu0 0.0
    %1885 = vmatpush1.msra.mxu0 %v172
    %1886 = vmatprep.subr.mxu0 0.0
    %1887 = vmatpush1.msra.mxu0 0.0
    %1888 = vmatprep.subr.mxu0 0.0
    %1889 = vmatpush1.msra.mxu0 0.0
    %1890 = vmatprep.subr.mxu0 0.0
    %1891 = vmatpush1.msra.mxu0 0.0
    %1892 = vmatprep.subr.mxu0 0.0
    %1893 = vmatpush1.msra.mxu0 0.0
    %1894 = vmatprep.subr.mxu0 0.0
    %1895 = vmatpush1.msra.mxu0 0.0
    %1896 = vmatprep.subr.mxu0 0.0
    %1897 = vmatpush1.msra.mxu0 0.0
    %1898 = vmatprep.subr.mxu0 0.0
    %1899 = vmatpush1.msra.mxu0 0.0
    %1900 = vmatprep.subr.mxu0 0.0
    %1901 = vmatpush1.msra.mxu0 0.0
    %1902 = vmatprep.subr.mxu0 0.0
    %1903 = vmatpush1.msra.mxu0 0.0
    %1904 = vmatprep.subr.mxu0 0.0
    %1905 = vmatpush1.msra.mxu0 0.0
    %1906 = vmatprep.subr.mxu0 0.0
    %1907 = vmatpush1.msra.mxu0 0.0
    %1908 = vmatprep.subr.mxu0 0.0
    %1909 = vmatpush1.msra.mxu0 0.0
    %1910 = vmatprep.subr.mxu0 0.0
    %1911 = vmatpush1.msra.mxu0 0.0
    %1912 = vmatprep.subr.mxu0 0.0
    %1913 = vmatpush1.msra.mxu0 0.0
    %1914 = vmatprep.subr.mxu0 0.0
    %1915 = vmatpush1.msra.mxu0 0.0
    %1916 = vmatprep.subr.mxu0 0.0
    %1917 = vmatpush1.msra.mxu0 0.0
    %1918 = vmatprep.subr.mxu0 0.0
    %1919 = vmatpush1.msra.mxu0 0.0
    %1920 = vmatprep.subr.mxu0 0.0
    %1921 = vmatpush1.msra.mxu0 0.0
    %1922 = vmatprep.subr.mxu0 0.0
    %1923 = vmatpush1.msra.mxu0 0.0
    %1924 = vmatprep.subr.mxu0 0.0
    %1925 = vmatpush1.msra.mxu0 0.0
    %1926 = vmatprep.subr.mxu0 0.0
    %1927 = vmatpush1.msra.mxu0 0.0
    %1928 = vmatprep.subr.mxu0 0.0
    %1929 = vmatpush1.msra.mxu0 0.0
    %1930 = vmatprep.subr.mxu0 0.0
    %1931 = vmatpush1.msra.mxu0 0.0
    %1932 = vmatprep.subr.mxu0 0.0
    %1933 = vmatpush1.msra.mxu0 0.0
    %1934 = vmatprep.subr.mxu0 0.0
    %1935 = vmatpush1.msra.mxu0 0.0
    %1936 = vmatprep.subr.mxu0 0.0
    %1937 = vmatpush1.msra.mxu0 0.0
    %1938 = vmatprep.subr.mxu0 0.0
    %1939 = vmatpush1.msra.mxu0 0.0
    %1940 = vmatprep.subr.mxu0 0.0
    %1941 = vmatpush1.msra.mxu0 0.0
    %1942 = vmatprep.mubr.f32.mxu0 0.0
    %1943 = vmatmul.mubr.f32.gmra.mrb[0].mxu0 %v1876
    %v1944 = vpop.f32.mrb[0].mxu0
    %v1945 = vadd.f32 0.0, %v1944
    %v1946 = vpop.f32.mrb[0].mxu0
    %1947 = vdwg.mxu0
    %v1949 = vrot.slane %v1945, 2
    %v1951 = vadd.f32 %v1871, %v1949
    %s1952 = scalar_lea.vmem [#allocation16], 6
    %vm1953 = vcmask 261126
    %1954 = vst.msk [vmem:[%s1952 - $0x6] sm:$0xc0] %vm1953, %v1951
    %1955 = vmatprep.subr.mxu0 0.0
    %1956 = vmatpush1.msra.mxu0 %v160
    %1957 = vmatprep.subr.mxu0 0.0
    %1958 = vmatpush1.msra.mxu0 %v161
    %1959 = vmatprep.subr.mxu0 0.0
    %1960 = vmatpush1.msra.mxu0 %v162
    %1961 = vmatprep.subr.mxu0 0.0
    %1962 = vmatpush1.msra.mxu0 %v163
    %1963 = vmatprep.subr.mxu0 0.0
    %1964 = vmatpush1.msra.mxu0 0.0
    %1965 = vmatprep.subr.mxu0 0.0
    %1966 = vmatpush1.msra.mxu0 0.0
    %1967 = vmatprep.subr.mxu0 0.0
    %1968 = vmatpush1.msra.mxu0 0.0
    %1969 = vmatprep.subr.mxu0 0.0
    %1970 = vmatpush1.msra.mxu0 0.0
    %1971 = vmatprep.subr.mxu0 0.0
    %1972 = vmatpush1.msra.mxu0 0.0
    %1973 = vmatprep.subr.mxu0 0.0
    %1974 = vmatpush1.msra.mxu0 0.0
    %1975 = vmatprep.subr.mxu0 0.0
    %1976 = vmatpush1.msra.mxu0 0.0
    %1977 = vmatprep.subr.mxu0 0.0
    %1978 = vmatpush1.msra.mxu0 0.0
    %1979 = vmatprep.subr.mxu0 0.0
    %1980 = vmatpush1.msra.mxu0 0.0
    %1981 = vmatprep.subr.mxu0 0.0
    %1982 = vmatpush1.msra.mxu0 0.0
    %1983 = vmatprep.subr.mxu0 0.0
    %1984 = vmatpush1.msra.mxu0 0.0
    %1985 = vmatprep.subr.mxu0 0.0
    %1986 = vmatpush1.msra.mxu0 0.0
    %1987 = vmatprep.subr.mxu0 0.0
    %1988 = vmatpush1.msra.mxu0 0.0
    %1989 = vmatprep.subr.mxu0 0.0
    %1990 = vmatpush1.msra.mxu0 0.0
    %1991 = vmatprep.subr.mxu0 0.0
    %1992 = vmatpush1.msra.mxu0 0.0
    %1993 = vmatprep.subr.mxu0 0.0
    %1994 = vmatpush1.msra.mxu0 0.0
    %1995 = vmatprep.subr.mxu0 0.0
    %1996 = vmatpush1.msra.mxu0 0.0
    %1997 = vmatprep.subr.mxu0 0.0
    %1998 = vmatpush1.msra.mxu0 0.0
    %1999 = vmatprep.subr.mxu0 0.0
    %2000 = vmatpush1.msra.mxu0 0.0
    %2001 = vmatprep.subr.mxu0 0.0
    %2002 = vmatpush1.msra.mxu0 0.0
    %2003 = vmatprep.subr.mxu0 0.0
    %2004 = vmatpush1.msra.mxu0 0.0
    %2005 = vmatprep.subr.mxu0 0.0
    %2006 = vmatpush1.msra.mxu0 0.0
    %2007 = vmatprep.subr.mxu0 0.0
    %2008 = vmatpush1.msra.mxu0 0.0
    %2009 = vmatprep.subr.mxu0 0.0
    %2010 = vmatpush1.msra.mxu0 0.0
    %2011 = vmatprep.subr.mxu0 0.0
    %2012 = vmatpush1.msra.mxu0 0.0
    %2013 = vmatprep.subr.mxu0 0.0
    %2014 = vmatpush1.msra.mxu0 0.0
    %2015 = vmatprep.subr.mxu0 0.0
    %2016 = vmatpush1.msra.mxu0 0.0
    %2017 = vmatprep.subr.mxu0 0.0
    %2018 = vmatpush1.msra.mxu0 0.0
    %2019 = vmatprep.mubr.f32.mxu0 0.0
    %2020 = vmatmul.mubr.f32.gmra.mrb[0].mxu0 %v1876
    %v2021 = vpop.f32.mrb[0].mxu0
    %v2022 = vadd.f32 0.0, %v2021
    %v2023 = vpop.f32.mrb[0].mxu0
    %2024 = vdwg.mxu0
    %v2027 = vunpack.c.l.s4 1966171168
    %v2028 = vunpack.c.0.s8 %v2027
    %v2029 = vlaneseq
    %v2030 = vshrl.u32 %v2029, 7
    %v2031 = vsub.s32 %v2028, %v2030
    %v2032 = vrot.slane %v2022, %v2031
    %v2033 = vcombine.high %v2032, %v2032
    %v2035 = vunpack.c.l.s4 1966171168
    %v2036 = vunpack.c.0.s8 %v2035
    %v2037 = vlaneseq
    %v2038 = vshrl.u32 %v2037, 7
    %v2039 = vsub.s32 %v2036, %v2038
    %v2040 = vrot.slane %v2032, %v2039
    %v2042 = vunpack.c.l.s4 1966171168
    %v2043 = vunpack.c.0.s8 %v2042
    %v2044 = vlaneseq
    %v2045 = vshrl.u32 %v2044, 7
    %v2046 = vsub.s32 %v2043, %v2045
    %v2047 = vrot.slane %v2033, %v2046
    %v2048 = vlaneseq
    %v2049 = vshrl.u32 %v2048, 7
    %v2050 = vsub.s32 0, %v2049
    %v2051 = vrot.slane %v2040, %v2050
    %v2052 = vlaneseq
    %v2053 = vshrl.u32 %v2052, 7
    %v2054 = vsub.s32 0, %v2053
    %v2055 = vrot.slane %v2047, %v2054
    %v2058 = vadd.f32 %v157, %v2051
    %v2059 = vadd.f32 %v158, %v2055
    %v2060 = vtanh.pop %v2058
    %v2061 = vtanh.pop %v2059
    %v2062 = vmul.f32 %v2060, %v466
    %v2063 = vmul.f32 %v2061, %v466
    %v2064 = vsel %vm351, %v2062, 0.0
    %2065 = vadd.xlane.f32.xlu0 %v2064
    %v2066 = vpop.xlane.xlu0 %2065
    %v2067 = vsel %vm351, %v2063, 0.0
    %2068 = vadd.xlane.f32.xlu0 %v2067
    %v2069 = vpop.xlane.xlu0 %2068
    %v2072 = vlaneseq
    %v2073 = vshrl.u32 %v2072, 7
    %v2074 = vsub.s32 %v479, %v2073
    %v2075 = vrot.slane %v2066, %v2074
    %v2076 = vlaneseq
    %v2077 = vshrl.u32 %v2076, 7
    %v2078 = vsub.s32 %v479, %v2077
    %v2079 = vrot.slane %v2069, %v2078
    %v2080 = vsel %vm488, %v2079, %v2075
    %v2082 = vsel %vm491, %v2080, -inf
    %2083 = vmax.xlane.f32.xlu0 %v2082
    %v2084 = vpop.xlane.xlu0 %2083
    %v2086 = vlaneseq
    %v2087 = vshrl.u32 %v2086, 7
    %v2088 = vsub.s32 0, %v2087
    %v2089 = vrot.slane %v2084, %v2088
    %v2090 = vlaneseq
    %v2091 = vshrl.u32 %v2090, 7
    %v2092 = vsub.s32 1, %v2091
    %v2093 = vrot.slane %v2084, %v2092
    %v2096 = vsub.f32 %v2066, %v2089
    %v2097 = vsub.f32 %v2069, %v2093
    %v2098 = vmul.f32 %v2096, 1.442695
    %v2099 = vpow.pop %v2098
    %v2100 = vmul.f32 %v2097, 1.442695
    %v2101 = vpow.pop %v2100
    %2104 = vset.pattern.permute.xlu0 0
    %2105 = vperm.xlu0 %2104, %v2099
    %v2106 = vpop.permute.xlu0 %2105
    %2107 = vset.pattern.permute.xlu0 0
    %2108 = vperm.xlu0 %2107, %v2101
    %v2109 = vpop.permute.xlu0 %2108
    %v2110 = vlaneseq
    %v2111 = vshrl.u32 %v2110, 7
    %v2112 = vsub.s32 %v479, %v2111
    %v2113 = vrot.slane %v2106, %v2112
    %v2114 = vlaneseq
    %v2115 = vshrl.u32 %v2114, 7
    %v2116 = vsub.s32 %v479, %v2115
    %v2117 = vrot.slane %v2109, %v2116
    %v2118 = vsel %vm488, %v2117, %v2113
    %v2120 = vsel %vm491, %v2118, 0.0
    %2121 = vadd.xlane.f32.xlu0 %v2120
    %v2122 = vpop.xlane.xlu0 %2121
    %v2123 = vrcp.pop %v2122
    %v2125 = vlaneseq
    %v2126 = vshrl.u32 %v2125, 7
    %v2127 = vsub.s32 0, %v2126
    %v2128 = vrot.slane %v2123, %v2127
    %v2129 = vlaneseq
    %v2130 = vshrl.u32 %v2129, 7
    %v2131 = vsub.s32 1, %v2130
    %v2132 = vrot.slane %v2123, %v2131
    %v2135 = vmul.f32 %v2099, %v2128
    %v2136 = vmul.f32 %v2101, %v2132
    %2138 = vset.pattern.permute.xlu0 0
    %2139 = vperm.xlu0 %2138, %v2135
    %v2140 = vpop.permute.xlu0 %2139
    %2143 = vset.pattern.permute.xlu0 0
    %2144 = vperm.xlu0 %2143, %v2136
    %v2145 = vpop.permute.xlu0 %2144
    %v2147 = vmul.f32 %v2140, %v155
    %v2148 = vmul.f32 %v2145, %v156
    %v2149 = vsel %vm351, %v2147, 0.0
    %v2150 = vrot.slane %v2149, 4
    %v2151 = vadd.f32 %v2149, %v2150
    %v2152 = vrot.slane %v2151, 2
    %v2153 = vadd.f32 %v2151, %v2152
    %v2154 = vrot.slane %v2153, 1
    %v2155 = vadd.f32 %v2153, %v2154
    %v2156 = vsel %vm351, %v2148, 0.0
    %v2157 = vrot.slane %v2156, 4
    %v2158 = vadd.f32 %v2156, %v2157
    %v2159 = vrot.slane %v2158, 2
    %v2160 = vadd.f32 %v2158, %v2159
    %v2161 = vrot.slane %v2160, 1
    %v2162 = vadd.f32 %v2160, %v2161
    %v2165 = vsel %vm488, %v2162, %v2155
    %v2166 = vsel %vm351, %v2165, 0
    %2168 = vmatprep.subr.mxu0 0.0
    %2169 = vmatpush1.msra.mxu0 %v164
    %2170 = vmatprep.subr.mxu0 0.0
    %2171 = vmatpush1.msra.mxu0 %v165
    %2172 = vmatprep.subr.mxu0 0.0
    %2173 = vmatpush1.msra.mxu0 %v166
    %2174 = vmatprep.subr.mxu0 0.0
    %2175 = vmatpush1.msra.mxu0 %v167
    %2176 = vmatprep.subr.mxu0 0.0
    %2177 = vmatpush1.msra.mxu0 0.0
    %2178 = vmatprep.subr.mxu0 0.0
    %2179 = vmatpush1.msra.mxu0 0.0
    %2180 = vmatprep.subr.mxu0 0.0
    %2181 = vmatpush1.msra.mxu0 0.0
    %2182 = vmatprep.subr.mxu0 0.0
    %2183 = vmatpush1.msra.mxu0 0.0
    %2184 = vmatprep.subr.mxu0 0.0
    %2185 = vmatpush1.msra.mxu0 0.0
    %2186 = vmatprep.subr.mxu0 0.0
    %2187 = vmatpush1.msra.mxu0 0.0
    %2188 = vmatprep.subr.mxu0 0.0
    %2189 = vmatpush1.msra.mxu0 0.0
    %2190 = vmatprep.subr.mxu0 0.0
    %2191 = vmatpush1.msra.mxu0 0.0
    %2192 = vmatprep.subr.mxu0 0.0
    %2193 = vmatpush1.msra.mxu0 0.0
    %2194 = vmatprep.subr.mxu0 0.0
    %2195 = vmatpush1.msra.mxu0 0.0
    %2196 = vmatprep.subr.mxu0 0.0
    %2197 = vmatpush1.msra.mxu0 0.0
    %2198 = vmatprep.subr.mxu0 0.0
    %2199 = vmatpush1.msra.mxu0 0.0
    %2200 = vmatprep.subr.mxu0 0.0
    %2201 = vmatpush1.msra.mxu0 0.0
    %2202 = vmatprep.subr.mxu0 0.0
    %2203 = vmatpush1.msra.mxu0 0.0
    %2204 = vmatprep.subr.mxu0 0.0
    %2205 = vmatpush1.msra.mxu0 0.0
    %2206 = vmatprep.subr.mxu0 0.0
    %2207 = vmatpush1.msra.mxu0 0.0
    %2208 = vmatprep.subr.mxu0 0.0
    %2209 = vmatpush1.msra.mxu0 0.0
    %2210 = vmatprep.subr.mxu0 0.0
    %2211 = vmatpush1.msra.mxu0 0.0
    %2212 = vmatprep.subr.mxu0 0.0
    %2213 = vmatpush1.msra.mxu0 0.0
    %2214 = vmatprep.subr.mxu0 0.0
    %2215 = vmatpush1.msra.mxu0 0.0
    %2216 = vmatprep.subr.mxu0 0.0
    %2217 = vmatpush1.msra.mxu0 0.0
    %2218 = vmatprep.subr.mxu0 0.0
    %2219 = vmatpush1.msra.mxu0 0.0
    %2220 = vmatprep.subr.mxu0 0.0
    %2221 = vmatpush1.msra.mxu0 0.0
    %2222 = vmatprep.subr.mxu0 0.0
    %2223 = vmatpush1.msra.mxu0 0.0
    %2224 = vmatprep.subr.mxu0 0.0
    %2225 = vmatpush1.msra.mxu0 0.0
    %2226 = vmatprep.subr.mxu0 0.0
    %2227 = vmatpush1.msra.mxu0 0.0
    %2228 = vmatprep.subr.mxu0 0.0
    %2229 = vmatpush1.msra.mxu0 0.0
    %2230 = vmatprep.subr.mxu0 0.0
    %2231 = vmatpush1.msra.mxu0 0.0
    %2232 = vmatprep.mubr.f32.mxu0 0.0
    %2233 = vmatmul.mubr.f32.gmra.mrb[0].mxu0 %v2166
    %v2234 = vpop.f32.mrb[0].mxu0
    %v2235 = vadd.f32 0.0, %v2234
    %v2236 = vpop.f32.mrb[0].mxu0
    %2237 = vdwg.mxu0
    %2238 = vrot.lane.b32.xlu0 %v2022, 96
    %v2239 = vpop.permute.xlu0 %2238
    %v2241 = vadd.f32 %v263, %v2239
    %v2242 = vadd.f32 %v2241, %v2235
    %v2243 = vxor.u32 %v2242, 2147483648
    %v2244 = vmul.f32 %v2243, 1.442695
    %v2245 = vpow.pop %v2244
    %v2246 = vadd.f32 %v2245, 1.0
    %v2247 = vrcp.pop %v2246
    %v2248 = vmul.f32 1.0, %v2247
    %v2249 = vmul.f32 %v2248, %v663
    %2251 = vrot.lane.b32.xlu0 %v2249, 64
    %v2252 = vpop.permute.xlu0 %2251
    %v2254 = vadd.f32 %v2242, %v2252
    %v2255 = vtanh.pop %v2254
    %v2256 = vsub.f32 1.0, %v2248
    %2258 = vrot.lane.b32.xlu0 %v2255, 96
    %v2259 = vpop.permute.xlu0 %2258
    %v2261 = vmul.f32 %v2256, %v2259
    %2263 = vrot.lane.b32.xlu0 %v2235, 32
    %v2264 = vpop.permute.xlu0 %2263
    %v2266 = vadd.f32 %v347, %v2264
    %2268 = vrot.lane.b32.xlu0 %v2261, 96
    %v2269 = vpop.permute.xlu0 %2268
    %v2270 = vsel %vm351, %v2269, 0
    %2272 = vmatprep.subr.mxu0 0.0
    %2273 = vmatpush1.msra.mxu0 %v169
    %2274 = vmatprep.subr.mxu0 0.0
    %2275 = vmatpush1.msra.mxu0 %v170
    %2276 = vmatprep.subr.mxu0 0.0
    %2277 = vmatpush1.msra.mxu0 %v171
    %2278 = vmatprep.subr.mxu0 0.0
    %2279 = vmatpush1.msra.mxu0 %v172
    %2280 = vmatprep.subr.mxu0 0.0
    %2281 = vmatpush1.msra.mxu0 0.0
    %2282 = vmatprep.subr.mxu0 0.0
    %2283 = vmatpush1.msra.mxu0 0.0
    %2284 = vmatprep.subr.mxu0 0.0
    %2285 = vmatpush1.msra.mxu0 0.0
    %2286 = vmatprep.subr.mxu0 0.0
    %2287 = vmatpush1.msra.mxu0 0.0
    %2288 = vmatprep.subr.mxu0 0.0
    %2289 = vmatpush1.msra.mxu0 0.0
    %2290 = vmatprep.subr.mxu0 0.0
    %2291 = vmatpush1.msra.mxu0 0.0
    %2292 = vmatprep.subr.mxu0 0.0
    %2293 = vmatpush1.msra.mxu0 0.0
    %2294 = vmatprep.subr.mxu0 0.0
    %2295 = vmatpush1.msra.mxu0 0.0
    %2296 = vmatprep.subr.mxu0 0.0
    %2297 = vmatpush1.msra.mxu0 0.0
    %2298 = vmatprep.subr.mxu0 0.0
    %2299 = vmatpush1.msra.mxu0 0.0
    %2300 = vmatprep.subr.mxu0 0.0
    %2301 = vmatpush1.msra.mxu0 0.0
    %2302 = vmatprep.subr.mxu0 0.0
    %2303 = vmatpush1.msra.mxu0 0.0
    %2304 = vmatprep.subr.mxu0 0.0
    %2305 = vmatpush1.msra.mxu0 0.0
    %2306 = vmatprep.subr.mxu0 0.0
    %2307 = vmatpush1.msra.mxu0 0.0
    %2308 = vmatprep.subr.mxu0 0.0
    %2309 = vmatpush1.msra.mxu0 0.0
    %2310 = vmatprep.subr.mxu0 0.0
    %2311 = vmatpush1.msra.mxu0 0.0
    %2312 = vmatprep.subr.mxu0 0.0
    %2313 = vmatpush1.msra.mxu0 0.0
    %2314 = vmatprep.subr.mxu0 0.0
    %2315 = vmatpush1.msra.mxu0 0.0
    %2316 = vmatprep.subr.mxu0 0.0
    %2317 = vmatpush1.msra.mxu0 0.0
    %2318 = vmatprep.subr.mxu0 0.0
    %2319 = vmatpush1.msra.mxu0 0.0
    %2320 = vmatprep.subr.mxu0 0.0
    %2321 = vmatpush1.msra.mxu0 0.0
    %2322 = vmatprep.subr.mxu0 0.0
    %2323 = vmatpush1.msra.mxu0 0.0
    %2324 = vmatprep.subr.mxu0 0.0
    %2325 = vmatpush1.msra.mxu0 0.0
    %2326 = vmatprep.subr.mxu0 0.0
    %2327 = vmatpush1.msra.mxu0 0.0
    %2328 = vmatprep.subr.mxu0 0.0
    %2329 = vmatpush1.msra.mxu0 0.0
    %2330 = vmatprep.subr.mxu0 0.0
    %2331 = vmatpush1.msra.mxu0 0.0
    %2332 = vmatprep.subr.mxu0 0.0
    %2333 = vmatpush1.msra.mxu0 0.0
    %2334 = vmatprep.subr.mxu0 0.0
    %2335 = vmatpush1.msra.mxu0 0.0
    %2336 = vmatprep.mubr.f32.mxu0 0.0
    %2337 = vmatmul.mubr.f32.gmra.mrb[0].mxu0 %v2270
    %v2338 = vpop.f32.mrb[0].mxu0
    %v2339 = vadd.f32 0.0, %v2338
    %v2340 = vpop.f32.mrb[0].mxu0
    %2341 = vdwg.mxu0
    %v2342 = vadd.f32 %v2266, %v2339
    %s2343 = scalar_lea.vmem [#allocation16], 8
    %2344 = vst.msk [vmem:[%s2343] sm:$0x3] %vm759, %v2342
    %2345 = vmatprep.subr.mxu0 0.0
    %2346 = vmatpush1.msra.mxu0 %v160
    %2347 = vmatprep.subr.mxu0 0.0
    %2348 = vmatpush1.msra.mxu0 %v161
    %2349 = vmatprep.subr.mxu0 0.0
    %2350 = vmatpush1.msra.mxu0 %v162
    %2351 = vmatprep.subr.mxu0 0.0
    %2352 = vmatpush1.msra.mxu0 %v163
    %2353 = vmatprep.subr.mxu0 0.0
    %2354 = vmatpush1.msra.mxu0 0.0
    %2355 = vmatprep.subr.mxu0 0.0
    %2356 = vmatpush1.msra.mxu0 0.0
    %2357 = vmatprep.subr.mxu0 0.0
    %2358 = vmatpush1.msra.mxu0 0.0
    %2359 = vmatprep.subr.mxu0 0.0
    %2360 = vmatpush1.msra.mxu0 0.0
    %2361 = vmatprep.subr.mxu0 0.0
    %2362 = vmatpush1.msra.mxu0 0.0
    %2363 = vmatprep.subr.mxu0 0.0
    %2364 = vmatpush1.msra.mxu0 0.0
    %2365 = vmatprep.subr.mxu0 0.0
    %2366 = vmatpush1.msra.mxu0 0.0
    %2367 = vmatprep.subr.mxu0 0.0
    %2368 = vmatpush1.msra.mxu0 0.0
    %2369 = vmatprep.subr.mxu0 0.0
    %2370 = vmatpush1.msra.mxu0 0.0
    %2371 = vmatprep.subr.mxu0 0.0
    %2372 = vmatpush1.msra.mxu0 0.0
    %2373 = vmatprep.subr.mxu0 0.0
    %2374 = vmatpush1.msra.mxu0 0.0
    %2375 = vmatprep.subr.mxu0 0.0
    %2376 = vmatpush1.msra.mxu0 0.0
    %2377 = vmatprep.subr.mxu0 0.0
    %2378 = vmatpush1.msra.mxu0 0.0
    %2379 = vmatprep.subr.mxu0 0.0
    %2380 = vmatpush1.msra.mxu0 0.0
    %2381 = vmatprep.subr.mxu0 0.0
    %2382 = vmatpush1.msra.mxu0 0.0
    %2383 = vmatprep.subr.mxu0 0.0
    %2384 = vmatpush1.msra.mxu0 0.0
    %2385 = vmatprep.subr.mxu0 0.0
    %2386 = vmatpush1.msra.mxu0 0.0
    %2387 = vmatprep.subr.mxu0 0.0
    %2388 = vmatpush1.msra.mxu0 0.0
    %2389 = vmatprep.subr.mxu0 0.0
    %2390 = vmatpush1.msra.mxu0 0.0
    %2391 = vmatprep.subr.mxu0 0.0
    %2392 = vmatpush1.msra.mxu0 0.0
    %2393 = vmatprep.subr.mxu0 0.0
    %2394 = vmatpush1.msra.mxu0 0.0
    %2395 = vmatprep.subr.mxu0 0.0
    %2396 = vmatpush1.msra.mxu0 0.0
    %2397 = vmatprep.subr.mxu0 0.0
    %2398 = vmatpush1.msra.mxu0 0.0
    %2399 = vmatprep.subr.mxu0 0.0
    %2400 = vmatpush1.msra.mxu0 0.0
    %2401 = vmatprep.subr.mxu0 0.0
    %2402 = vmatpush1.msra.mxu0 0.0
    %2403 = vmatprep.subr.mxu0 0.0
    %2404 = vmatpush1.msra.mxu0 0.0
    %2405 = vmatprep.subr.mxu0 0.0
    %2406 = vmatpush1.msra.mxu0 0.0
    %2407 = vmatprep.subr.mxu0 0.0
    %2408 = vmatpush1.msra.mxu0 0.0
    %2409 = vmatprep.mubr.f32.mxu0 0.0
    %2410 = vmatmul.mubr.f32.gmra.mrb[0].mxu0 %v2270
    %v2411 = vpop.f32.mrb[0].mxu0
    %v2412 = vadd.f32 0.0, %v2411
    %v2413 = vpop.f32.mrb[0].mxu0
    %2414 = vdwg.mxu0
    %v2417 = vunpack.c.l.s4 1966171168
    %v2418 = vunpack.c.0.s8 %v2417
    %v2419 = vlaneseq
    %v2420 = vshrl.u32 %v2419, 7
    %v2421 = vsub.s32 %v2418, %v2420
    %v2422 = vrot.slane %v2412, %v2421
    %v2423 = vcombine.high %v2422, %v2422
    %v2425 = vunpack.c.l.s4 1966171168
    %v2426 = vunpack.c.0.s8 %v2425
    %v2427 = vlaneseq
    %v2428 = vshrl.u32 %v2427, 7
    %v2429 = vsub.s32 %v2426, %v2428
    %v2430 = vrot.slane %v2422, %v2429
    %v2432 = vunpack.c.l.s4 1966171168
    %v2433 = vunpack.c.0.s8 %v2432
    %v2434 = vlaneseq
    %v2435 = vshrl.u32 %v2434, 7
    %v2436 = vsub.s32 %v2433, %v2435
    %v2437 = vrot.slane %v2423, %v2436
    %v2438 = vlaneseq
    %v2439 = vshrl.u32 %v2438, 7
    %v2440 = vsub.s32 0, %v2439
    %v2441 = vrot.slane %v2430, %v2440
    %v2442 = vlaneseq
    %v2443 = vshrl.u32 %v2442, 7
    %v2444 = vsub.s32 0, %v2443
    %v2445 = vrot.slane %v2437, %v2444
    %v2448 = vadd.f32 %v157, %v2441
    %v2449 = vadd.f32 %v158, %v2445
    %v2450 = vtanh.pop %v2448
    %v2451 = vtanh.pop %v2449
    %v2452 = vmul.f32 %v2450, %v466
    %v2453 = vmul.f32 %v2451, %v466
    %v2454 = vsel %vm351, %v2452, 0.0
    %2455 = vadd.xlane.f32.xlu0 %v2454
    %v2456 = vpop.xlane.xlu0 %2455
    %v2457 = vsel %vm351, %v2453, 0.0
    %2458 = vadd.xlane.f32.xlu0 %v2457
    %v2459 = vpop.xlane.xlu0 %2458
    %v2462 = vlaneseq
    %v2463 = vshrl.u32 %v2462, 7
    %v2464 = vsub.s32 %v479, %v2463
    %v2465 = vrot.slane %v2456, %v2464
    %v2466 = vlaneseq
    %v2467 = vshrl.u32 %v2466, 7
    %v2468 = vsub.s32 %v479, %v2467
    %v2469 = vrot.slane %v2459, %v2468
    %v2470 = vsel %vm488, %v2469, %v2465
    %v2472 = vsel %vm491, %v2470, -inf
    %2473 = vmax.xlane.f32.xlu0 %v2472
    %v2474 = vpop.xlane.xlu0 %2473
    %v2476 = vlaneseq
    %v2477 = vshrl.u32 %v2476, 7
    %v2478 = vsub.s32 0, %v2477
    %v2479 = vrot.slane %v2474, %v2478
    %v2480 = vlaneseq
    %v2481 = vshrl.u32 %v2480, 7
    %v2482 = vsub.s32 1, %v2481
    %v2483 = vrot.slane %v2474, %v2482
    %v2486 = vsub.f32 %v2456, %v2479
    %v2487 = vsub.f32 %v2459, %v2483
    %v2488 = vmul.f32 %v2486, 1.442695
    %v2489 = vpow.pop %v2488
    %v2490 = vmul.f32 %v2487, 1.442695
    %v2491 = vpow.pop %v2490
    %2494 = vset.pattern.permute.xlu0 0
    %2495 = vperm.xlu0 %2494, %v2489
    %v2496 = vpop.permute.xlu0 %2495
    %2497 = vset.pattern.permute.xlu0 0
    %2498 = vperm.xlu0 %2497, %v2491
    %v2499 = vpop.permute.xlu0 %2498
    %v2500 = vlaneseq
    %v2501 = vshrl.u32 %v2500, 7
    %v2502 = vsub.s32 %v479, %v2501
    %v2503 = vrot.slane %v2496, %v2502
    %v2504 = vlaneseq
    %v2505 = vshrl.u32 %v2504, 7
    %v2506 = vsub.s32 %v479, %v2505
    %v2507 = vrot.slane %v2499, %v2506
    %v2508 = vsel %vm488, %v2507, %v2503
    %v2510 = vsel %vm491, %v2508, 0.0
    %2511 = vadd.xlane.f32.xlu0 %v2510
    %v2512 = vpop.xlane.xlu0 %2511
    %v2513 = vrcp.pop %v2512
    %v2515 = vlaneseq
    %v2516 = vshrl.u32 %v2515, 7
    %v2517 = vsub.s32 0, %v2516
    %v2518 = vrot.slane %v2513, %v2517
    %v2519 = vlaneseq
    %v2520 = vshrl.u32 %v2519, 7
    %v2521 = vsub.s32 1, %v2520
    %v2522 = vrot.slane %v2513, %v2521
    %v2525 = vmul.f32 %v2489, %v2518
    %v2526 = vmul.f32 %v2491, %v2522
    %2528 = vset.pattern.permute.xlu0 0
    %2529 = vperm.xlu0 %2528, %v2525
    %v2530 = vpop.permute.xlu0 %2529
    %2533 = vset.pattern.permute.xlu0 0
    %2534 = vperm.xlu0 %2533, %v2526
    %v2535 = vpop.permute.xlu0 %2534
    %v2537 = vmul.f32 %v2530, %v155
    %v2538 = vmul.f32 %v2535, %v156
    %v2539 = vsel %vm351, %v2537, 0.0
    %v2540 = vrot.slane %v2539, 4
    %v2541 = vadd.f32 %v2539, %v2540
    %v2542 = vrot.slane %v2541, 2
    %v2543 = vadd.f32 %v2541, %v2542
    %v2544 = vrot.slane %v2543, 1
    %v2545 = vadd.f32 %v2543, %v2544
    %v2546 = vsel %vm351, %v2538, 0.0
    %v2547 = vrot.slane %v2546, 4
    %v2548 = vadd.f32 %v2546, %v2547
    %v2549 = vrot.slane %v2548, 2
    %v2550 = vadd.f32 %v2548, %v2549
    %v2551 = vrot.slane %v2550, 1
    %v2552 = vadd.f32 %v2550, %v2551
    %v2555 = vsel %vm488, %v2552, %v2545
    %v2556 = vsel %vm351, %v2555, 0
    %2558 = vmatprep.subr.mxu0 0.0
    %2559 = vmatpush1.msra.mxu0 %v164
    %2560 = vmatprep.subr.mxu0 0.0
    %2561 = vmatpush1.msra.mxu0 %v165
    %2562 = vmatprep.subr.mxu0 0.0
    %2563 = vmatpush1.msra.mxu0 %v166
    %2564 = vmatprep.subr.mxu0 0.0
    %2565 = vmatpush1.msra.mxu0 %v167
    %2566 = vmatprep.subr.mxu0 0.0
    %2567 = vmatpush1.msra.mxu0 0.0
    %2568 = vmatprep.subr.mxu0 0.0
    %2569 = vmatpush1.msra.mxu0 0.0
    %2570 = vmatprep.subr.mxu0 0.0
    %2571 = vmatpush1.msra.mxu0 0.0
    %2572 = vmatprep.subr.mxu0 0.0
    %2573 = vmatpush1.msra.mxu0 0.0
    %2574 = vmatprep.subr.mxu0 0.0
    %2575 = vmatpush1.msra.mxu0 0.0
    %2576 = vmatprep.subr.mxu0 0.0
    %2577 = vmatpush1.msra.mxu0 0.0
    %2578 = vmatprep.subr.mxu0 0.0
    %2579 = vmatpush1.msra.mxu0 0.0
    %2580 = vmatprep.subr.mxu0 0.0
    %2581 = vmatpush1.msra.mxu0 0.0
    %2582 = vmatprep.subr.mxu0 0.0
    %2583 = vmatpush1.msra.mxu0 0.0
    %2584 = vmatprep.subr.mxu0 0.0
    %2585 = vmatpush1.msra.mxu0 0.0
    %2586 = vmatprep.subr.mxu0 0.0
    %2587 = vmatpush1.msra.mxu0 0.0
    %2588 = vmatprep.subr.mxu0 0.0
    %2589 = vmatpush1.msra.mxu0 0.0
    %2590 = vmatprep.subr.mxu0 0.0
    %2591 = vmatpush1.msra.mxu0 0.0
    %2592 = vmatprep.subr.mxu0 0.0
    %2593 = vmatpush1.msra.mxu0 0.0
    %2594 = vmatprep.subr.mxu0 0.0
    %2595 = vmatpush1.msra.mxu0 0.0
    %2596 = vmatprep.subr.mxu0 0.0
    %2597 = vmatpush1.msra.mxu0 0.0
    %2598 = vmatprep.subr.mxu0 0.0
    %2599 = vmatpush1.msra.mxu0 0.0
    %2600 = vmatprep.subr.mxu0 0.0
    %2601 = vmatpush1.msra.mxu0 0.0
    %2602 = vmatprep.subr.mxu0 0.0
    %2603 = vmatpush1.msra.mxu0 0.0
    %2604 = vmatprep.subr.mxu0 0.0
    %2605 = vmatpush1.msra.mxu0 0.0
    %2606 = vmatprep.subr.mxu0 0.0
    %2607 = vmatpush1.msra.mxu0 0.0
    %2608 = vmatprep.subr.mxu0 0.0
    %2609 = vmatpush1.msra.mxu0 0.0
    %2610 = vmatprep.subr.mxu0 0.0
    %2611 = vmatpush1.msra.mxu0 0.0
    %2612 = vmatprep.subr.mxu0 0.0
    %2613 = vmatpush1.msra.mxu0 0.0
    %2614 = vmatprep.subr.mxu0 0.0
    %2615 = vmatpush1.msra.mxu0 0.0
    %2616 = vmatprep.subr.mxu0 0.0
    %2617 = vmatpush1.msra.mxu0 0.0
    %2618 = vmatprep.subr.mxu0 0.0
    %2619 = vmatpush1.msra.mxu0 0.0
    %2620 = vmatprep.subr.mxu0 0.0
    %2621 = vmatpush1.msra.mxu0 0.0
    %2622 = vmatprep.mubr.f32.mxu0 0.0
    %2623 = vmatmul.mubr.f32.gmra.mrb[0].mxu0 %v2556
    %v2624 = vpop.f32.mrb[0].mxu0
    %v2625 = vadd.f32 0.0, %v2624
    %v2626 = vpop.f32.mrb[0].mxu0
    %2627 = vdwg.mxu0
    %v2628 = vrot.slane %v2412, 6
    %2629 = vrot.lane.b32.xlu0 %v2628, 96
    %v2630 = vpop.permute.xlu0 %2629
    %v2632 = vadd.f32 %v263, %v2630
    %v2634 = vrot.slane %v2625, 6
    %v2636 = vadd.f32 %v2632, %v2634
    %v2637 = vxor.u32 %v2636, 2147483648
    %v2638 = vmul.f32 %v2637, 1.442695
    %v2639 = vpow.pop %v2638
    %v2640 = vadd.f32 %v2639, 1.0
    %v2641 = vrcp.pop %v2640
    %v2642 = vmul.f32 1.0, %v2641
    %v2643 = vmul.f32 %v2642, %v663
    %2645 = vrot.lane.b32.xlu0 %v2643, 64
    %v2646 = vpop.permute.xlu0 %2645
    %v2648 = vadd.f32 %v2636, %v2646
    %v2649 = vtanh.pop %v2648
    %v2650 = vsub.f32 1.0, %v2642
    %2652 = vrot.lane.b32.xlu0 %v2649, 96
    %v2653 = vpop.permute.xlu0 %2652
    %v2655 = vmul.f32 %v2650, %v2653
    %2656 = vrot.lane.b32.xlu0 %v2634, 32
    %v2657 = vpop.permute.xlu0 %2656
    %v2659 = vadd.f32 %v347, %v2657
    %v2661 = vrot.slane %v2655, 2
    %2662 = vrot.lane.b32.xlu0 %v2661, 96
    %v2663 = vpop.permute.xlu0 %2662
    %v2664 = vsel %vm351, %v2663, 0
    %2666 = vmatprep.subr.mxu0 0.0
    %2667 = vmatpush1.msra.mxu0 %v169
    %2668 = vmatprep.subr.mxu0 0.0
    %2669 = vmatpush1.msra.mxu0 %v170
    %2670 = vmatprep.subr.mxu0 0.0
    %2671 = vmatpush1.msra.mxu0 %v171
    %2672 = vmatprep.subr.mxu0 0.0
    %2673 = vmatpush1.msra.mxu0 %v172
    %2674 = vmatprep.subr.mxu0 0.0
    %2675 = vmatpush1.msra.mxu0 0.0
    %2676 = vmatprep.subr.mxu0 0.0
    %2677 = vmatpush1.msra.mxu0 0.0
    %2678 = vmatprep.subr.mxu0 0.0
    %2679 = vmatpush1.msra.mxu0 0.0
    %2680 = vmatprep.subr.mxu0 0.0
    %2681 = vmatpush1.msra.mxu0 0.0
    %2682 = vmatprep.subr.mxu0 0.0
    %2683 = vmatpush1.msra.mxu0 0.0
    %2684 = vmatprep.subr.mxu0 0.0
    %2685 = vmatpush1.msra.mxu0 0.0
    %2686 = vmatprep.subr.mxu0 0.0
    %2687 = vmatpush1.msra.mxu0 0.0
    %2688 = vmatprep.subr.mxu0 0.0
    %2689 = vmatpush1.msra.mxu0 0.0
    %2690 = vmatprep.subr.mxu0 0.0
    %2691 = vmatpush1.msra.mxu0 0.0
    %2692 = vmatprep.subr.mxu0 0.0
    %2693 = vmatpush1.msra.mxu0 0.0
    %2694 = vmatprep.subr.mxu0 0.0
    %2695 = vmatpush1.msra.mxu0 0.0
    %2696 = vmatprep.subr.mxu0 0.0
    %2697 = vmatpush1.msra.mxu0 0.0
    %2698 = vmatprep.subr.mxu0 0.0
    %2699 = vmatpush1.msra.mxu0 0.0
    %2700 = vmatprep.subr.mxu0 0.0
    %2701 = vmatpush1.msra.mxu0 0.0
    %2702 = vmatprep.subr.mxu0 0.0
    %2703 = vmatpush1.msra.mxu0 0.0
    %2704 = vmatprep.subr.mxu0 0.0
    %2705 = vmatpush1.msra.mxu0 0.0
    %2706 = vmatprep.subr.mxu0 0.0
    %2707 = vmatpush1.msra.mxu0 0.0
    %2708 = vmatprep.subr.mxu0 0.0
    %2709 = vmatpush1.msra.mxu0 0.0
    %2710 = vmatprep.subr.mxu0 0.0
    %2711 = vmatpush1.msra.mxu0 0.0
    %2712 = vmatprep.subr.mxu0 0.0
    %2713 = vmatpush1.msra.mxu0 0.0
    %2714 = vmatprep.subr.mxu0 0.0
    %2715 = vmatpush1.msra.mxu0 0.0
    %2716 = vmatprep.subr.mxu0 0.0
    %2717 = vmatpush1.msra.mxu0 0.0
    %2718 = vmatprep.subr.mxu0 0.0
    %2719 = vmatpush1.msra.mxu0 0.0
    %2720 = vmatprep.subr.mxu0 0.0
    %2721 = vmatpush1.msra.mxu0 0.0
    %2722 = vmatprep.subr.mxu0 0.0
    %2723 = vmatpush1.msra.mxu0 0.0
    %2724 = vmatprep.subr.mxu0 0.0
    %2725 = vmatpush1.msra.mxu0 0.0
    %2726 = vmatprep.subr.mxu0 0.0
    %2727 = vmatpush1.msra.mxu0 0.0
    %2728 = vmatprep.subr.mxu0 0.0
    %2729 = vmatpush1.msra.mxu0 0.0
    %2730 = vmatprep.mubr.f32.mxu0 0.0
    %2731 = vmatmul.mubr.f32.gmra.mrb[0].mxu0 %v2664
    %v2732 = vpop.f32.mrb[0].mxu0
    %v2733 = vadd.f32 0.0, %v2732
    %v2734 = vpop.f32.mrb[0].mxu0
    %2735 = vdwg.mxu0
    %v2737 = vrot.slane %v2733, 6
    %v2739 = vadd.f32 %v2659, %v2737
    %s2740 = scalar_lea.vmem [#allocation16], 10
    %2741 = vst.msk [vmem:[%s2740 - $0x2] sm:$0xc] %vm1157, %v2739
    %2742 = vmatprep.subr.mxu0 0.0
    %2743 = vmatpush1.msra.mxu0 %v160
    %2744 = vmatprep.subr.mxu0 0.0
    %2745 = vmatpush1.msra.mxu0 %v161
    %2746 = vmatprep.subr.mxu0 0.0
    %2747 = vmatpush1.msra.mxu0 %v162
    %2748 = vmatprep.subr.mxu0 0.0
    %2749 = vmatpush1.msra.mxu0 %v163
    %2750 = vmatprep.subr.mxu0 0.0
    %2751 = vmatpush1.msra.mxu0 0.0
    %2752 = vmatprep.subr.mxu0 0.0
    %2753 = vmatpush1.msra.mxu0 0.0
    %2754 = vmatprep.subr.mxu0 0.0
    %2755 = vmatpush1.msra.mxu0 0.0
    %2756 = vmatprep.subr.mxu0 0.0
    %2757 = vmatpush1.msra.mxu0 0.0
    %2758 = vmatprep.subr.mxu0 0.0
    %2759 = vmatpush1.msra.mxu0 0.0
    %2760 = vmatprep.subr.mxu0 0.0
    %2761 = vmatpush1.msra.mxu0 0.0
    %2762 = vmatprep.subr.mxu0 0.0
    %2763 = vmatpush1.msra.mxu0 0.0
    %2764 = vmatprep.subr.mxu0 0.0
    %2765 = vmatpush1.msra.mxu0 0.0
    %2766 = vmatprep.subr.mxu0 0.0
    %2767 = vmatpush1.msra.mxu0 0.0
    %2768 = vmatprep.subr.mxu0 0.0
    %2769 = vmatpush1.msra.mxu0 0.0
    %2770 = vmatprep.subr.mxu0 0.0
    %2771 = vmatpush1.msra.mxu0 0.0
    %2772 = vmatprep.subr.mxu0 0.0
    %2773 = vmatpush1.msra.mxu0 0.0
    %2774 = vmatprep.subr.mxu0 0.0
    %2775 = vmatpush1.msra.mxu0 0.0
    %2776 = vmatprep.subr.mxu0 0.0
    %2777 = vmatpush1.msra.mxu0 0.0
    %2778 = vmatprep.subr.mxu0 0.0
    %2779 = vmatpush1.msra.mxu0 0.0
    %2780 = vmatprep.subr.mxu0 0.0
    %2781 = vmatpush1.msra.mxu0 0.0
    %2782 = vmatprep.subr.mxu0 0.0
    %2783 = vmatpush1.msra.mxu0 0.0
    %2784 = vmatprep.subr.mxu0 0.0
    %2785 = vmatpush1.msra.mxu0 0.0
    %2786 = vmatprep.subr.mxu0 0.0
    %2787 = vmatpush1.msra.mxu0 0.0
    %2788 = vmatprep.subr.mxu0 0.0
    %2789 = vmatpush1.msra.mxu0 0.0
    %2790 = vmatprep.subr.mxu0 0.0
    %2791 = vmatpush1.msra.mxu0 0.0
    %2792 = vmatprep.subr.mxu0 0.0
    %2793 = vmatpush1.msra.mxu0 0.0
    %2794 = vmatprep.subr.mxu0 0.0
    %2795 = vmatpush1.msra.mxu0 0.0
    %2796 = vmatprep.subr.mxu0 0.0
    %2797 = vmatpush1.msra.mxu0 0.0
    %2798 = vmatprep.subr.mxu0 0.0
    %2799 = vmatpush1.msra.mxu0 0.0
    %2800 = vmatprep.subr.mxu0 0.0
    %2801 = vmatpush1.msra.mxu0 0.0
    %2802 = vmatprep.subr.mxu0 0.0
    %2803 = vmatpush1.msra.mxu0 0.0
    %2804 = vmatprep.subr.mxu0 0.0
    %2805 = vmatpush1.msra.mxu0 0.0
    %2806 = vmatprep.mubr.f32.mxu0 0.0
    %2807 = vmatmul.mubr.f32.gmra.mrb[0].mxu0 %v2664
    %v2808 = vpop.f32.mrb[0].mxu0
    %v2809 = vadd.f32 0.0, %v2808
    %v2810 = vpop.f32.mrb[0].mxu0
    %2811 = vdwg.mxu0
    %v2814 = vunpack.c.l.s4 1966171168
    %v2815 = vunpack.c.0.s8 %v2814
    %v2816 = vlaneseq
    %v2817 = vshrl.u32 %v2816, 7
    %v2818 = vsub.s32 %v2815, %v2817
    %v2819 = vrot.slane %v2809, %v2818
    %v2820 = vcombine.high %v2819, %v2819
    %v2822 = vunpack.c.l.s4 1966171168
    %v2823 = vunpack.c.0.s8 %v2822
    %v2824 = vlaneseq
    %v2825 = vshrl.u32 %v2824, 7
    %v2826 = vsub.s32 %v2823, %v2825
    %v2827 = vrot.slane %v2819, %v2826
    %v2829 = vunpack.c.l.s4 1966171168
    %v2830 = vunpack.c.0.s8 %v2829
    %v2831 = vlaneseq
    %v2832 = vshrl.u32 %v2831, 7
    %v2833 = vsub.s32 %v2830, %v2832
    %v2834 = vrot.slane %v2820, %v2833
    %v2835 = vlaneseq
    %v2836 = vshrl.u32 %v2835, 7
    %v2837 = vsub.s32 0, %v2836
    %v2838 = vrot.slane %v2827, %v2837
    %v2839 = vlaneseq
    %v2840 = vshrl.u32 %v2839, 7
    %v2841 = vsub.s32 0, %v2840
    %v2842 = vrot.slane %v2834, %v2841
    %v2845 = vadd.f32 %v157, %v2838
    %v2846 = vadd.f32 %v158, %v2842
    %v2847 = vtanh.pop %v2845
    %v2848 = vtanh.pop %v2846
    %v2849 = vmul.f32 %v2847, %v466
    %v2850 = vmul.f32 %v2848, %v466
    %v2851 = vsel %vm351, %v2849, 0.0
    %2852 = vadd.xlane.f32.xlu0 %v2851
    %v2853 = vpop.xlane.xlu0 %2852
    %v2854 = vsel %vm351, %v2850, 0.0
    %2855 = vadd.xlane.f32.xlu0 %v2854
    %v2856 = vpop.xlane.xlu0 %2855
    %v2859 = vlaneseq
    %v2860 = vshrl.u32 %v2859, 7
    %v2861 = vsub.s32 %v479, %v2860
    %v2862 = vrot.slane %v2853, %v2861
    %v2863 = vlaneseq
    %v2864 = vshrl.u32 %v2863, 7
    %v2865 = vsub.s32 %v479, %v2864
    %v2866 = vrot.slane %v2856, %v2865
    %v2867 = vsel %vm488, %v2866, %v2862
    %v2869 = vsel %vm491, %v2867, -inf
    %2870 = vmax.xlane.f32.xlu0 %v2869
    %v2871 = vpop.xlane.xlu0 %2870
    %v2873 = vlaneseq
    %v2874 = vshrl.u32 %v2873, 7
    %v2875 = vsub.s32 0, %v2874
    %v2876 = vrot.slane %v2871, %v2875
    %v2877 = vlaneseq
    %v2878 = vshrl.u32 %v2877, 7
    %v2879 = vsub.s32 1, %v2878
    %v2880 = vrot.slane %v2871, %v2879
    %v2883 = vsub.f32 %v2853, %v2876
    %v2884 = vsub.f32 %v2856, %v2880
    %v2885 = vmul.f32 %v2883, 1.442695
    %v2886 = vpow.pop %v2885
    %v2887 = vmul.f32 %v2884, 1.442695
    %v2888 = vpow.pop %v2887
    %2891 = vset.pattern.permute.xlu0 0
    %2892 = vperm.xlu0 %2891, %v2886
    %v2893 = vpop.permute.xlu0 %2892
    %2894 = vset.pattern.permute.xlu0 0
    %2895 = vperm.xlu0 %2894, %v2888
    %v2896 = vpop.permute.xlu0 %2895
    %v2897 = vlaneseq
    %v2898 = vshrl.u32 %v2897, 7
    %v2899 = vsub.s32 %v479, %v2898
    %v2900 = vrot.slane %v2893, %v2899
    %v2901 = vlaneseq
    %v2902 = vshrl.u32 %v2901, 7
    %v2903 = vsub.s32 %v479, %v2902
    %v2904 = vrot.slane %v2896, %v2903
    %v2905 = vsel %vm488, %v2904, %v2900
    %v2907 = vsel %vm491, %v2905, 0.0
    %2908 = vadd.xlane.f32.xlu0 %v2907
    %v2909 = vpop.xlane.xlu0 %2908
    %v2910 = vrcp.pop %v2909
    %v2912 = vlaneseq
    %v2913 = vshrl.u32 %v2912, 7
    %v2914 = vsub.s32 0, %v2913
    %v2915 = vrot.slane %v2910, %v2914
    %v2916 = vlaneseq
    %v2917 = vshrl.u32 %v2916, 7
    %v2918 = vsub.s32 1, %v2917
    %v2919 = vrot.slane %v2910, %v2918
    %v2922 = vmul.f32 %v2886, %v2915
    %v2923 = vmul.f32 %v2888, %v2919
    %2925 = vset.pattern.permute.xlu0 0
    %2926 = vperm.xlu0 %2925, %v2922
    %v2927 = vpop.permute.xlu0 %2926
    %2930 = vset.pattern.permute.xlu0 0
    %2931 = vperm.xlu0 %2930, %v2923
    %v2932 = vpop.permute.xlu0 %2931
    %v2934 = vmul.f32 %v2927, %v155
    %v2935 = vmul.f32 %v2932, %v156
    %v2936 = vsel %vm351, %v2934, 0.0
    %v2937 = vrot.slane %v2936, 4
    %v2938 = vadd.f32 %v2936, %v2937
    %v2939 = vrot.slane %v2938, 2
    %v2940 = vadd.f32 %v2938, %v2939
    %v2941 = vrot.slane %v2940, 1
    %v2942 = vadd.f32 %v2940, %v2941
    %v2943 = vsel %vm351, %v2935, 0.0
    %v2944 = vrot.slane %v2943, 4
    %v2945 = vadd.f32 %v2943, %v2944
    %v2946 = vrot.slane %v2945, 2
    %v2947 = vadd.f32 %v2945, %v2946
    %v2948 = vrot.slane %v2947, 1
    %v2949 = vadd.f32 %v2947, %v2948
    %v2952 = vsel %vm488, %v2949, %v2942
    %v2953 = vsel %vm351, %v2952, 0
    %2955 = vmatprep.subr.mxu0 0.0
    %2956 = vmatpush1.msra.mxu0 %v164
    %2957 = vmatprep.subr.mxu0 0.0
    %2958 = vmatpush1.msra.mxu0 %v165
    %2959 = vmatprep.subr.mxu0 0.0
    %2960 = vmatpush1.msra.mxu0 %v166
    %2961 = vmatprep.subr.mxu0 0.0
    %2962 = vmatpush1.msra.mxu0 %v167
    %2963 = vmatprep.subr.mxu0 0.0
    %2964 = vmatpush1.msra.mxu0 0.0
    %2965 = vmatprep.subr.mxu0 0.0
    %2966 = vmatpush1.msra.mxu0 0.0
    %2967 = vmatprep.subr.mxu0 0.0
    %2968 = vmatpush1.msra.mxu0 0.0
    %2969 = vmatprep.subr.mxu0 0.0
    %2970 = vmatpush1.msra.mxu0 0.0
    %2971 = vmatprep.subr.mxu0 0.0
    %2972 = vmatpush1.msra.mxu0 0.0
    %2973 = vmatprep.subr.mxu0 0.0
    %2974 = vmatpush1.msra.mxu0 0.0
    %2975 = vmatprep.subr.mxu0 0.0
    %2976 = vmatpush1.msra.mxu0 0.0
    %2977 = vmatprep.subr.mxu0 0.0
    %2978 = vmatpush1.msra.mxu0 0.0
    %2979 = vmatprep.subr.mxu0 0.0
    %2980 = vmatpush1.msra.mxu0 0.0
    %2981 = vmatprep.subr.mxu0 0.0
    %2982 = vmatpush1.msra.mxu0 0.0
    %2983 = vmatprep.subr.mxu0 0.0
    %2984 = vmatpush1.msra.mxu0 0.0
    %2985 = vmatprep.subr.mxu0 0.0
    %2986 = vmatpush1.msra.mxu0 0.0
    %2987 = vmatprep.subr.mxu0 0.0
    %2988 = vmatpush1.msra.mxu0 0.0
    %2989 = vmatprep.subr.mxu0 0.0
    %2990 = vmatpush1.msra.mxu0 0.0
    %2991 = vmatprep.subr.mxu0 0.0
    %2992 = vmatpush1.msra.mxu0 0.0
    %2993 = vmatprep.subr.mxu0 0.0
    %2994 = vmatpush1.msra.mxu0 0.0
    %2995 = vmatprep.subr.mxu0 0.0
    %2996 = vmatpush1.msra.mxu0 0.0
    %2997 = vmatprep.subr.mxu0 0.0
    %2998 = vmatpush1.msra.mxu0 0.0
    %2999 = vmatprep.subr.mxu0 0.0
    %3000 = vmatpush1.msra.mxu0 0.0
    %3001 = vmatprep.subr.mxu0 0.0
    %3002 = vmatpush1.msra.mxu0 0.0
    %3003 = vmatprep.subr.mxu0 0.0
    %3004 = vmatpush1.msra.mxu0 0.0
    %3005 = vmatprep.subr.mxu0 0.0
    %3006 = vmatpush1.msra.mxu0 0.0
    %3007 = vmatprep.subr.mxu0 0.0
    %3008 = vmatpush1.msra.mxu0 0.0
    %3009 = vmatprep.subr.mxu0 0.0
    %3010 = vmatpush1.msra.mxu0 0.0
    %3011 = vmatprep.subr.mxu0 0.0
    %3012 = vmatpush1.msra.mxu0 0.0
    %3013 = vmatprep.subr.mxu0 0.0
    %3014 = vmatpush1.msra.mxu0 0.0
    %3015 = vmatprep.subr.mxu0 0.0
    %3016 = vmatpush1.msra.mxu0 0.0
    %3017 = vmatprep.subr.mxu0 0.0
    %3018 = vmatpush1.msra.mxu0 0.0
    %3019 = vmatprep.mubr.f32.mxu0 0.0
    %3020 = vmatmul.mubr.f32.gmra.mrb[0].mxu0 %v2953
    %v3021 = vpop.f32.mrb[0].mxu0
    %v3022 = vadd.f32 0.0, %v3021
    %v3023 = vpop.f32.mrb[0].mxu0
    %3024 = vdwg.mxu0
    %v3025 = vrot.slane %v2809, 4
    %3026 = vrot.lane.b32.xlu0 %v3025, 96
    %v3027 = vpop.permute.xlu0 %3026
    %v3029 = vadd.f32 %v263, %v3027
    %v3031 = vrot.slane %v3022, 4
    %v3033 = vadd.f32 %v3029, %v3031
    %v3034 = vxor.u32 %v3033, 2147483648
    %v3035 = vmul.f32 %v3034, 1.442695
    %v3036 = vpow.pop %v3035
    %v3037 = vadd.f32 %v3036, 1.0
    %v3038 = vrcp.pop %v3037
    %v3039 = vmul.f32 1.0, %v3038
    %v3040 = vmul.f32 %v3039, %v663
    %3042 = vrot.lane.b32.xlu0 %v3040, 64
    %v3043 = vpop.permute.xlu0 %3042
    %v3045 = vadd.f32 %v3033, %v3043
    %v3046 = vtanh.pop %v3045
    %v3047 = vsub.f32 1.0, %v3039
    %3049 = vrot.lane.b32.xlu0 %v3046, 96
    %v3050 = vpop.permute.xlu0 %3049
    %v3052 = vmul.f32 %v3047, %v3050
    %3053 = vrot.lane.b32.xlu0 %v3031, 32
    %v3054 = vpop.permute.xlu0 %3053
    %v3056 = vadd.f32 %v347, %v3054
    %v3058 = vrot.slane %v3052, 4
    %3059 = vrot.lane.b32.xlu0 %v3058, 96
    %v3060 = vpop.permute.xlu0 %3059
    %v3061 = vsel %vm351, %v3060, 0
    %3063 = vmatprep.subr.mxu0 0.0
    %3064 = vmatpush1.msra.mxu0 %v169
    %3065 = vmatprep.subr.mxu0 0.0
    %3066 = vmatpush1.msra.mxu0 %v170
    %3067 = vmatprep.subr.mxu0 0.0
    %3068 = vmatpush1.msra.mxu0 %v171
    %3069 = vmatprep.subr.mxu0 0.0
    %3070 = vmatpush1.msra.mxu0 %v172
    %3071 = vmatprep.subr.mxu0 0.0
    %3072 = vmatpush1.msra.mxu0 0.0
    %3073 = vmatprep.subr.mxu0 0.0
    %3074 = vmatpush1.msra.mxu0 0.0
    %3075 = vmatprep.subr.mxu0 0.0
    %3076 = vmatpush1.msra.mxu0 0.0
    %3077 = vmatprep.subr.mxu0 0.0
    %3078 = vmatpush1.msra.mxu0 0.0
    %3079 = vmatprep.subr.mxu0 0.0
    %3080 = vmatpush1.msra.mxu0 0.0
    %3081 = vmatprep.subr.mxu0 0.0
    %3082 = vmatpush1.msra.mxu0 0.0
    %3083 = vmatprep.subr.mxu0 0.0
    %3084 = vmatpush1.msra.mxu0 0.0
    %3085 = vmatprep.subr.mxu0 0.0
    %3086 = vmatpush1.msra.mxu0 0.0
    %3087 = vmatprep.subr.mxu0 0.0
    %3088 = vmatpush1.msra.mxu0 0.0
    %3089 = vmatprep.subr.mxu0 0.0
    %3090 = vmatpush1.msra.mxu0 0.0
    %3091 = vmatprep.subr.mxu0 0.0
    %3092 = vmatpush1.msra.mxu0 0.0
    %3093 = vmatprep.subr.mxu0 0.0
    %3094 = vmatpush1.msra.mxu0 0.0
    %3095 = vmatprep.subr.mxu0 0.0
    %3096 = vmatpush1.msra.mxu0 0.0
    %3097 = vmatprep.subr.mxu0 0.0
    %3098 = vmatpush1.msra.mxu0 0.0
    %3099 = vmatprep.subr.mxu0 0.0
    %3100 = vmatpush1.msra.mxu0 0.0
    %3101 = vmatprep.subr.mxu0 0.0
    %3102 = vmatpush1.msra.mxu0 0.0
    %3103 = vmatprep.subr.mxu0 0.0
    %3104 = vmatpush1.msra.mxu0 0.0
    %3105 = vmatprep.subr.mxu0 0.0
    %3106 = vmatpush1.msra.mxu0 0.0
    %3107 = vmatprep.subr.mxu0 0.0
    %3108 = vmatpush1.msra.mxu0 0.0
    %3109 = vmatprep.subr.mxu0 0.0
    %3110 = vmatpush1.msra.mxu0 0.0
    %3111 = vmatprep.subr.mxu0 0.0
    %3112 = vmatpush1.msra.mxu0 0.0
    %3113 = vmatprep.subr.mxu0 0.0
    %3114 = vmatpush1.msra.mxu0 0.0
    %3115 = vmatprep.subr.mxu0 0.0
    %3116 = vmatpush1.msra.mxu0 0.0
    %3117 = vmatprep.subr.mxu0 0.0
    %3118 = vmatpush1.msra.mxu0 0.0
    %3119 = vmatprep.subr.mxu0 0.0
    %3120 = vmatpush1.msra.mxu0 0.0
    %3121 = vmatprep.subr.mxu0 0.0
    %3122 = vmatpush1.msra.mxu0 0.0
    %3123 = vmatprep.subr.mxu0 0.0
    %3124 = vmatpush1.msra.mxu0 0.0
    %3125 = vmatprep.subr.mxu0 0.0
    %3126 = vmatpush1.msra.mxu0 0.0
    %3127 = vmatprep.mubr.f32.mxu0 0.0
    %3128 = vmatmul.mubr.f32.gmra.mrb[0].mxu0 %v3061
    %v3129 = vpop.f32.mrb[0].mxu0
    %v3130 = vadd.f32 0.0, %v3129
    %v3131 = vpop.f32.mrb[0].mxu0
    %3132 = vdwg.mxu0
    %v3134 = vrot.slane %v3130, 4
    %v3136 = vadd.f32 %v3056, %v3134
    %s3137 = scalar_lea.vmem [#allocation16], 12
    %3138 = vst.msk [vmem:[%s3137 - $0x4] sm:$0x30] %vm1555, %v3136
    %3139 = vmatprep.subr.mxu0 0.0
    %3140 = vmatpush1.msra.mxu0 %v160
    %3141 = vmatprep.subr.mxu0 0.0
    %3142 = vmatpush1.msra.mxu0 %v161
    %3143 = vmatprep.subr.mxu0 0.0
    %3144 = vmatpush1.msra.mxu0 %v162
    %3145 = vmatprep.subr.mxu0 0.0
    %3146 = vmatpush1.msra.mxu0 %v163
    %3147 = vmatprep.subr.mxu0 0.0
    %3148 = vmatpush1.msra.mxu0 0.0
    %3149 = vmatprep.subr.mxu0 0.0
    %3150 = vmatpush1.msra.mxu0 0.0
    %3151 = vmatprep.subr.mxu0 0.0
    %3152 = vmatpush1.msra.mxu0 0.0
    %3153 = vmatprep.subr.mxu0 0.0
    %3154 = vmatpush1.msra.mxu0 0.0
    %3155 = vmatprep.subr.mxu0 0.0
    %3156 = vmatpush1.msra.mxu0 0.0
    %3157 = vmatprep.subr.mxu0 0.0
    %3158 = vmatpush1.msra.mxu0 0.0
    %3159 = vmatprep.subr.mxu0 0.0
    %3160 = vmatpush1.msra.mxu0 0.0
    %3161 = vmatprep.subr.mxu0 0.0
    %3162 = vmatpush1.msra.mxu0 0.0
    %3163 = vmatprep.subr.mxu0 0.0
    %3164 = vmatpush1.msra.mxu0 0.0
    %3165 = vmatprep.subr.mxu0 0.0
    %3166 = vmatpush1.msra.mxu0 0.0
    %3167 = vmatprep.subr.mxu0 0.0
    %3168 = vmatpush1.msra.mxu0 0.0
    %3169 = vmatprep.subr.mxu0 0.0
    %3170 = vmatpush1.msra.mxu0 0.0
    %3171 = vmatprep.subr.mxu0 0.0
    %3172 = vmatpush1.msra.mxu0 0.0
    %3173 = vmatprep.subr.mxu0 0.0
    %3174 = vmatpush1.msra.mxu0 0.0
    %3175 = vmatprep.subr.mxu0 0.0
    %3176 = vmatpush1.msra.mxu0 0.0
    %3177 = vmatprep.subr.mxu0 0.0
    %3178 = vmatpush1.msra.mxu0 0.0
    %3179 = vmatprep.subr.mxu0 0.0
    %3180 = vmatpush1.msra.mxu0 0.0
    %3181 = vmatprep.subr.mxu0 0.0
    %3182 = vmatpush1.msra.mxu0 0.0
    %3183 = vmatprep.subr.mxu0 0.0
    %3184 = vmatpush1.msra.mxu0 0.0
    %3185 = vmatprep.subr.mxu0 0.0
    %3186 = vmatpush1.msra.mxu0 0.0
    %3187 = vmatprep.subr.mxu0 0.0
    %3188 = vmatpush1.msra.mxu0 0.0
    %3189 = vmatprep.subr.mxu0 0.0
    %3190 = vmatpush1.msra.mxu0 0.0
    %3191 = vmatprep.subr.mxu0 0.0
    %3192 = vmatpush1.msra.mxu0 0.0
    %3193 = vmatprep.subr.mxu0 0.0
    %3194 = vmatpush1.msra.mxu0 0.0
    %3195 = vmatprep.subr.mxu0 0.0
    %3196 = vmatpush1.msra.mxu0 0.0
    %3197 = vmatprep.subr.mxu0 0.0
    %3198 = vmatpush1.msra.mxu0 0.0
    %3199 = vmatprep.subr.mxu0 0.0
    %3200 = vmatpush1.msra.mxu0 0.0
    %3201 = vmatprep.subr.mxu0 0.0
    %3202 = vmatpush1.msra.mxu0 0.0
    %3203 = vmatprep.mubr.f32.mxu0 0.0
    %3204 = vmatmul.mubr.f32.gmra.mrb[0].mxu0 %v3061
    %v3205 = vpop.f32.mrb[0].mxu0
    %v3206 = vadd.f32 0.0, %v3205
    %v3207 = vpop.f32.mrb[0].mxu0
    %3208 = vdwg.mxu0
    %v3211 = vunpack.c.l.s4 1966171168
    %v3212 = vunpack.c.0.s8 %v3211
    %v3213 = vlaneseq
    %v3214 = vshrl.u32 %v3213, 7
    %v3215 = vsub.s32 %v3212, %v3214
    %v3216 = vrot.slane %v3206, %v3215
    %v3217 = vcombine.high %v3216, %v3216
    %v3219 = vunpack.c.l.s4 1966171168
    %v3220 = vunpack.c.0.s8 %v3219
    %v3221 = vlaneseq
    %v3222 = vshrl.u32 %v3221, 7
    %v3223 = vsub.s32 %v3220, %v3222
    %v3224 = vrot.slane %v3216, %v3223
    %v3226 = vunpack.c.l.s4 1966171168
    %v3227 = vunpack.c.0.s8 %v3226
    %v3228 = vlaneseq
    %v3229 = vshrl.u32 %v3228, 7
    %v3230 = vsub.s32 %v3227, %v3229
    %v3231 = vrot.slane %v3217, %v3230
    %v3232 = vlaneseq
    %v3233 = vshrl.u32 %v3232, 7
    %v3234 = vsub.s32 0, %v3233
    %v3235 = vrot.slane %v3224, %v3234
    %v3236 = vlaneseq
    %v3237 = vshrl.u32 %v3236, 7
    %v3238 = vsub.s32 0, %v3237
    %v3239 = vrot.slane %v3231, %v3238
    %v3242 = vadd.f32 %v157, %v3235
    %v3243 = vadd.f32 %v158, %v3239
    %v3244 = vtanh.pop %v3242
    %v3245 = vtanh.pop %v3243
    %v3246 = vmul.f32 %v3244, %v466
    %v3247 = vmul.f32 %v3245, %v466
    %v3248 = vsel %vm351, %v3246, 0.0
    %3249 = vadd.xlane.f32.xlu0 %v3248
    %v3250 = vpop.xlane.xlu0 %3249
    %v3251 = vsel %vm351, %v3247, 0.0
    %3252 = vadd.xlane.f32.xlu0 %v3251
    %v3253 = vpop.xlane.xlu0 %3252
    %v3256 = vlaneseq
    %v3257 = vshrl.u32 %v3256, 7
    %v3258 = vsub.s32 %v479, %v3257
    %v3259 = vrot.slane %v3250, %v3258
    %v3260 = vlaneseq
    %v3261 = vshrl.u32 %v3260, 7
    %v3262 = vsub.s32 %v479, %v3261
    %v3263 = vrot.slane %v3253, %v3262
    %v3264 = vsel %vm488, %v3263, %v3259
    %v3266 = vsel %vm491, %v3264, -inf
    %3267 = vmax.xlane.f32.xlu0 %v3266
    %v3268 = vpop.xlane.xlu0 %3267
    %v3270 = vlaneseq
    %v3271 = vshrl.u32 %v3270, 7
    %v3272 = vsub.s32 0, %v3271
    %v3273 = vrot.slane %v3268, %v3272
    %v3274 = vlaneseq
    %v3275 = vshrl.u32 %v3274, 7
    %v3276 = vsub.s32 1, %v3275
    %v3277 = vrot.slane %v3268, %v3276
    %v3280 = vsub.f32 %v3250, %v3273
    %v3281 = vsub.f32 %v3253, %v3277
    %v3282 = vmul.f32 %v3280, 1.442695
    %v3283 = vpow.pop %v3282
    %v3284 = vmul.f32 %v3281, 1.442695
    %v3285 = vpow.pop %v3284
    %3288 = vset.pattern.permute.xlu0 0
    %3289 = vperm.xlu0 %3288, %v3283
    %v3290 = vpop.permute.xlu0 %3289
    %3291 = vset.pattern.permute.xlu0 0
    %3292 = vperm.xlu0 %3291, %v3285
    %v3293 = vpop.permute.xlu0 %3292
    %v3294 = vlaneseq
    %v3295 = vshrl.u32 %v3294, 7
    %v3296 = vsub.s32 %v479, %v3295
    %v3297 = vrot.slane %v3290, %v3296
    %v3298 = vlaneseq
    %v3299 = vshrl.u32 %v3298, 7
    %v3300 = vsub.s32 %v479, %v3299
    %v3301 = vrot.slane %v3293, %v3300
    %v3302 = vsel %vm488, %v3301, %v3297
    %v3304 = vsel %vm491, %v3302, 0.0
    %3305 = vadd.xlane.f32.xlu0 %v3304
    %v3306 = vpop.xlane.xlu0 %3305
    %v3307 = vrcp.pop %v3306
    %v3309 = vlaneseq
    %v3310 = vshrl.u32 %v3309, 7
    %v3311 = vsub.s32 0, %v3310
    %v3312 = vrot.slane %v3307, %v3311
    %v3313 = vlaneseq
    %v3314 = vshrl.u32 %v3313, 7
    %v3315 = vsub.s32 1, %v3314
    %v3316 = vrot.slane %v3307, %v3315
    %v3319 = vmul.f32 %v3283, %v3312
    %v3320 = vmul.f32 %v3285, %v3316
    %3322 = vset.pattern.permute.xlu0 0
    %3323 = vperm.xlu0 %3322, %v3319
    %v3324 = vpop.permute.xlu0 %3323
    %3327 = vset.pattern.permute.xlu0 0
    %3328 = vperm.xlu0 %3327, %v3320
    %v3329 = vpop.permute.xlu0 %3328
    %v3331 = vmul.f32 %v3324, %v155
    %v3332 = vmul.f32 %v3329, %v156
    %v3333 = vsel %vm351, %v3331, 0.0
    %v3334 = vrot.slane %v3333, 4
    %v3335 = vadd.f32 %v3333, %v3334
    %v3336 = vrot.slane %v3335, 2
    %v3337 = vadd.f32 %v3335, %v3336
    %v3338 = vrot.slane %v3337, 1
    %v3339 = vadd.f32 %v3337, %v3338
    %v3340 = vsel %vm351, %v3332, 0.0
    %v3341 = vrot.slane %v3340, 4
    %v3342 = vadd.f32 %v3340, %v3341
    %v3343 = vrot.slane %v3342, 2
    %v3344 = vadd.f32 %v3342, %v3343
    %v3345 = vrot.slane %v3344, 1
    %v3346 = vadd.f32 %v3344, %v3345
    %v3349 = vsel %vm488, %v3346, %v3339
    %v3350 = vsel %vm351, %v3349, 0
    %3352 = vmatprep.subr.mxu0 0.0
    %3353 = vmatpush1.msra.mxu0 %v164
    %3354 = vmatprep.subr.mxu0 0.0
    %3355 = vmatpush1.msra.mxu0 %v165
    %3356 = vmatprep.subr.mxu0 0.0
    %3357 = vmatpush1.msra.mxu0 %v166
    %3358 = vmatprep.subr.mxu0 0.0
    %3359 = vmatpush1.msra.mxu0 %v167
    %3360 = vmatprep.subr.mxu0 0.0
    %3361 = vmatpush1.msra.mxu0 0.0
    %3362 = vmatprep.subr.mxu0 0.0
    %3363 = vmatpush1.msra.mxu0 0.0
    %3364 = vmatprep.subr.mxu0 0.0
    %3365 = vmatpush1.msra.mxu0 0.0
    %3366 = vmatprep.subr.mxu0 0.0
    %3367 = vmatpush1.msra.mxu0 0.0
    %3368 = vmatprep.subr.mxu0 0.0
    %3369 = vmatpush1.msra.mxu0 0.0
    %3370 = vmatprep.subr.mxu0 0.0
    %3371 = vmatpush1.msra.mxu0 0.0
    %3372 = vmatprep.subr.mxu0 0.0
    %3373 = vmatpush1.msra.mxu0 0.0
    %3374 = vmatprep.subr.mxu0 0.0
    %3375 = vmatpush1.msra.mxu0 0.0
    %3376 = vmatprep.subr.mxu0 0.0
    %3377 = vmatpush1.msra.mxu0 0.0
    %3378 = vmatprep.subr.mxu0 0.0
    %3379 = vmatpush1.msra.mxu0 0.0
    %3380 = vmatprep.subr.mxu0 0.0
    %3381 = vmatpush1.msra.mxu0 0.0
    %3382 = vmatprep.subr.mxu0 0.0
    %3383 = vmatpush1.msra.mxu0 0.0
    %3384 = vmatprep.subr.mxu0 0.0
    %3385 = vmatpush1.msra.mxu0 0.0
    %3386 = vmatprep.subr.mxu0 0.0
    %3387 = vmatpush1.msra.mxu0 0.0
    %3388 = vmatprep.subr.mxu0 0.0
    %3389 = vmatpush1.msra.mxu0 0.0
    %3390 = vmatprep.subr.mxu0 0.0
    %3391 = vmatpush1.msra.mxu0 0.0
    %3392 = vmatprep.subr.mxu0 0.0
    %3393 = vmatpush1.msra.mxu0 0.0
    %3394 = vmatprep.subr.mxu0 0.0
    %3395 = vmatpush1.msra.mxu0 0.0
    %3396 = vmatprep.subr.mxu0 0.0
    %3397 = vmatpush1.msra.mxu0 0.0
    %3398 = vmatprep.subr.mxu0 0.0
    %3399 = vmatpush1.msra.mxu0 0.0
    %3400 = vmatprep.subr.mxu0 0.0
    %3401 = vmatpush1.msra.mxu0 0.0
    %3402 = vmatprep.subr.mxu0 0.0
    %3403 = vmatpush1.msra.mxu0 0.0
    %3404 = vmatprep.subr.mxu0 0.0
    %3405 = vmatpush1.msra.mxu0 0.0
    %3406 = vmatprep.subr.mxu0 0.0
    %3407 = vmatpush1.msra.mxu0 0.0
    %3408 = vmatprep.subr.mxu0 0.0
    %3409 = vmatpush1.msra.mxu0 0.0
    %3410 = vmatprep.subr.mxu0 0.0
    %3411 = vmatpush1.msra.mxu0 0.0
    %3412 = vmatprep.subr.mxu0 0.0
    %3413 = vmatpush1.msra.mxu0 0.0
    %3414 = vmatprep.subr.mxu0 0.0
    %3415 = vmatpush1.msra.mxu0 0.0
    %3416 = vmatprep.mubr.f32.mxu0 0.0
    %3417 = vmatmul.mubr.f32.gmra.mrb[0].mxu0 %v3350
    %v3418 = vpop.f32.mrb[0].mxu0
    %v3419 = vadd.f32 0.0, %v3418
    %v3420 = vpop.f32.mrb[0].mxu0
    %3421 = vdwg.mxu0
    %v3422 = vrot.slane %v3206, 2
    %3423 = vrot.lane.b32.xlu0 %v3422, 96
    %v3424 = vpop.permute.xlu0 %3423
    %v3426 = vadd.f32 %v263, %v3424
    %v3428 = vrot.slane %v3419, 2
    %v3430 = vadd.f32 %v3426, %v3428
    %v3431 = vxor.u32 %v3430, 2147483648
    %v3432 = vmul.f32 %v3431, 1.442695
    %v3433 = vpow.pop %v3432
    %v3434 = vadd.f32 %v3433, 1.0
    %v3435 = vrcp.pop %v3434
    %v3436 = vmul.f32 1.0, %v3435
    %v3437 = vmul.f32 %v3436, %v663
    %3439 = vrot.lane.b32.xlu0 %v3437, 64
    %v3440 = vpop.permute.xlu0 %3439
    %v3442 = vadd.f32 %v3430, %v3440
    %v3443 = vtanh.pop %v3442
    %v3444 = vsub.f32 1.0, %v3436
    %3446 = vrot.lane.b32.xlu0 %v3443, 96
    %v3447 = vpop.permute.xlu0 %3446
    %v3449 = vmul.f32 %v3444, %v3447
    %3450 = vrot.lane.b32.xlu0 %v3428, 32
    %v3451 = vpop.permute.xlu0 %3450
    %v3453 = vadd.f32 %v347, %v3451
    %v3455 = vrot.slane %v3449, 6
    %3456 = vrot.lane.b32.xlu0 %v3455, 96
    %v3457 = vpop.permute.xlu0 %3456
    %v3458 = vsel %vm351, %v3457, 0
    %3460 = vmatprep.subr.mxu0 0.0
    %3461 = vmatpush1.msra.mxu0 %v169
    %3462 = vmatprep.subr.mxu0 0.0
    %3463 = vmatpush1.msra.mxu0 %v170
    %3464 = vmatprep.subr.mxu0 0.0
    %3465 = vmatpush1.msra.mxu0 %v171
    %3466 = vmatprep.subr.mxu0 0.0
    %3467 = vmatpush1.msra.mxu0 %v172
    %3468 = vmatprep.subr.mxu0 0.0
    %3469 = vmatpush1.msra.mxu0 0.0
    %3470 = vmatprep.subr.mxu0 0.0
    %3471 = vmatpush1.msra.mxu0 0.0
    %3472 = vmatprep.subr.mxu0 0.0
    %3473 = vmatpush1.msra.mxu0 0.0
    %3474 = vmatprep.subr.mxu0 0.0
    %3475 = vmatpush1.msra.mxu0 0.0
    %3476 = vmatprep.subr.mxu0 0.0
    %3477 = vmatpush1.msra.mxu0 0.0
    %3478 = vmatprep.subr.mxu0 0.0
    %3479 = vmatpush1.msra.mxu0 0.0
    %3480 = vmatprep.subr.mxu0 0.0
    %3481 = vmatpush1.msra.mxu0 0.0
    %3482 = vmatprep.subr.mxu0 0.0
    %3483 = vmatpush1.msra.mxu0 0.0
    %3484 = vmatprep.subr.mxu0 0.0
    %3485 = vmatpush1.msra.mxu0 0.0
    %3486 = vmatprep.subr.mxu0 0.0
    %3487 = vmatpush1.msra.mxu0 0.0
    %3488 = vmatprep.subr.mxu0 0.0
    %3489 = vmatpush1.msra.mxu0 0.0
    %3490 = vmatprep.subr.mxu0 0.0
    %3491 = vmatpush1.msra.mxu0 0.0
    %3492 = vmatprep.subr.mxu0 0.0
    %3493 = vmatpush1.msra.mxu0 0.0
    %3494 = vmatprep.subr.mxu0 0.0
    %3495 = vmatpush1.msra.mxu0 0.0
    %3496 = vmatprep.subr.mxu0 0.0
    %3497 = vmatpush1.msra.mxu0 0.0
    %3498 = vmatprep.subr.mxu0 0.0
    %3499 = vmatpush1.msra.mxu0 0.0
    %3500 = vmatprep.subr.mxu0 0.0
    %3501 = vmatpush1.msra.mxu0 0.0
    %3502 = vmatprep.subr.mxu0 0.0
    %3503 = vmatpush1.msra.mxu0 0.0
    %3504 = vmatprep.subr.mxu0 0.0
    %3505 = vmatpush1.msra.mxu0 0.0
    %3506 = vmatprep.subr.mxu0 0.0
    %3507 = vmatpush1.msra.mxu0 0.0
    %3508 = vmatprep.subr.mxu0 0.0
    %3509 = vmatpush1.msra.mxu0 0.0
    %3510 = vmatprep.subr.mxu0 0.0
    %3511 = vmatpush1.msra.mxu0 0.0
    %3512 = vmatprep.subr.mxu0 0.0
    %3513 = vmatpush1.msra.mxu0 0.0
    %3514 = vmatprep.subr.mxu0 0.0
    %3515 = vmatpush1.msra.mxu0 0.0
    %3516 = vmatprep.subr.mxu0 0.0
    %3517 = vmatpush1.msra.mxu0 0.0
    %3518 = vmatprep.subr.mxu0 0.0
    %3519 = vmatpush1.msra.mxu0 0.0
    %3520 = vmatprep.subr.mxu0 0.0
    %3521 = vmatpush1.msra.mxu0 0.0
    %3522 = vmatprep.subr.mxu0 0.0
    %3523 = vmatpush1.msra.mxu0 0.0
    %3524 = vmatprep.mubr.f32.mxu0 0.0
    %3525 = vmatmul.mubr.f32.gmra.mrb[0].mxu0 %v3458
    %v3526 = vpop.f32.mrb[0].mxu0
    %v3527 = vadd.f32 0.0, %v3526
    %v3528 = vpop.f32.mrb[0].mxu0
    %3529 = vdwg.mxu0
    %v3531 = vrot.slane %v3527, 2
    %v3533 = vadd.f32 %v3453, %v3531
    %s3534 = scalar_lea.vmem [#allocation16], 14
    %3535 = vst.msk [vmem:[%s3534 - $0x6] sm:$0xc0] %vm1953, %v3533
    %3536 = vrot.lane.b32.xlu0 %v3449, 96
    %v3537 = vpop.permute.xlu0 %3536
    %3539 = vst.msk [vmem:[#allocation17 - $0x6] sm:$0xc0] %vm1953, %v3537
    // Predicated region
    $region86: #{tpu_custom_call.1} parent=1 // pred_check
      _
    $region87: #{tpu_custom_call.1} parent=1 // pred_check_branch
      %3541 = sbr.rel (0) target = $region89
    $region88: #{tpu_custom_call.1} parent=1 // pred_region
      %s3543 = ssub.s32 256, 256
      %3544 = vsyncadd [#allocation4], %s3543
      %s3545 = sshll.u32 [#allocation16], 4
      %s3546 = int_to_ptr.vmem [resolvable:$true] %s3545
      %3551 = dma.vmem_to_hbm [thread:$0]  %s3546, 256, %s13, [#allocation4], 32, 32, 2
    $region89: #{tpu_custom_call.1} parent=1 // pred_fallthru
      _
    // Predicated region
    $region90: #{tpu_custom_call.1} parent=1 // pred_check
      _
    $region91: #{tpu_custom_call.1} parent=1 // pred_check_branch
      %3553 = sbr.rel (0) target = $region93
    $region92: #{tpu_custom_call.1} parent=1 // pred_region
      %s3555 = ssub.s32 32, 32
      %3556 = vsyncadd [#allocation18], %s3555
      %s3558 = sshll.u32 [#allocation17], 4
      %s3559 = int_to_ptr.vmem [resolvable:$true] %s3558
      %3561 = dma.vmem_to_hbm [thread:$0]  %s3559, 32, %s14, [#allocation18]
    $region93: #{tpu_custom_call.1} parent=1 // pred_fallthru
      _
    // Predicated region
    $region94: #{tpu_custom_call.1} parent=1 // pred_check
      _
    $region95: #{tpu_custom_call.1} parent=1 // pred_check_branch
      %3563 = sbr.rel (0) target = $region97
    $region96: #{tpu_custom_call.1} parent=1 // pred_region
      %3564 = dma.done [#allocation4], 256
    $region97: #{tpu_custom_call.1} parent=1 // pred_fallthru
      _
    // Predicated region
    $region98: #{tpu_custom_call.1} parent=1 // pred_check
      _
    $region99: #{tpu_custom_call.1} parent=1 // pred_check_branch
      %3566 = sbr.rel (0) target = $region101
    $region100: #{tpu_custom_call.1} parent=1 // pred_region
      %3567 = dma.done [#allocation18], 32
    $region101: #{tpu_custom_call.1} parent=1 // pred_fallthru
      _
    %3568 = vsyncpa [#allocation3], 1
    %3569 = vsyncpa [#allocation6], 1
    %3570 = vsyncpa [#allocation9], 1
    %3571 = vsyncpa [#allocation12], 1
    %3572 = vsyncpa [#allocation15], 1
    %3573 = vsyncpa [#allocation4], 1
    %3574 = vsyncpa [#allocation18], 1

</llo_original>
